<compile_context>
chip_gen: v7x
topology: tpu7x:2x2x1
jax: 0.10.0
libtpu: 0.0.40
codegen_flags: <defaults>
</compile_context>

<pallas_src>
import functools

import jax
import jax.numpy as jnp
from jax import lax
from jax.experimental import pallas as pl
from jax.experimental.pallas import tpu as pltpu

BN_EPS = 1e-5


def _round_up(x, m):
    return (x + m - 1) // m * m


def _default_vmem_limit_bytes():
    # v5e/v6e: 128 MiB physical VMEM, v7x: 64 MiB.  Use ~3/4 of physical, capped
    # at 96 MiB; fall back to 48 MiB which is safe on every generation.
    try:
        cap = getattr(pltpu.get_tpu_info(), "vmem_capacity_bytes", None)
        if cap:
            return int(max(min(cap * 3 // 4, 96 * 1024 * 1024), 32 * 1024 * 1024))
    except Exception:
        pass
    return 48 * 1024 * 1024


_VMEM_LIMIT_BYTES = _default_vmem_limit_bytes()


def _pick_row_tile(h_out, w_out, max_th, align=8):
    """Largest th dividing h_out with th <= max_th, preferring (th*w_out) % align == 0."""
    best_aligned, best_any = None, 1
    for cand in range(1, h_out + 1):
        if h_out % cand or cand > max_th:
            continue
        best_any = cand
        if (cand * w_out) % align == 0:
            best_aligned = cand
    return best_aligned if best_aligned is not None else best_any


# ----------------------------------------------------------------------------- kernels
def _conv_stats_kernel(x_ref, w_ref, conv_ref, sum_ref, ssq_ref, *, th, wo, ksz, fold_kw):
    """Pass 1: conv tile (shifted matmuls, kw folded into K when lane-aligned)
    plus per-channel BN partial sums accumulated over the innermost grid axis.

    x_ref:    (1, th + 2*pad, wo + 2*pad, C_in)  halo/whole-image block (padded NHWC)
    w_ref:    fold_kw: (ksz, ksz*C_in, TCO)   else: (ksz, ksz, C_in, TCO)
    conv_ref: (th*wo, TCO)      conv output tile (compute_dtype)
    sum_ref:  (1, 1, TCO) f32   per-chunk partial sum  (revisited along M axis)
    ssq_ref:  (1, 1, TCO) f32   per-chunk partial sum-of-squares
    """
    c_in = x_ref.shape[-1]
    tm = th * wo
    acc = jnp.zeros(conv_ref.shape, jnp.float32)
    for kh in range(ksz):
        if fold_kw:
            taps = [x_ref[0, kh:kh + th, kw:kw + wo, :].reshape(tm, c_in)
                    for kw in range(ksz)]
            lhs = jnp.concatenate(taps, axis=-1) if ksz > 1 else taps[0]
            acc = acc + jnp.dot(lhs, w_ref[kh], preferred_element_type=jnp.float32)
        else:
            for kw in range(ksz):
                win = x_ref[0, kh:kh + th, kw:kw + wo, :].reshape(tm, c_in)
                acc = acc + jnp.dot(win, w_ref[kh, kw],
                                    preferred_element_type=jnp.float32)
    conv_ref[...] = acc.astype(conv_ref.dtype)

    # Per-chunk channel statistics: init on the first block of the inner
    # ("arbitrary") grid axis, then accumulate across all M blocks of this chunk.
    @pl.when(pl.program_id(2) == 0)
    def _():
        sum_ref[...] = jnp.zeros_like(sum_ref)
        ssq_ref[...] = jnp.zeros_like(ssq_ref)

    sum_ref[...] += jnp.sum(acc, axis=0).reshape(sum_ref.shape)
    ssq_ref[...] += jnp.sum(acc * acc, axis=0).reshape(ssq_ref.shape)


def _bn_relu_kernel(conv_ref, sum_ref, ssq_ref, gamma_ref, beta_ref, out_ref, *, m_total):
    """Pass 2: finish BatchNorm (training-mode batch stats) + ReLU.

    Per-channel scale/shift are computed once per tile on (1, TCO) vectors
    (rsqrt -> EUP), so the per-element work is one FMA + max.
    """
    inv_m = 1.0 / float(m_total)
    mean = sum_ref[...] * inv_m
    var = jnp.maximum(ssq_ref[...] * inv_m - mean * mean, 0.0)   # clamp E[x^2]-E[x]^2
    inv_std = lax.rsqrt(var + BN_EPS)
    scale = gamma_ref[...] * inv_std
    shift = beta_ref[...] - mean * scale
    y = conv_ref[...].astype(jnp.float32) * scale + shift
    out_ref[...] = jnp.maximum(y, 0.0).astype(out_ref.dtype)


# ----------------------------------------------------------------------------- wrapper
@functools.partial(jax.jit,
                   static_argnames=("one_filter", "compute_dtype", "return_nhwc"))
def vgg_conv_forward(x, conv_w, conv_b, bn_gamma, bn_beta, *, one_filter=False,
                     compute_dtype=jnp.bfloat16, return_nhwc=False):
    """Forward pass of VGG_conv.

    x:        [N, C_in, H, W]    (NCHW, like PyTorch)
    conv_w:   [C_out, C_in, K, K]
    conv_b:   [C_out]            (unused: exactly cancelled by training-mode BN)
    bn_gamma: [C_out]
    bn_beta:  [C_out]
    returns:  [N, C_out, H, W]   (or NHWC when return_nhwc=True at a network boundary)
    """
    del conv_b  # bias shifts the per-channel mean, which training-mode BN subtracts

    ksz = 1 if one_filter else 3
    pad = 0 if one_filter else 1

    n, c_in, h, w = x.shape
    c_out = conv_w.shape[0]
    ho, wo = h, w                           # stride 1, "same" (3x3) / no pad (1x1)
    m_total = n * ho * wo

    in_item = jnp.dtype(compute_dtype).itemsize
    out_item = jnp.dtype(x.dtype).itemsize
    vmem_limit = _VMEM_LIMIT_BYTES

    # Lane-dense output channels: single C_out block whenever it fits (<= 512).
    co_pad = _round_up(c_out, 128)
    tco = co_pad if co_pad <= 512 else (256 if co_pad % 256 == 0 else 128)
    n_co = co_pad // tco

    # ---- row-tile selection under a crude VMEM budget -------------------------
    wp = wo + 2 * pad
    align = 8 * (4 // in_item)              # 8 rows for f32 tiles, 16 for bf16
    row_bytes = (wp * c_in * in_item * 2              # input rows (2 pipeline bufs)
                 + wo * co_pad * (in_item * 2 + 4)    # conv tile (2 bufs) + f32 acc
                 + wo * ksz * c_in * in_item)         # folded-kw LHS temporary
    max_th = max(1, min(ho, (vmem_limit // 2) // max(row_bytes, 1)))
    th = _pick_row_tile(ho, wo, max_th, align=align)
    n_hb = ho // th
    thp = th + 2 * pad
    tm = th * wo
    nb = n * n_hb

    # ---- layout prep (no 9x im2col; no halo gather when th == H) --------------
    xh = jnp.transpose(x, (0, 2, 3, 1)).astype(compute_dtype)      # NHWC
    xp = jnp.pad(xh, ((0, 0), (pad, pad), (pad, pad), (0, 0)))
    if n_hb == 1:
        x_blocks = xp                                               # (N, thp, wp, C_in)
    else:
        row_idx = jnp.arange(n_hb)[:, None] * th + jnp.arange(thp)[None, :]
        x_blocks = xp[:, row_idx].reshape(nb, thp, wp, c_in)        # halo blocks

    w4 = jnp.transpose(conv_w, (2, 3, 1, 0)).astype(compute_dtype)  # [K,K,Cin,Cout]
    w4 = jnp.pad(w4, ((0, 0), (0, 0), (0, 0), (0, co_pad - c_out)))
    gamma = jnp.pad(bn_gamma.astype(jnp.float32), (0, co_pad - c_out)).reshape(1, co_pad)
    beta = jnp.pad(bn_beta.astype(jnp.float32), (0, co_pad - c_out)).reshape(1, co_pad)

    # Fold kw into the contraction (K = ksz*C_in) only when the concat is
    # lane-tile aligned; small-C_in layers keep the per-tap path.
    fold_kw = (ksz > 1) and (c_in % 128 == 0)
    if fold_kw:
        w_arr = w4.reshape(ksz, ksz * c_in, co_pad)
        w_spec = pl.BlockSpec((ksz, ksz * c_in, tco), lambda c, j, i: (0, 0, j))
    else:
        w_arr = w4
        w_spec = pl.BlockSpec((ksz, ksz, c_in, tco), lambda c, j, i: (0, 0, 0, j))

    # Megacore: leading "parallel" chunk axis over M with per-chunk partial stats.
    n_chunk = 2 if (nb % 2 == 0 and nb >= 2) else 1
    nbpc = nb // n_chunk

    # ---- pass 1: conv tiles + per-chunk per-channel sum / sum-of-squares ------
    flops1 = 2 * m_total * ksz * ksz * c_in * co_pad
    bytes1 = (x_blocks.size * in_item + w_arr.size * in_item
              + m_total * co_pad * in_item + 2 * n_chunk * co_pad * 4)

    conv_flat, ch_sum, ch_ssq = pl.pallas_call(
        functools.partial(_conv_stats_kernel, th=th, wo=wo, ksz=ksz, fold_kw=fold_kw),
        grid=(n_chunk, n_co, nbpc),          # (chunk: parallel, Cout: parallel, M: arbitrary)
        in_specs=[
            pl.BlockSpec((1, thp, wp, c_in), lambda c, j, i: (c * nbpc + i, 0, 0, 0)),
            w_spec,                                                  # VMEM-resident
        ],
        out_specs=(
            pl.BlockSpec((tm, tco), lambda c, j, i: (c * nbpc + i, j)),
            pl.BlockSpec((1, 1, tco), lambda c, j, i: (c, 0, j)),    # revisited along M
            pl.BlockSpec((1, 1, tco), lambda c, j, i: (c, 0, j)),
        ),
        out_shape=(
            jax.ShapeDtypeStruct((m_total, co_pad), compute_dtype),
            jax.ShapeDtypeStruct((n_chunk, 1, co_pad), jnp.float32),
            jax.ShapeDtypeStruct((n_chunk, 1, co_pad), jnp.float32),
        ),
        compiler_params=pltpu.CompilerParams(
            dimension_semantics=("parallel", "parallel", "arbitrary"),
            vmem_limit_bytes=vmem_limit),
        cost_estimate=pl.CostEstimate(flops=flops1, transcendentals=0,
                                      bytes_accessed=bytes1),
    )(x_blocks, w_arr)

    # Reduce the (tiny) per-chunk partial stats to global stats.
    ch_sum = jnp.sum(ch_sum, axis=0)        # (1, co_pad)
    ch_ssq = jnp.sum(ch_ssq, axis=0)        # (1, co_pad)

    # ---- pass 2: normalize + ReLU over lane-dense tiles ------------------------
    tm2 = tm
    for cand in (4096, 2048, 1024, 512, 256, 128):
        if (m_total % cand == 0 and cand >= tm
                and cand * tco * (in_item + out_item) * 2 <= vmem_limit // 2):
            tm2 = cand
            break
    n_m2 = m_total // tm2

    flops2 = 2 * m_total * co_pad
    bytes2 = m_total * co_pad * (in_item + out_item) + 4 * co_pad * 4

    out_flat = pl.pallas_call(
        functools.partial(_bn_relu_kernel, m_total=m_total),
        grid=(n_co, n_m2),
        in_specs=[
            pl.BlockSpec((tm2, tco), lambda j, i: (i, j)),
            pl.BlockSpec((1, tco), lambda j, i: (0, j)),
            pl.BlockSpec((1, tco), lambda j, i: (0, j)),
            pl.BlockSpec((1, tco), lambda j, i: (0, j)),
            pl.BlockSpec((1, tco), lambda j, i: (0, j)),
        ],
        out_specs=pl.BlockSpec((tm2, tco), lambda j, i: (i, j)),
        out_shape=jax.ShapeDtypeStruct((m_total, co_pad), x.dtype),
        compiler_params=pltpu.CompilerParams(
            dimension_semantics=("parallel", "parallel"),
            vmem_limit_bytes=vmem_limit),
        cost_estimate=pl.CostEstimate(flops=flops2, transcendentals=n_co * n_m2 * tco,
                                      bytes_accessed=bytes2),
    )(conv_flat, ch_sum, ch_ssq, gamma, beta)

    # Crop channel padding; keep NHWC at a network boundary if requested.
    out = out_flat[:, :c_out] if co_pad != c_out else out_flat
    out = out.reshape(n, ho, wo, c_out)
    if return_nhwc:
        return out
    return jnp.transpose(out, (0, 3, 1, 2))   # NCHW, to match the PyTorch module


# ----------------------------------------------------------------------------- reference
def _reference_forward(x, conv_w, conv_b, bn_gamma, bn_beta, *, one_filter=False):
    pad = 0 if one_filter else 1
    conv = lax.conv_general_dilated(
        x, conv_w, window_strides=(1, 1),
        padding=[(pad, pad), (pad, pad)],
        dimension_numbers=("NCHW", "OIHW", "NCHW"))
    conv = conv + conv_b[None, :, None, None]
    mean = jnp.mean(conv, axis=(0, 2, 3), keepdims=True)
    var = jnp.mean((conv - mean) ** 2, axis=(0, 2, 3), keepdims=True)
    y = (conv - mean) * lax.rsqrt(var + BN_EPS)
    y = y * bn_gamma[None, :, None, None] + bn_beta[None, :, None, None]
    return jnp.maximum(y, 0.0)


if __name__ == "__main__":
    key = jax.random.PRNGKey(0)
    k_x, k_w, k_b, k_g, k_beta, k_w1 = jax.random.split(key, 6)

    n, c_in, h, w = 2, 4, 16, 16
    c_out = 8

    x = jax.random.normal(k_x, (n, c_in, h, w), dtype=jnp.float32)
    conv_w = jax.random.normal(k_w, (c_out, c_in, 3, 3), dtype=jnp.float32) * 0.1
    conv_b = jax.random.normal(k_b, (c_out,), dtype=jnp.float32) * 0.1
    bn_gamma = 1.0 + 0.1 * jax.random.normal(k_g, (c_out,), dtype=jnp.float32)
    bn_beta = 0.1 * jax.random.normal(k_beta, (c_out,), dtype=jnp.float32)

    ref = _reference_forward(x, conv_w, conv_b, bn_gamma, bn_beta, one_filter=False)

    # 3x3 path, float32 compute (strict check)
    out = vgg_conv_forward(x, conv_w, conv_b, bn_gamma, bn_beta,
                           one_filter=False, compute_dtype=jnp.float32)
    out = jax.block_until_ready(out)
    assert out.shape == (n, c_out, h, w), out.shape
    assert float(jnp.max(jnp.abs(out - ref))) < 1e-4, float(jnp.max(jnp.abs(out - ref)))

    # 1x1 path (one_filter=True), float32 compute (strict check)
    conv_w1 = jax.random.normal(k_w1, (c_out, c_in, 1, 1), dtype=jnp.float32) * 0.1
    out1 = vgg_conv_forward(x, conv_w1, conv_b, bn_gamma, bn_beta,
                            one_filter=True, compute_dtype=jnp.float32)
    out1 = jax.block_until_ready(out1)
    ref1 = _reference_forward(x, conv_w1, conv_b, bn_gamma, bn_beta, one_filter=True)
    assert out1.shape == (n, c_out, h, w), out1.shape
    assert float(jnp.max(jnp.abs(out1 - ref1))) < 1e-4, float(jnp.max(jnp.abs(out1 - ref1)))

    # 3x3 path, default bf16 MXU operands + bf16 conv intermediate (loose check)
    out_bf16 = vgg_conv_forward(x, conv_w, conv_b, bn_gamma, bn_beta, one_filter=False)
    out_bf16 = jax.block_until_ready(out_bf16)
    assert out_bf16.shape == (n, c_out, h, w), out_bf16.shape
    assert out_bf16.dtype == x.dtype, out_bf16.dtype
    assert float(jnp.max(jnp.abs(out_bf16 - ref))) < 1e-1, \
        float(jnp.max(jnp.abs(out_bf16 - ref)))

    print("KERNEL_OK")
</pallas_src>

<mosaic_0001>
module attributes {stable_mosaic.version = 11 : i64} {
  func.func @_conv_stats_kernel(%arg0: i32, %arg1: i32, %arg2: i32, %arg3: memref<1x18x18x4xf32, #tpu.memory_space<vmem>>, %arg4: memref<3x3x4x128xf32, #tpu.memory_space<vmem>>, %arg5: memref<256x128xf32, #tpu.memory_space<vmem>>, %arg6: memref<1x1x128xf32, #tpu.memory_space<vmem>>, %arg7: memref<1x1x128xf32, #tpu.memory_space<vmem>>) attributes {dimension_semantics = [#tpu.dimension_semantics<parallel>, #tpu.dimension_semantics<parallel>, #tpu.dimension_semantics<arbitrary>], iteration_bounds = array<i64: 2, 1, 1>, scalar_prefetch = 0 : i64, scratch_operands = 0 : i64, tpu.core_type = #tpu.core_type<tc>, window_params = [{transform_indices = @transform_0, window_bounds = array<i64: 1, 18, 18, 4>}, {transform_indices = @transform_1, window_bounds = array<i64: 3, 3, 4, 128>}, {transform_indices = @transform_2, window_bounds = array<i64: 256, 128>}, {transform_indices = @transform_3, window_bounds = array<i64: 1, 1, 128>}, {transform_indices = @transform_4, window_bounds = array<i64: 1, 1, 128>}]} {
    %cst = arith.constant 0.000000e+00 : f32
    %0 = vector.broadcast %cst : f32 to vector<256x128xf32>
    %c0 = arith.constant 0 : index
    %c0_0 = arith.constant 0 : index
    %c0_1 = arith.constant 0 : index
    %c0_2 = arith.constant 0 : index
    %1 = vector.load %arg3[%c0, %c0_0, %c0_1, %c0_2] : memref<1x18x18x4xf32, #tpu.memory_space<vmem>>, vector<1x16x16x4xf32>
    %2 = vector.shape_cast %1 : vector<1x16x16x4xf32> to vector<16x16x4xf32>
    %3 = vector.shape_cast %2 : vector<16x16x4xf32> to vector<256x4xf32>
    %c0_3 = arith.constant 0 : index
    %c0_4 = arith.constant 0 : index
    %c0_5 = arith.constant 0 : index
    %c0_6 = arith.constant 0 : index
    %4 = vector.load %arg4[%c0_3, %c0_4, %c0_5, %c0_6] : memref<3x3x4x128xf32, #tpu.memory_space<vmem>>, vector<1x1x4x128xf32>
    %5 = vector.shape_cast %4 : vector<1x1x4x128xf32> to vector<4x128xf32>
    %cst_7 = arith.constant dense<0.000000e+00> : vector<256x128xf32>
    %6 = tpu.matmul %3, %5, %cst_7 {dimension_numbers = #tpu.dot_dimension_numbers<[1], [0], [0], [1], [0, 0, 1, 1], [], []>} : vector<256x4xf32>, vector<4x128xf32>, vector<256x128xf32> -> vector<256x128xf32>
    %7 = arith.addf %0, %6 : vector<256x128xf32>
    %c0_8 = arith.constant 0 : index
    %c0_9 = arith.constant 0 : index
    %c1 = arith.constant 1 : index
    %c0_10 = arith.constant 0 : index
    %8 = vector.load %arg3[%c0_8, %c0_9, %c1, %c0_10] : memref<1x18x18x4xf32, #tpu.memory_space<vmem>>, vector<1x16x16x4xf32>
    %9 = vector.shape_cast %8 : vector<1x16x16x4xf32> to vector<16x16x4xf32>
    %10 = vector.shape_cast %9 : vector<16x16x4xf32> to vector<256x4xf32>
    %c0_11 = arith.constant 0 : index
    %c1_12 = arith.constant 1 : index
    %c0_13 = arith.constant 0 : index
    %c0_14 = arith.constant 0 : index
    %11 = vector.load %arg4[%c0_11, %c1_12, %c0_13, %c0_14] : memref<3x3x4x128xf32, #tpu.memory_space<vmem>>, vector<1x1x4x128xf32>
    %12 = vector.shape_cast %11 : vector<1x1x4x128xf32> to vector<4x128xf32>
    %cst_15 = arith.constant dense<0.000000e+00> : vector<256x128xf32>
    %13 = tpu.matmul %10, %12, %cst_15 {dimension_numbers = #tpu.dot_dimension_numbers<[1], [0], [0], [1], [0, 0, 1, 1], [], []>} : vector<256x4xf32>, vector<4x128xf32>, vector<256x128xf32> -> vector<256x128xf32>
    %14 = arith.addf %7, %13 : vector<256x128xf32>
    %c0_16 = arith.constant 0 : index
    %c0_17 = arith.constant 0 : index
    %c2 = arith.constant 2 : index
    %c0_18 = arith.constant 0 : index
    %15 = vector.load %arg3[%c0_16, %c0_17, %c2, %c0_18] : memref<1x18x18x4xf32, #tpu.memory_space<vmem>>, vector<1x16x16x4xf32>
    %16 = vector.shape_cast %15 : vector<1x16x16x4xf32> to vector<16x16x4xf32>
    %17 = vector.shape_cast %16 : vector<16x16x4xf32> to vector<256x4xf32>
    %c0_19 = arith.constant 0 : index
    %c2_20 = arith.constant 2 : index
    %c0_21 = arith.constant 0 : index
    %c0_22 = arith.constant 0 : index
    %18 = vector.load %arg4[%c0_19, %c2_20, %c0_21, %c0_22] : memref<3x3x4x128xf32, #tpu.memory_space<vmem>>, vector<1x1x4x128xf32>
    %19 = vector.shape_cast %18 : vector<1x1x4x128xf32> to vector<4x128xf32>
    %cst_23 = arith.constant dense<0.000000e+00> : vector<256x128xf32>
    %20 = tpu.matmul %17, %19, %cst_23 {dimension_numbers = #tpu.dot_dimension_numbers<[1], [0], [0], [1], [0, 0, 1, 1], [], []>} : vector<256x4xf32>, vector<4x128xf32>, vector<256x128xf32> -> vector<256x128xf32>
    %21 = arith.addf %14, %20 : vector<256x128xf32>
    %c0_24 = arith.constant 0 : index
    %c1_25 = arith.constant 1 : index
    %c0_26 = arith.constant 0 : index
    %c0_27 = arith.constant 0 : index
    %22 = vector.load %arg3[%c0_24, %c1_25, %c0_26, %c0_27] : memref<1x18x18x4xf32, #tpu.memory_space<vmem>>, vector<1x16x16x4xf32>
    %23 = vector.shape_cast %22 : vector<1x16x16x4xf32> to vector<16x16x4xf32>
    %24 = vector.shape_cast %23 : vector<16x16x4xf32> to vector<256x4xf32>
    %c1_28 = arith.constant 1 : index
    %c0_29 = arith.constant 0 : index
    %c0_30 = arith.constant 0 : index
    %c0_31 = arith.constant 0 : index
    %25 = vector.load %arg4[%c1_28, %c0_29, %c0_30, %c0_31] : memref<3x3x4x128xf32, #tpu.memory_space<vmem>>, vector<1x1x4x128xf32>
    %26 = vector.shape_cast %25 : vector<1x1x4x128xf32> to vector<4x128xf32>
    %cst_32 = arith.constant dense<0.000000e+00> : vector<256x128xf32>
    %27 = tpu.matmul %24, %26, %cst_32 {dimension_numbers = #tpu.dot_dimension_numbers<[1], [0], [0], [1], [0, 0, 1, 1], [], []>} : vector<256x4xf32>, vector<4x128xf32>, vector<256x128xf32> -> vector<256x128xf32>
    %28 = arith.addf %21, %27 : vector<256x128xf32>
    %c0_33 = arith.constant 0 : index
    %c1_34 = arith.constant 1 : index
    %c1_35 = arith.constant 1 : index
    %c0_36 = arith.constant 0 : index
    %29 = vector.load %arg3[%c0_33, %c1_34, %c1_35, %c0_36] : memref<1x18x18x4xf32, #tpu.memory_space<vmem>>, vector<1x16x16x4xf32>
    %30 = vector.shape_cast %29 : vector<1x16x16x4xf32> to vector<16x16x4xf32>
    %31 = vector.shape_cast %30 : vector<16x16x4xf32> to vector<256x4xf32>
    %c1_37 = arith.constant 1 : index
    %c1_38 = arith.constant 1 : index
    %c0_39 = arith.constant 0 : index
    %c0_40 = arith.constant 0 : index
    %32 = vector.load %arg4[%c1_37, %c1_38, %c0_39, %c0_40] : memref<3x3x4x128xf32, #tpu.memory_space<vmem>>, vector<1x1x4x128xf32>
    %33 = vector.shape_cast %32 : vector<1x1x4x128xf32> to vector<4x128xf32>
    %cst_41 = arith.constant dense<0.000000e+00> : vector<256x128xf32>
    %34 = tpu.matmul %31, %33, %cst_41 {dimension_numbers = #tpu.dot_dimension_numbers<[1], [0], [0], [1], [0, 0, 1, 1], [], []>} : vector<256x4xf32>, vector<4x128xf32>, vector<256x128xf32> -> vector<256x128xf32>
    %35 = arith.addf %28, %34 : vector<256x128xf32>
    %c0_42 = arith.constant 0 : index
    %c1_43 = arith.constant 1 : index
    %c2_44 = arith.constant 2 : index
    %c0_45 = arith.constant 0 : index
    %36 = vector.load %arg3[%c0_42, %c1_43, %c2_44, %c0_45] : memref<1x18x18x4xf32, #tpu.memory_space<vmem>>, vector<1x16x16x4xf32>
    %37 = vector.shape_cast %36 : vector<1x16x16x4xf32> to vector<16x16x4xf32>
    %38 = vector.shape_cast %37 : vector<16x16x4xf32> to vector<256x4xf32>
    %c1_46 = arith.constant 1 : index
    %c2_47 = arith.constant 2 : index
    %c0_48 = arith.constant 0 : index
    %c0_49 = arith.constant 0 : index
    %39 = vector.load %arg4[%c1_46, %c2_47, %c0_48, %c0_49] : memref<3x3x4x128xf32, #tpu.memory_space<vmem>>, vector<1x1x4x128xf32>
    %40 = vector.shape_cast %39 : vector<1x1x4x128xf32> to vector<4x128xf32>
    %cst_50 = arith.constant dense<0.000000e+00> : vector<256x128xf32>
    %41 = tpu.matmul %38, %40, %cst_50 {dimension_numbers = #tpu.dot_dimension_numbers<[1], [0], [0], [1], [0, 0, 1, 1], [], []>} : vector<256x4xf32>, vector<4x128xf32>, vector<256x128xf32> -> vector<256x128xf32>
    %42 = arith.addf %35, %41 : vector<256x128xf32>
    %c0_51 = arith.constant 0 : index
    %c2_52 = arith.constant 2 : index
    %c0_53 = arith.constant 0 : index
    %c0_54 = arith.constant 0 : index
    %43 = vector.load %arg3[%c0_51, %c2_52, %c0_53, %c0_54] : memref<1x18x18x4xf32, #tpu.memory_space<vmem>>, vector<1x16x16x4xf32>
    %44 = vector.shape_cast %43 : vector<1x16x16x4xf32> to vector<16x16x4xf32>
    %45 = vector.shape_cast %44 : vector<16x16x4xf32> to vector<256x4xf32>
    %c2_55 = arith.constant 2 : index
    %c0_56 = arith.constant 0 : index
    %c0_57 = arith.constant 0 : index
    %c0_58 = arith.constant 0 : index
    %46 = vector.load %arg4[%c2_55, %c0_56, %c0_57, %c0_58] : memref<3x3x4x128xf32, #tpu.memory_space<vmem>>, vector<1x1x4x128xf32>
    %47 = vector.shape_cast %46 : vector<1x1x4x128xf32> to vector<4x128xf32>
    %cst_59 = arith.constant dense<0.000000e+00> : vector<256x128xf32>
    %48 = tpu.matmul %45, %47, %cst_59 {dimension_numbers = #tpu.dot_dimension_numbers<[1], [0], [0], [1], [0, 0, 1, 1], [], []>} : vector<256x4xf32>, vector<4x128xf32>, vector<256x128xf32> -> vector<256x128xf32>
    %49 = arith.addf %42, %48 : vector<256x128xf32>
    %c0_60 = arith.constant 0 : index
    %c2_61 = arith.constant 2 : index
    %c1_62 = arith.constant 1 : index
    %c0_63 = arith.constant 0 : index
    %50 = vector.load %arg3[%c0_60, %c2_61, %c1_62, %c0_63] : memref<1x18x18x4xf32, #tpu.memory_space<vmem>>, vector<1x16x16x4xf32>
    %51 = vector.shape_cast %50 : vector<1x16x16x4xf32> to vector<16x16x4xf32>
    %52 = vector.shape_cast %51 : vector<16x16x4xf32> to vector<256x4xf32>
    %c2_64 = arith.constant 2 : index
    %c1_65 = arith.constant 1 : index
    %c0_66 = arith.constant 0 : index
    %c0_67 = arith.constant 0 : index
    %53 = vector.load %arg4[%c2_64, %c1_65, %c0_66, %c0_67] : memref<3x3x4x128xf32, #tpu.memory_space<vmem>>, vector<1x1x4x128xf32>
    %54 = vector.shape_cast %53 : vector<1x1x4x128xf32> to vector<4x128xf32>
    %cst_68 = arith.constant dense<0.000000e+00> : vector<256x128xf32>
    %55 = tpu.matmul %52, %54, %cst_68 {dimension_numbers = #tpu.dot_dimension_numbers<[1], [0], [0], [1], [0, 0, 1, 1], [], []>} : vector<256x4xf32>, vector<4x128xf32>, vector<256x128xf32> -> vector<256x128xf32>
    %56 = arith.addf %49, %55 : vector<256x128xf32>
    %c0_69 = arith.constant 0 : index
    %c2_70 = arith.constant 2 : index
    %c2_71 = arith.constant 2 : index
    %c0_72 = arith.constant 0 : index
    %57 = vector.load %arg3[%c0_69, %c2_70, %c2_71, %c0_72] : memref<1x18x18x4xf32, #tpu.memory_space<vmem>>, vector<1x16x16x4xf32>
    %58 = vector.shape_cast %57 : vector<1x16x16x4xf32> to vector<16x16x4xf32>
    %59 = vector.shape_cast %58 : vector<16x16x4xf32> to vector<256x4xf32>
    %c2_73 = arith.constant 2 : index
    %c2_74 = arith.constant 2 : index
    %c0_75 = arith.constant 0 : index
    %c0_76 = arith.constant 0 : index
    %60 = vector.load %arg4[%c2_73, %c2_74, %c0_75, %c0_76] : memref<3x3x4x128xf32, #tpu.memory_space<vmem>>, vector<1x1x4x128xf32>
    %61 = vector.shape_cast %60 : vector<1x1x4x128xf32> to vector<4x128xf32>
    %cst_77 = arith.constant dense<0.000000e+00> : vector<256x128xf32>
    %62 = tpu.matmul %59, %61, %cst_77 {dimension_numbers = #tpu.dot_dimension_numbers<[1], [0], [0], [1], [0, 0, 1, 1], [], []>} : vector<256x4xf32>, vector<4x128xf32>, vector<256x128xf32> -> vector<256x128xf32>
    %63 = arith.addf %56, %62 : vector<256x128xf32>
    %c0_78 = arith.constant 0 : index
    %c0_79 = arith.constant 0 : index
    %64 = vector.load %arg5[%c0_78, %c0_79] : memref<256x128xf32, #tpu.memory_space<vmem>>, vector<256x128xf32>
    tpu.vector_store %arg5[%c0_78, %c0_79], %63 {strides = array<i32>} : memref<256x128xf32, #tpu.memory_space<vmem>>, vector<256x128xf32>,
    %c0_i32 = arith.constant 0 : i32
    %65 = arith.cmpi eq, %arg2, %c0_i32 : i32
    %66 = arith.extui %65 : i1 to i32
    %c0_i32_80 = arith.constant 0 : i32
    %67 = arith.cmpi ne, %66, %c0_i32_80 : i32
    scf.if %67 {
      %cst_95 = arith.constant 0.000000e+00 : f32
      %79 = vector.broadcast %cst_95 : f32 to vector<1x1x128xf32>
      %c0_96 = arith.constant 0 : index
      %c0_97 = arith.constant 0 : index
      %c0_98 = arith.constant 0 : index
      %80 = vector.load %arg6[%c0_96, %c0_97, %c0_98] : memref<1x1x128xf32, #tpu.memory_space<vmem>>, vector<1x1x128xf32>
      tpu.vector_store %arg6[%c0_96, %c0_97, %c0_98], %79 {strides = array<i32>} : memref<1x1x128xf32, #tpu.memory_space<vmem>>, vector<1x1x128xf32>,
      %cst_99 = arith.constant 0.000000e+00 : f32
      %81 = vector.broadcast %cst_99 : f32 to vector<1x1x128xf32>
      %c0_100 = arith.constant 0 : index
      %c0_101 = arith.constant 0 : index
      %c0_102 = arith.constant 0 : index
      %82 = vector.load %arg7[%c0_100, %c0_101, %c0_102] : memref<1x1x128xf32, #tpu.memory_space<vmem>>, vector<1x1x128xf32>
      tpu.vector_store %arg7[%c0_100, %c0_101, %c0_102], %81 {strides = array<i32>} : memref<1x1x128xf32, #tpu.memory_space<vmem>>, vector<1x1x128xf32>,
    } else {
    }
    %c0_81 = arith.constant 0 : index
    %c0_82 = arith.constant 0 : index
    %c0_83 = arith.constant 0 : index
    %68 = vector.load %arg6[%c0_81, %c0_82, %c0_83] : memref<1x1x128xf32, #tpu.memory_space<vmem>>, vector<1x1x128xf32>
    %cst_84 = arith.constant dense<0.000000e+00> : vector<128xf32>
    %69 = vector.multi_reduction <add>, %63, %cst_84 [0] : vector<256x128xf32> to vector<128xf32>
    %70 = vector.shape_cast %69 : vector<128xf32> to vector<1x1x128xf32>
    %71 = arith.addf %68, %70 : vector<1x1x128xf32>
    %c0_85 = arith.constant 0 : index
    %c0_86 = arith.constant 0 : index
    %c0_87 = arith.constant 0 : index
    %72 = vector.load %arg6[%c0_85, %c0_86, %c0_87] : memref<1x1x128xf32, #tpu.memory_space<vmem>>, vector<1x1x128xf32>
    tpu.vector_store %arg6[%c0_85, %c0_86, %c0_87], %71 {strides = array<i32>} : memref<1x1x128xf32, #tpu.memory_space<vmem>>, vector<1x1x128xf32>,
    %c0_88 = arith.constant 0 : index
    %c0_89 = arith.constant 0 : index
    %c0_90 = arith.constant 0 : index
    %73 = vector.load %arg7[%c0_88, %c0_89, %c0_90] : memref<1x1x128xf32, #tpu.memory_space<vmem>>, vector<1x1x128xf32>
    %74 = arith.mulf %63, %63 : vector<256x128xf32>
    %cst_91 = arith.constant dense<0.000000e+00> : vector<128xf32>
    %75 = vector.multi_reduction <add>, %74, %cst_91 [0] : vector<256x128xf32> to vector<128xf32>
    %76 = vector.shape_cast %75 : vector<128xf32> to vector<1x1x128xf32>
    %77 = arith.addf %73, %76 : vector<1x1x128xf32>
    %c0_92 = arith.constant 0 : index
    %c0_93 = arith.constant 0 : index
    %c0_94 = arith.constant 0 : index
    %78 = vector.load %arg7[%c0_92, %c0_93, %c0_94] : memref<1x1x128xf32, #tpu.memory_space<vmem>>, vector<1x1x128xf32>
    tpu.vector_store %arg7[%c0_92, %c0_93, %c0_94], %77 {strides = array<i32>} : memref<1x1x128xf32, #tpu.memory_space<vmem>>, vector<1x1x128xf32>,
    return
  }
  func.func @transform_0(%arg0: i32, %arg1: i32, %arg2: i32) -> (i32, i32, i32, i32) {
    %c1_i32 = arith.constant 1 : i32
    %0 = arith.muli %arg0, %c1_i32 : i32
    %1 = arith.addi %0, %arg2 : i32
    %c0_i32 = arith.constant 0 : i32
    %c0_i32_0 = arith.constant 0 : i32
    %c0_i32_1 = arith.constant 0 : i32
    %c0_i32_2 = arith.constant 0 : i32
    return %1, %c0_i32, %c0_i32_0, %c0_i32_1 : i32, i32, i32, i32
  }
  func.func @transform_1(%arg0: i32, %arg1: i32, %arg2: i32) -> (i32, i32, i32, i32) {
    %c0_i32 = arith.constant 0 : i32
    %c0_i32_0 = arith.constant 0 : i32
    %c0_i32_1 = arith.constant 0 : i32
    %c0_i32_2 = arith.constant 0 : i32
    return %c0_i32, %c0_i32_0, %c0_i32_1, %arg1 : i32, i32, i32, i32
  }
  func.func @transform_2(%arg0: i32, %arg1: i32, %arg2: i32) -> (i32, i32) {
    %c1_i32 = arith.constant 1 : i32
    %0 = arith.muli %arg0, %c1_i32 : i32
    %1 = arith.addi %0, %arg2 : i32
    %c0_i32 = arith.constant 0 : i32
    return %1, %arg1 : i32, i32
  }
  func.func @transform_3(%arg0: i32, %arg1: i32, %arg2: i32) -> (i32, i32, i32) {
    %c0_i32 = arith.constant 0 : i32
    %c0_i32_0 = arith.constant 0 : i32
    return %arg0, %c0_i32, %arg1 : i32, i32, i32
  }
  func.func @transform_4(%arg0: i32, %arg1: i32, %arg2: i32) -> (i32, i32, i32) {
    %c0_i32 = arith.constant 0 : i32
    %c0_i32_0 = arith.constant 0 : i32
    return %arg0, %c0_i32, %arg1 : i32, i32, i32
  }
}

module attributes {stable_mosaic.version = 11 : i64} {
  func.func @_bn_relu_kernel(%arg0: i32, %arg1: i32, %arg2: memref<512x128xf32, #tpu.memory_space<vmem>>, %arg3: memref<1x128xf32, #tpu.memory_space<vmem>>, %arg4: memref<1x128xf32, #tpu.memory_space<vmem>>, %arg5: memref<1x128xf32, #tpu.memory_space<vmem>>, %arg6: memref<1x128xf32, #tpu.memory_space<vmem>>, %arg7: memref<512x128xf32, #tpu.memory_space<vmem>>) attributes {dimension_semantics = [#tpu.dimension_semantics<parallel>, #tpu.dimension_semantics<parallel>], iteration_bounds = array<i64: 1, 1>, scalar_prefetch = 0 : i64, scratch_operands = 0 : i64, tpu.core_type = #tpu.core_type<tc>, window_params = [{transform_indices = @transform_0, window_bounds = array<i64: 512, 128>}, {transform_indices = @transform_1, window_bounds = array<i64: 1, 128>}, {transform_indices = @transform_2, window_bounds = array<i64: 1, 128>}, {transform_indices = @transform_3, window_bounds = array<i64: 1, 128>}, {transform_indices = @transform_4, window_bounds = array<i64: 1, 128>}, {transform_indices = @transform_5, window_bounds = array<i64: 512, 128>}]} {
    %c0 = arith.constant 0 : index
    %c0_0 = arith.constant 0 : index
    %0 = vector.load %arg3[%c0, %c0_0] : memref<1x128xf32, #tpu.memory_space<vmem>>, vector<1x128xf32>
    %cst = arith.constant 0.001953125 : f32
    %1 = vector.broadcast %cst : f32 to vector<1x128xf32>
    %2 = arith.mulf %0, %1 : vector<1x128xf32>
    %c0_1 = arith.constant 0 : index
    %c0_2 = arith.constant 0 : index
    %3 = vector.load %arg4[%c0_1, %c0_2] : memref<1x128xf32, #tpu.memory_space<vmem>>, vector<1x128xf32>
    %cst_3 = arith.constant 0.001953125 : f32
    %4 = vector.broadcast %cst_3 : f32 to vector<1x128xf32>
    %5 = arith.mulf %3, %4 : vector<1x128xf32>
    %6 = arith.mulf %2, %2 : vector<1x128xf32>
    %7 = arith.subf %5, %6 : vector<1x128xf32>
    %cst_4 = arith.constant 0.000000e+00 : f32
    %8 = vector.broadcast %cst_4 : f32 to vector<1x128xf32>
    %9 = arith.maximumf %7, %8 : vector<1x128xf32>
    %cst_5 = arith.constant 9.99999974E-6 : f32
    %10 = vector.broadcast %cst_5 : f32 to vector<1x128xf32>
    %11 = arith.addf %9, %10 : vector<1x128xf32>
    %12 = math.rsqrt %11 : vector<1x128xf32>
    %c0_6 = arith.constant 0 : index
    %c0_7 = arith.constant 0 : index
    %13 = vector.load %arg5[%c0_6, %c0_7] : memref<1x128xf32, #tpu.memory_space<vmem>>, vector<1x128xf32>
    %14 = arith.mulf %13, %12 : vector<1x128xf32>
    %c0_8 = arith.constant 0 : index
    %c0_9 = arith.constant 0 : index
    %15 = vector.load %arg6[%c0_8, %c0_9] : memref<1x128xf32, #tpu.memory_space<vmem>>, vector<1x128xf32>
    %16 = arith.mulf %2, %14 : vector<1x128xf32>
    %17 = arith.subf %15, %16 : vector<1x128xf32>
    %c0_10 = arith.constant 0 : index
    %c0_11 = arith.constant 0 : index
    %18 = vector.load %arg2[%c0_10, %c0_11] : memref<512x128xf32, #tpu.memory_space<vmem>>, vector<512x128xf32>
    %19 = vector.broadcast %14 : vector<1x128xf32> to vector<512x128xf32>
    %20 = arith.mulf %18, %19 : vector<512x128xf32>
    %21 = vector.broadcast %17 : vector<1x128xf32> to vector<512x128xf32>
    %22 = arith.addf %20, %21 : vector<512x128xf32>
    %cst_12 = arith.constant 0.000000e+00 : f32
    %23 = vector.broadcast %cst_12 : f32 to vector<512x128xf32>
    %24 = arith.maximumf %22, %23 : vector<512x128xf32>
    %c0_13 = arith.constant 0 : index
    %c0_14 = arith.constant 0 : index
    %25 = vector.load %arg7[%c0_13, %c0_14] : memref<512x128xf32, #tpu.memory_space<vmem>>, vector<512x128xf32>
    tpu.vector_store %arg7[%c0_13, %c0_14], %24 {strides = array<i32>} : memref<512x128xf32, #tpu.memory_space<vmem>>, vector<512x128xf32>,
    return
  }
  func.func @transform_0(%arg0: i32, %arg1: i32) -> (i32, i32) {
    %c0_i32 = arith.constant 0 : i32
    return %arg1, %arg0 : i32, i32
  }
  func.func @transform_1(%arg0: i32, %arg1: i32) -> (i32, i32) {
    %c0_i32 = arith.constant 0 : i32
    %c0_i32_0 = arith.constant 0 : i32
    return %c0_i32, %arg0 : i32, i32
  }
  func.func @transform_2(%arg0: i32, %arg1: i32) -> (i32, i32) {
    %c0_i32 = arith.constant 0 : i32
    %c0_i32_0 = arith.constant 0 : i32
    return %c0_i32, %arg0 : i32, i32
  }
  func.func @transform_3(%arg0: i32, %arg1: i32) -> (i32, i32) {
    %c0_i32 = arith.constant 0 : i32
    %c0_i32_0 = arith.constant 0 : i32
    return %c0_i32, %arg0 : i32, i32
  }
  func.func @transform_4(%arg0: i32, %arg1: i32) -> (i32, i32) {
    %c0_i32 = arith.constant 0 : i32
    %c0_i32_0 = arith.constant 0 : i32
    return %c0_i32, %arg0 : i32, i32
  }
  func.func @transform_5(%arg0: i32, %arg1: i32) -> (i32, i32) {
    %c0_i32 = arith.constant 0 : i32
    return %arg1, %arg0 : i32, i32
  }
}

</mosaic_0001>

<llo_original>
// kernel: vgg_conv_forward.3
$region0: #{vgg_conv_forward.3}
  #allocation0 [shape = 'u32[]', space=smem, size = 0x4, offset = 0x4, fixed_abs, tag = 'smem constant byte address 0x4 - core index']
  #allocation1 [shape = 'u32[144,128]{1,0:T(1,128)}', space=vmem, size = 0x12000, scoped, tag = 'internal scratch']
  %s0 = inlined_call_operand.vmem [shape: f32[512,128], index: 0, kind: input, shape index: {}]
  %s1 = inlined_call_operand.vmem [shape: f32[1,128], index: 1, kind: input, shape index: {}]
  %s2 = inlined_call_operand.vmem [shape: f32[1,128], index: 2, kind: input, shape index: {}]
  %s3 = inlined_call_operand.vmem [shape: f32[1,128], index: 3, kind: input, shape index: {}]
  %s4 = inlined_call_operand.vmem [shape: f32[1,128], index: 4, kind: input, shape index: {}]
  %s5 = inlined_call_operand.vmem [shape: f32[512,128], index: 5, kind: output, shape index: {}]
  %s6 = sld [smem:[#allocation0]]
  $region30: #{vgg_conv_forward.3} parent=0
    _
  %s8 = ssub.s32 1, %s6
  %s9 = scalar_select 0, %s8, %s6
  // Predicated region
  $region2: #{vgg_conv_forward.3} parent=0 // pred_check
    _
  $region3: #{vgg_conv_forward.3} parent=0 // pred_check_branch
    %11 = sbr.rel (0) target = $region5
  $region4: #{vgg_conv_forward.3} parent=0 // pred_region
    _
  $region5: #{vgg_conv_forward.3} parent=0 // pred_fallthru
    _
  // Predicated region
  $region6: #{vgg_conv_forward.3} parent=0 // pred_check
    _
  $region7: #{vgg_conv_forward.3} parent=0 // pred_check_branch
    %13 = sbr.rel (0) target = $region9
  $region8: #{vgg_conv_forward.3} parent=0 // pred_region
    _
  $region9: #{vgg_conv_forward.3} parent=0 // pred_fallthru
    _
  // Predicated region
  $region10: #{vgg_conv_forward.3} parent=0 // pred_check
    _
  $region11: #{vgg_conv_forward.3} parent=0 // pred_check_branch
    %15 = sbr.rel (0) target = $region13
  $region12: #{vgg_conv_forward.3} parent=0 // pred_region
    _
  $region13: #{vgg_conv_forward.3} parent=0 // pred_fallthru
    _
  // Predicated region
  $region14: #{vgg_conv_forward.3} parent=0 // pred_check
    _
  $region15: #{vgg_conv_forward.3} parent=0 // pred_check_branch
    %17 = sbr.rel (0) target = $region17
  $region16: #{vgg_conv_forward.3} parent=0 // pred_region
    _
  $region17: #{vgg_conv_forward.3} parent=0 // pred_fallthru
    _
  // Predicated region
  $region18: #{vgg_conv_forward.3} parent=0 // pred_check
    _
  $region19: #{vgg_conv_forward.3} parent=0 // pred_check_branch
    %19 = sbr.rel (0) target = $region21
  $region20: #{vgg_conv_forward.3} parent=0 // pred_region
    _
  $region21: #{vgg_conv_forward.3} parent=0 // pred_fallthru
    _
  %v20 = vld [vmem:[%s1] sm:$0x1]
  %v21 = vmul.f32 %v20, 0.001953125
  %v22 = vld [vmem:[%s2] sm:$0x1]
  %v23 = vmul.f32 %v22, 0.001953125
  %v24 = vmul.f32 %v21, %v21
  %v25 = vsub.f32 %v23, %v24
  %v26 = vmax.f32 %v25, 0.0
  %v27 = vadd.f32 %v26, 1e-05
  %v28 = vrsqrt.pop %v27
  %v29 = vld [vmem:[%s3] sm:$0x1]
  %v30 = vmul.f32 %v29, %v28
  %v31 = vld [vmem:[%s4] sm:$0x1]
  %v32 = vmul.f32 %v21, %v30
  %v33 = vsub.f32 %v31, %v32
  %v34 = vld [vmem:[%s0] sm:$0xff]
  %v35 = vld [vmem:[%s0 + $0x8] sm:$0xff]
  %v36 = vld [vmem:[%s0 + $0x10] sm:$0xff]
  %v37 = vld [vmem:[%s0 + $0x18] sm:$0xff]
  %v38 = vld [vmem:[%s0 + $0x20] sm:$0xff]
  %v39 = vld [vmem:[%s0 + $0x28] sm:$0xff]
  %v40 = vld [vmem:[%s0 + $0x30] sm:$0xff]
  %v41 = vld [vmem:[%s0 + $0x38] sm:$0xff]
  %v42 = vld [vmem:[%s0 + $0x40] sm:$0xff]
  %v43 = vld [vmem:[%s0 + $0x48] sm:$0xff]
  %v44 = vld [vmem:[%s0 + $0x50] sm:$0xff]
  %v45 = vld [vmem:[%s0 + $0x58] sm:$0xff]
  %v46 = vld [vmem:[%s0 + $0x60] sm:$0xff]
  %v47 = vld [vmem:[%s0 + $0x68] sm:$0xff]
  %v48 = vld [vmem:[%s0 + $0x70] sm:$0xff]
  %v49 = vld [vmem:[%s0 + $0x78] sm:$0xff]
  %v50 = vld [vmem:[%s0 + $0x80] sm:$0xff]
  %v51 = vld [vmem:[%s0 + $0x88] sm:$0xff]
  %v52 = vld [vmem:[%s0 + $0x90] sm:$0xff]
  %v53 = vld [vmem:[%s0 + $0x98] sm:$0xff]
  %v54 = vld [vmem:[%s0 + $0xa0] sm:$0xff]
  %v55 = vld [vmem:[%s0 + $0xa8] sm:$0xff]
  %v56 = vld [vmem:[%s0 + $0xb0] sm:$0xff]
  %v57 = vld [vmem:[%s0 + $0xb8] sm:$0xff]
  %v58 = vld [vmem:[%s0 + $0xc0] sm:$0xff]
  %v59 = vld [vmem:[%s0 + $0xc8] sm:$0xff]
  %v60 = vld [vmem:[%s0 + $0xd0] sm:$0xff]
  %v61 = vld [vmem:[%s0 + $0xd8] sm:$0xff]
  %v62 = vld [vmem:[%s0 + $0xe0] sm:$0xff]
  %v63 = vld [vmem:[%s0 + $0xe8] sm:$0xff]
  %v64 = vld [vmem:[%s0 + $0xf0] sm:$0xff]
  %v65 = vld [vmem:[%s0 + $0xf8] sm:$0xff]
  %v66 = vld [vmem:[%s0 + $0x100] sm:$0xff]
  %v67 = vld [vmem:[%s0 + $0x108] sm:$0xff]
  %v68 = vld [vmem:[%s0 + $0x110] sm:$0xff]
  %v69 = vld [vmem:[%s0 + $0x118] sm:$0xff]
  %v70 = vld [vmem:[%s0 + $0x120] sm:$0xff]
  %v71 = vld [vmem:[%s0 + $0x128] sm:$0xff]
  %v72 = vld [vmem:[%s0 + $0x130] sm:$0xff]
  %v73 = vld [vmem:[%s0 + $0x138] sm:$0xff]
  %v74 = vld [vmem:[%s0 + $0x140] sm:$0xff]
  %v75 = vld [vmem:[%s0 + $0x148] sm:$0xff]
  %v76 = vld [vmem:[%s0 + $0x150] sm:$0xff]
  %v77 = vld [vmem:[%s0 + $0x158] sm:$0xff]
  %v78 = vld [vmem:[%s0 + $0x160] sm:$0xff]
  %v79 = vld [vmem:[%s0 + $0x168] sm:$0xff]
  %v80 = vld [vmem:[%s0 + $0x170] sm:$0xff]
  %v81 = vld [vmem:[%s0 + $0x178] sm:$0xff]
  %v82 = vld [vmem:[%s0 + $0x180] sm:$0xff]
  %v83 = vld [vmem:[%s0 + $0x188] sm:$0xff]
  %v84 = vld [vmem:[%s0 + $0x190] sm:$0xff]
  %v85 = vld [vmem:[%s0 + $0x198] sm:$0xff]
  %v86 = vld [vmem:[%s0 + $0x1a0] sm:$0xff]
  %v87 = vld [vmem:[%s0 + $0x1a8] sm:$0xff]
  %v88 = vld [vmem:[%s0 + $0x1b0] sm:$0xff]
  %v89 = vld [vmem:[%s0 + $0x1b8] sm:$0xff]
  %v90 = vld [vmem:[%s0 + $0x1c0] sm:$0xff]
  %v91 = vld [vmem:[%s0 + $0x1c8] sm:$0xff]
  %v92 = vld [vmem:[%s0 + $0x1d0] sm:$0xff]
  %v93 = vld [vmem:[%s0 + $0x1d8] sm:$0xff]
  %v94 = vld [vmem:[%s0 + $0x1e0] sm:$0xff]
  %v95 = vld [vmem:[%s0 + $0x1e8] sm:$0xff]
  %v96 = vld [vmem:[%s0 + $0x1f0] sm:$0xff]
  %v97 = vld [vmem:[%s0 + $0x1f8] sm:$0xff]
  %v99 = vlaneseq
  %v100 = vshrl.u32 %v99, 7
  %v101 = vsub.s32 0, %v100
  %v102 = vrot.slane %v30, %v101
  %v104 = vmul.f32 %v34, %v102
  %v105 = vmul.f32 %v35, %v102
  %v106 = vmul.f32 %v36, %v102
  %v107 = vmul.f32 %v37, %v102
  %v108 = vmul.f32 %v38, %v102
  %v109 = vmul.f32 %v39, %v102
  %v110 = vmul.f32 %v40, %v102
  %v111 = vmul.f32 %v41, %v102
  %v112 = vmul.f32 %v42, %v102
  %v113 = vmul.f32 %v43, %v102
  %v114 = vmul.f32 %v44, %v102
  %v115 = vmul.f32 %v45, %v102
  %v116 = vmul.f32 %v46, %v102
  %v117 = vmul.f32 %v47, %v102
  %v118 = vmul.f32 %v48, %v102
  %v119 = vmul.f32 %v49, %v102
  %v120 = vmul.f32 %v50, %v102
  %v121 = vmul.f32 %v51, %v102
  %v122 = vmul.f32 %v52, %v102
  %v123 = vmul.f32 %v53, %v102
  %v124 = vmul.f32 %v54, %v102
  %v125 = vmul.f32 %v55, %v102
  %v126 = vmul.f32 %v56, %v102
  %v127 = vmul.f32 %v57, %v102
  %v128 = vmul.f32 %v58, %v102
  %v129 = vmul.f32 %v59, %v102
  %v130 = vmul.f32 %v60, %v102
  %v131 = vmul.f32 %v61, %v102
  %v132 = vmul.f32 %v62, %v102
  %v133 = vmul.f32 %v63, %v102
  %v134 = vmul.f32 %v64, %v102
  %v135 = vmul.f32 %v65, %v102
  %v136 = vmul.f32 %v66, %v102
  %v137 = vmul.f32 %v67, %v102
  %v138 = vmul.f32 %v68, %v102
  %v139 = vmul.f32 %v69, %v102
  %v140 = vmul.f32 %v70, %v102
  %v141 = vmul.f32 %v71, %v102
  %v142 = vmul.f32 %v72, %v102
  %v143 = vmul.f32 %v73, %v102
  %v144 = vmul.f32 %v74, %v102
  %v145 = vmul.f32 %v75, %v102
  %v146 = vmul.f32 %v76, %v102
  %v147 = vmul.f32 %v77, %v102
  %v148 = vmul.f32 %v78, %v102
  %v149 = vmul.f32 %v79, %v102
  %v150 = vmul.f32 %v80, %v102
  %v151 = vmul.f32 %v81, %v102
  %v152 = vmul.f32 %v82, %v102
  %v153 = vmul.f32 %v83, %v102
  %v154 = vmul.f32 %v84, %v102
  %v155 = vmul.f32 %v85, %v102
  %v156 = vmul.f32 %v86, %v102
  %v157 = vmul.f32 %v87, %v102
  %v158 = vmul.f32 %v88, %v102
  %v159 = vmul.f32 %v89, %v102
  %v160 = vmul.f32 %v90, %v102
  %v161 = vmul.f32 %v91, %v102
  %v162 = vmul.f32 %v92, %v102
  %v163 = vmul.f32 %v93, %v102
  %v164 = vmul.f32 %v94, %v102
  %v165 = vmul.f32 %v95, %v102
  %v166 = vmul.f32 %v96, %v102
  %v167 = vmul.f32 %v97, %v102
  %v169 = vlaneseq
  %v170 = vshrl.u32 %v169, 7
  %v171 = vsub.s32 0, %v170
  %v172 = vrot.slane %v33, %v171
  %v174 = vadd.f32 %v104, %v172
  %v175 = vadd.f32 %v105, %v172
  %v176 = vadd.f32 %v106, %v172
  %v177 = vadd.f32 %v107, %v172
  %v178 = vadd.f32 %v108, %v172
  %v179 = vadd.f32 %v109, %v172
  %v180 = vadd.f32 %v110, %v172
  %v181 = vadd.f32 %v111, %v172
  %v182 = vadd.f32 %v112, %v172
  %v183 = vadd.f32 %v113, %v172
  %v184 = vadd.f32 %v114, %v172
  %v185 = vadd.f32 %v115, %v172
  %v186 = vadd.f32 %v116, %v172
  %v187 = vadd.f32 %v117, %v172
  %v188 = vadd.f32 %v118, %v172
  %v189 = vadd.f32 %v119, %v172
  %v190 = vadd.f32 %v120, %v172
  %v191 = vadd.f32 %v121, %v172
  %v192 = vadd.f32 %v122, %v172
  %v193 = vadd.f32 %v123, %v172
  %v194 = vadd.f32 %v124, %v172
  %v195 = vadd.f32 %v125, %v172
  %v196 = vadd.f32 %v126, %v172
  %v197 = vadd.f32 %v127, %v172
  %v198 = vadd.f32 %v128, %v172
  %v199 = vadd.f32 %v129, %v172
  %v200 = vadd.f32 %v130, %v172
  %v201 = vadd.f32 %v131, %v172
  %v202 = vadd.f32 %v132, %v172
  %v203 = vadd.f32 %v133, %v172
  %v204 = vadd.f32 %v134, %v172
  %v205 = vadd.f32 %v135, %v172
  %v206 = vadd.f32 %v136, %v172
  %v207 = vadd.f32 %v137, %v172
  %v208 = vadd.f32 %v138, %v172
  %v209 = vadd.f32 %v139, %v172
  %v210 = vadd.f32 %v140, %v172
  %v211 = vadd.f32 %v141, %v172
  %v212 = vadd.f32 %v142, %v172
  %v213 = vadd.f32 %v143, %v172
  %v214 = vadd.f32 %v144, %v172
  %v215 = vadd.f32 %v145, %v172
  %v216 = vadd.f32 %v146, %v172
  %v217 = vadd.f32 %v147, %v172
  %v218 = vadd.f32 %v148, %v172
  %v219 = vadd.f32 %v149, %v172
  %v220 = vadd.f32 %v150, %v172
  %v221 = vadd.f32 %v151, %v172
  %v222 = vadd.f32 %v152, %v172
  %v223 = vadd.f32 %v153, %v172
  %v224 = vadd.f32 %v154, %v172
  %v225 = vadd.f32 %v155, %v172
  %v226 = vadd.f32 %v156, %v172
  %v227 = vadd.f32 %v157, %v172
  %v228 = vadd.f32 %v158, %v172
  %v229 = vadd.f32 %v159, %v172
  %v230 = vadd.f32 %v160, %v172
  %v231 = vadd.f32 %v161, %v172
  %v232 = vadd.f32 %v162, %v172
  %v233 = vadd.f32 %v163, %v172
  %v234 = vadd.f32 %v164, %v172
  %v235 = vadd.f32 %v165, %v172
  %v236 = vadd.f32 %v166, %v172
  %v237 = vadd.f32 %v167, %v172
  %v238 = vmax.f32 %v174, 0.0
  %v239 = vmax.f32 %v175, 0.0
  %v240 = vmax.f32 %v176, 0.0
  %v241 = vmax.f32 %v177, 0.0
  %v242 = vmax.f32 %v178, 0.0
  %v243 = vmax.f32 %v179, 0.0
  %v244 = vmax.f32 %v180, 0.0
  %v245 = vmax.f32 %v181, 0.0
  %v246 = vmax.f32 %v182, 0.0
  %v247 = vmax.f32 %v183, 0.0
  %v248 = vmax.f32 %v184, 0.0
  %v249 = vmax.f32 %v185, 0.0
  %v250 = vmax.f32 %v186, 0.0
  %v251 = vmax.f32 %v187, 0.0
  %v252 = vmax.f32 %v188, 0.0
  %v253 = vmax.f32 %v189, 0.0
  %v254 = vmax.f32 %v190, 0.0
  %v255 = vmax.f32 %v191, 0.0
  %v256 = vmax.f32 %v192, 0.0
  %v257 = vmax.f32 %v193, 0.0
  %v258 = vmax.f32 %v194, 0.0
  %v259 = vmax.f32 %v195, 0.0
  %v260 = vmax.f32 %v196, 0.0
  %v261 = vmax.f32 %v197, 0.0
  %v262 = vmax.f32 %v198, 0.0
  %v263 = vmax.f32 %v199, 0.0
  %v264 = vmax.f32 %v200, 0.0
  %v265 = vmax.f32 %v201, 0.0
  %v266 = vmax.f32 %v202, 0.0
  %v267 = vmax.f32 %v203, 0.0
  %v268 = vmax.f32 %v204, 0.0
  %v269 = vmax.f32 %v205, 0.0
  %v270 = vmax.f32 %v206, 0.0
  %v271 = vmax.f32 %v207, 0.0
  %v272 = vmax.f32 %v208, 0.0
  %v273 = vmax.f32 %v209, 0.0
  %v274 = vmax.f32 %v210, 0.0
  %v275 = vmax.f32 %v211, 0.0
  %v276 = vmax.f32 %v212, 0.0
  %v277 = vmax.f32 %v213, 0.0
  %v278 = vmax.f32 %v214, 0.0
  %v279 = vmax.f32 %v215, 0.0
  %v280 = vmax.f32 %v216, 0.0
  %v281 = vmax.f32 %v217, 0.0
  %v282 = vmax.f32 %v218, 0.0
  %v283 = vmax.f32 %v219, 0.0
  %v284 = vmax.f32 %v220, 0.0
  %v285 = vmax.f32 %v221, 0.0
  %v286 = vmax.f32 %v222, 0.0
  %v287 = vmax.f32 %v223, 0.0
  %v288 = vmax.f32 %v224, 0.0
  %v289 = vmax.f32 %v225, 0.0
  %v290 = vmax.f32 %v226, 0.0
  %v291 = vmax.f32 %v227, 0.0
  %v292 = vmax.f32 %v228, 0.0
  %v293 = vmax.f32 %v229, 0.0
  %v294 = vmax.f32 %v230, 0.0
  %v295 = vmax.f32 %v231, 0.0
  %v296 = vmax.f32 %v232, 0.0
  %v297 = vmax.f32 %v233, 0.0
  %v298 = vmax.f32 %v234, 0.0
  %v299 = vmax.f32 %v235, 0.0
  %v300 = vmax.f32 %v236, 0.0
  %v301 = vmax.f32 %v237, 0.0
  %302 = vst [vmem:[%s5] sm:$0xff] %v238
  %303 = vst [vmem:[%s5 + $0x8] sm:$0xff] %v239
  %304 = vst [vmem:[%s5 + $0x10] sm:$0xff] %v240
  %305 = vst [vmem:[%s5 + $0x18] sm:$0xff] %v241
  %306 = vst [vmem:[%s5 + $0x20] sm:$0xff] %v242
  %307 = vst [vmem:[%s5 + $0x28] sm:$0xff] %v243
  %308 = vst [vmem:[%s5 + $0x30] sm:$0xff] %v244
  %309 = vst [vmem:[%s5 + $0x38] sm:$0xff] %v245
  %310 = vst [vmem:[%s5 + $0x40] sm:$0xff] %v246
  %311 = vst [vmem:[%s5 + $0x48] sm:$0xff] %v247
  %312 = vst [vmem:[%s5 + $0x50] sm:$0xff] %v248
  %313 = vst [vmem:[%s5 + $0x58] sm:$0xff] %v249
  %314 = vst [vmem:[%s5 + $0x60] sm:$0xff] %v250
  %315 = vst [vmem:[%s5 + $0x68] sm:$0xff] %v251
  %316 = vst [vmem:[%s5 + $0x70] sm:$0xff] %v252
  %317 = vst [vmem:[%s5 + $0x78] sm:$0xff] %v253
  %318 = vst [vmem:[%s5 + $0x80] sm:$0xff] %v254
  %319 = vst [vmem:[%s5 + $0x88] sm:$0xff] %v255
  %320 = vst [vmem:[%s5 + $0x90] sm:$0xff] %v256
  %321 = vst [vmem:[%s5 + $0x98] sm:$0xff] %v257
  %322 = vst [vmem:[%s5 + $0xa0] sm:$0xff] %v258
  %323 = vst [vmem:[%s5 + $0xa8] sm:$0xff] %v259
  %324 = vst [vmem:[%s5 + $0xb0] sm:$0xff] %v260
  %325 = vst [vmem:[%s5 + $0xb8] sm:$0xff] %v261
  %326 = vst [vmem:[%s5 + $0xc0] sm:$0xff] %v262
  %327 = vst [vmem:[%s5 + $0xc8] sm:$0xff] %v263
  %328 = vst [vmem:[%s5 + $0xd0] sm:$0xff] %v264
  %329 = vst [vmem:[%s5 + $0xd8] sm:$0xff] %v265
  %330 = vst [vmem:[%s5 + $0xe0] sm:$0xff] %v266
  %331 = vst [vmem:[%s5 + $0xe8] sm:$0xff] %v267
  %332 = vst [vmem:[%s5 + $0xf0] sm:$0xff] %v268
  %333 = vst [vmem:[%s5 + $0xf8] sm:$0xff] %v269
  %334 = vst [vmem:[%s5 + $0x100] sm:$0xff] %v270
  %335 = vst [vmem:[%s5 + $0x108] sm:$0xff] %v271
  %336 = vst [vmem:[%s5 + $0x110] sm:$0xff] %v272
  %337 = vst [vmem:[%s5 + $0x118] sm:$0xff] %v273
  %338 = vst [vmem:[%s5 + $0x120] sm:$0xff] %v274
  %339 = vst [vmem:[%s5 + $0x128] sm:$0xff] %v275
  %340 = vst [vmem:[%s5 + $0x130] sm:$0xff] %v276
  %341 = vst [vmem:[%s5 + $0x138] sm:$0xff] %v277
  %342 = vst [vmem:[%s5 + $0x140] sm:$0xff] %v278
  %343 = vst [vmem:[%s5 + $0x148] sm:$0xff] %v279
  %344 = vst [vmem:[%s5 + $0x150] sm:$0xff] %v280
  %345 = vst [vmem:[%s5 + $0x158] sm:$0xff] %v281
  %346 = vst [vmem:[%s5 + $0x160] sm:$0xff] %v282
  %347 = vst [vmem:[%s5 + $0x168] sm:$0xff] %v283
  %348 = vst [vmem:[%s5 + $0x170] sm:$0xff] %v284
  %349 = vst [vmem:[%s5 + $0x178] sm:$0xff] %v285
  %350 = vst [vmem:[%s5 + $0x180] sm:$0xff] %v286
  %351 = vst [vmem:[%s5 + $0x188] sm:$0xff] %v287
  %352 = vst [vmem:[%s5 + $0x190] sm:$0xff] %v288
  %353 = vst [vmem:[%s5 + $0x198] sm:$0xff] %v289
  %354 = vst [vmem:[%s5 + $0x1a0] sm:$0xff] %v290
  %355 = vst [vmem:[%s5 + $0x1a8] sm:$0xff] %v291
  %356 = vst [vmem:[%s5 + $0x1b0] sm:$0xff] %v292
  %357 = vst [vmem:[%s5 + $0x1b8] sm:$0xff] %v293
  %358 = vst [vmem:[%s5 + $0x1c0] sm:$0xff] %v294
  %359 = vst [vmem:[%s5 + $0x1c8] sm:$0xff] %v295
  %360 = vst [vmem:[%s5 + $0x1d0] sm:$0xff] %v296
  %361 = vst [vmem:[%s5 + $0x1d8] sm:$0xff] %v297
  %362 = vst [vmem:[%s5 + $0x1e0] sm:$0xff] %v298
  %363 = vst [vmem:[%s5 + $0x1e8] sm:$0xff] %v299
  %364 = vst [vmem:[%s5 + $0x1f0] sm:$0xff] %v300
  %365 = vst [vmem:[%s5 + $0x1f8] sm:$0xff] %v301
  // Predicated region
  $region22: #{vgg_conv_forward.3} parent=0 // pred_check
    _
  $region23: #{vgg_conv_forward.3} parent=0 // pred_check_branch
    %367 = sbr.rel (0) target = $region25
  $region24: #{vgg_conv_forward.3} parent=0 // pred_region
    _
  $region25: #{vgg_conv_forward.3} parent=0 // pred_fallthru
    _
  // Predicated region
  $region26: #{vgg_conv_forward.3} parent=0 // pred_check
    _
  $region27: #{vgg_conv_forward.3} parent=0 // pred_check_branch
    %369 = sbr.rel (0) target = $region29
  $region28: #{vgg_conv_forward.3} parent=0 // pred_region
    _
  $region29: #{vgg_conv_forward.3} parent=0 // pred_fallthru
    _

// kernel: vgg_conv_forward.2
$region0: #{vgg_conv_forward.2}
  #allocation0 [shape = 'u32[]', space=smem, size = 0x4, offset = 0x4, fixed_abs, tag = 'smem constant byte address 0x4 - core index']
  #allocation1 [shape = 'u32[144,128]{1,0:T(1,128)}', space=vmem, size = 0x12000, scoped, tag = 'internal scratch']
  %s0 = inlined_call_operand.vmem [shape: f32[2,18,18,4], index: 0, kind: input, shape index: {}]
  %s1 = inlined_call_operand.vmem [shape: f32[3,3,4,128], index: 1, kind: input, shape index: {}]
  %s2 = inlined_call_operand.vmem [shape: f32[512,128], index: 2, kind: output, shape index: {0}]
  %s3 = inlined_call_operand.vmem [shape: f32[2,1,128], index: 3, kind: output, shape index: {1}]
  %s4 = inlined_call_operand.vmem [shape: f32[2,1,128], index: 4, kind: output, shape index: {2}]
  %5 = xla_tuple %s2, %s3, %s4
  %s6 = sld [smem:[#allocation0]]
  $region61: #{vgg_conv_forward.2} parent=0
    _
  %s8 = ssub.s32 1, %s6
  %s9 = scalar_select 0, %s8, %s6
  loop: start=0, step=1, limit=4
  $region2: #{vgg_conv_forward.2} parent=0 // loop_pre_header
    _
  $region3: #{vgg_conv_forward.2} parent=0 // loop_header
    %s11 = sphi 0, %s15
    %p12 = scmp.ge.s32.totalorder %s11, 4
    %s18 = sphi 0, %s37
    %s19 = sphi 0, %s33
    %s20 = sphi 0, %s29
    %s21 = sphi 0, %s18
    %s22 = sphi 0, %s19
    %s23 = sphi 0, %s20
    %s24 = sphi 0, %s21
    %s25 = sphi 0, %s22
    %s26 = sphi 0, %s23
    %s42 = sphi 0, %s44
    %s45 = sphi 0, %s42
    %s46 = sphi 0, %s45
    %s62 = sphi 0, %s46
    %s68 = sphi 0, %s70
    %s71 = sphi 0, %s68
    %s72 = sphi 0, %s71
    %s88 = sphi 0, %s72
    %s98 = sphi 0, %s100
    %s101 = sphi 0, %s98
    %s102 = sphi 0, %s101
    %s118 = sphi 0, %s102
    %s126 = sphi 0, %s128
    %s129 = sphi 0, %s126
    %s130 = sphi 0, %s129
    %s146 = sphi 0, %s130
    %s154 = sphi 0, %s156
    %s157 = sphi 0, %s154
    %s158 = sphi 0, %s157
    %s174 = sphi 0, %s158
  $region4: #{vgg_conv_forward.2} parent=0 // loop_header_branch
    %14 = sbr.rel (%p12) target = $region8
  $region5: #{vgg_conv_forward.2} parent=0 // loop_body
    %s16 = ssub.s32 %s11, 1
    %s17 = ssub.s32 %s11, 2
    %s27 = sadd.s32 1, %s20
    %p28 = scmp.ge.s32.totalorder %s27, 1
    %s29 = scalar_select %p28, 0, %s27
    %s30 = sadd.s32 1, %s19
    %s31 = scalar_select %p28, %s30, %s19
    %p32 = scmp.ge.s32.totalorder %s31, 1
    %s33 = scalar_select %p32, 0, %s31
    %s34 = sadd.s32 1, %s18
    %s35 = scalar_select %p32, %s34, %s18
    %p36 = scmp.ge.s32.totalorder %s35, 2
    %s37 = scalar_select %p36, 0, %s35
    %s38 = sadd.s32 %s18, %s20
    %s39 = sadd.s32 %s37, %s29
    %s40 = ssub.s32 %s38, %s39
    %p41 = scmp.eq.s32.totalorder %s40, 0
    %s43 = sadd.s32 %s42, 1
    %s44 = scalar_select %p41, %s42, %s43
    %p47 = pneg %p41
    %p48 = scmp.eq.s32.totalorder %s11, 1
    %p49 = por %p47, %p48
    %p50 = scmp.ne.s32.totalorder %s42, %s45
    %p51 = scmp.eq.s32.totalorder %s11, 0
    %p52 = por %p50, %p51
    %p53 = scmp.ne.s32.totalorder %s42, %s45
    %p54 = scmp.eq.s32.totalorder %s16, 1
    %p55 = por %p53, %p54
    %p56 = scmp.ne.s32.totalorder %s45, %s46
    %p57 = scmp.eq.s32.totalorder %s16, 0
    %p58 = por %p56, %p57
    %p59 = scmp.ne.s32.totalorder %s45, %s46
    %p60 = scmp.eq.s32.totalorder %s17, 1
    %p61 = por %p59, %p60
    %p63 = scmp.ne.s32.totalorder %s46, %s62
    %p64 = scmp.eq.s32.totalorder %s17, 0
    %p65 = por %p63, %p64
    %s66 = ssub.s32 %s19, %s33
    %p67 = scmp.eq.s32.totalorder %s66, 0
    %s69 = sadd.s32 %s68, 1
    %s70 = scalar_select %p67, %s68, %s69
    %p73 = pneg %p67
    %p74 = scmp.eq.s32.totalorder %s11, 1
    %p75 = por %p73, %p74
    %p76 = scmp.ne.s32.totalorder %s68, %s71
    %p77 = scmp.eq.s32.totalorder %s11, 0
    %p78 = por %p76, %p77
    %p79 = scmp.ne.s32.totalorder %s68, %s71
    %p80 = scmp.eq.s32.totalorder %s16, 1
    %p81 = por %p79, %p80
    %p82 = scmp.ne.s32.totalorder %s71, %s72
    %p83 = scmp.eq.s32.totalorder %s16, 0
    %p84 = por %p82, %p83
    %p85 = scmp.ne.s32.totalorder %s71, %s72
    %p86 = scmp.eq.s32.totalorder %s17, 1
    %p87 = por %p85, %p86
    %p89 = scmp.ne.s32.totalorder %s72, %s88
    %p90 = scmp.eq.s32.totalorder %s17, 0
    %p91 = por %p89, %p90
    %s92 = sadd.s32 %s18, %s20
    %s93 = sadd.s32 %s37, %s29
    %s94 = ssub.s32 %s92, %s93
    %s95 = ssub.s32 %s19, %s33
    %s96 = sor.u32 %s94, %s95
    %p97 = scmp.eq.s32.totalorder %s96, 0
    %s99 = sadd.s32 %s98, 1
    %s100 = scalar_select %p97, %s98, %s99
    %p103 = pneg %p97
    %p104 = scmp.eq.s32.totalorder %s11, 1
    %p105 = por %p103, %p104
    %p106 = scmp.ne.s32.totalorder %s98, %s101
    %p107 = scmp.eq.s32.totalorder %s11, 0
    %p108 = por %p106, %p107
    %p109 = scmp.ne.s32.totalorder %s98, %s101
    %p110 = scmp.eq.s32.totalorder %s16, 1
    %p111 = por %p109, %p110
    %p112 = scmp.ne.s32.totalorder %s101, %s102
    %p113 = scmp.eq.s32.totalorder %s16, 0
    %p114 = por %p112, %p113
    %p115 = scmp.ne.s32.totalorder %s101, %s102
    %p116 = scmp.eq.s32.totalorder %s17, 1
    %p117 = por %p115, %p116
    %p119 = scmp.ne.s32.totalorder %s102, %s118
    %p120 = scmp.eq.s32.totalorder %s17, 0
    %p121 = por %p119, %p120
    %s122 = ssub.s32 %s18, %s37
    %s123 = ssub.s32 %s19, %s33
    %s124 = sor.u32 %s122, %s123
    %p125 = scmp.eq.s32.totalorder %s124, 0
    %s127 = sadd.s32 %s126, 1
    %s128 = scalar_select %p125, %s126, %s127
    %p131 = pneg %p125
    %p132 = scmp.eq.s32.totalorder %s11, 1
    %p133 = por %p131, %p132
    %p134 = scmp.ne.s32.totalorder %s126, %s129
    %p135 = scmp.eq.s32.totalorder %s11, 0
    %p136 = por %p134, %p135
    %p137 = scmp.ne.s32.totalorder %s126, %s129
    %p138 = scmp.eq.s32.totalorder %s16, 1
    %p139 = por %p137, %p138
    %p140 = scmp.ne.s32.totalorder %s129, %s130
    %p141 = scmp.eq.s32.totalorder %s16, 0
    %p142 = por %p140, %p141
    %p143 = scmp.ne.s32.totalorder %s129, %s130
    %p144 = scmp.eq.s32.totalorder %s17, 1
    %p145 = por %p143, %p144
    %p147 = scmp.ne.s32.totalorder %s130, %s146
    %p148 = scmp.eq.s32.totalorder %s17, 0
    %p149 = por %p147, %p148
    %s150 = ssub.s32 %s18, %s37
    %s151 = ssub.s32 %s19, %s33
    %s152 = sor.u32 %s150, %s151
    %p153 = scmp.eq.s32.totalorder %s152, 0
    %s155 = sadd.s32 %s154, 1
    %s156 = scalar_select %p153, %s154, %s155
    %p159 = pneg %p153
    %p160 = scmp.eq.s32.totalorder %s11, 1
    %p161 = por %p159, %p160
    %p162 = scmp.ne.s32.totalorder %s154, %s157
    %p163 = scmp.eq.s32.totalorder %s11, 0
    %p164 = por %p162, %p163
    %p165 = scmp.ne.s32.totalorder %s154, %s157
    %p166 = scmp.eq.s32.totalorder %s16, 1
    %p167 = por %p165, %p166
    %p168 = scmp.ne.s32.totalorder %s157, %s158
    %p169 = scmp.eq.s32.totalorder %s16, 0
    %p170 = por %p168, %p169
    %p171 = scmp.ne.s32.totalorder %s157, %s158
    %p172 = scmp.eq.s32.totalorder %s17, 1
    %p173 = por %p171, %p172
    %p175 = scmp.ne.s32.totalorder %s158, %s174
    %p176 = scmp.eq.s32.totalorder %s17, 0
    %p177 = por %p175, %p176
    %p178 = scmp.le.s32.totalorder 1, %s11
    %p179 = scmp.lt.s32.totalorder %s11, 3
    %p180 = pnand %p178, %p179
    %p181 = pneg %p180
    // Predicated region
    $region9: #{vgg_conv_forward.2} parent=5 // pred_check
      _
    $region10: #{vgg_conv_forward.2} parent=5 // pred_check_branch
      %183 = sbr.rel (%p180) target = $region12
    $region11: #{vgg_conv_forward.2} parent=5 // pred_region
      %s184 = ssub.s32 %s11, 1
      // Predicated region
      $region13: #{vgg_conv_forward.2} parent=11 // pred_check
        %p185 = pneg %p84
      $region14: #{vgg_conv_forward.2} parent=11 // pred_check_branch
        %187 = sbr.rel (%p185) target = $region16
      $region15: #{vgg_conv_forward.2} parent=11 // pred_region
        %p188 = scmp.lt.s32.totalorder %s22, 0
        %s189 = scalar_select %p188, %s22, 0
        %s190 = smul.addr %s189, 4
        %s191 = scalar_lea.vmem %s1, %s190
      $region16: #{vgg_conv_forward.2} parent=11 // pred_fallthru
        _
    $region12: #{vgg_conv_forward.2} parent=5 // pred_fallthru
      _
    %p192 = scmp.lt.s32.totalorder %s11, 2
    // Predicated region
    $region17: #{vgg_conv_forward.2} parent=5 // pred_check
      %p193 = pneg %p192
    $region18: #{vgg_conv_forward.2} parent=5 // pred_check_branch
      %195 = sbr.rel (%p193) target = $region20
    $region19: #{vgg_conv_forward.2} parent=5 // pred_region
      // Predicated region
      $region21: #{vgg_conv_forward.2} parent=19 // pred_check
        %p196 = pneg %p52
      $region22: #{vgg_conv_forward.2} parent=19 // pred_check_branch
        %198 = sbr.rel (%p196) target = $region24
      $region23: #{vgg_conv_forward.2} parent=19 // pred_region
        %s199 = sadd.s32 %s18, %s20
        %p200 = scmp.lt.s32.totalorder %s199, 1
        %s201 = scalar_select %p200, %s199, 1
        %s202 = smul.addr %s201, 54
        %s203 = smul.addr %s202, 8
        %s204 = scalar_lea.vmem %s0, %s203
        %s205 = sadd.s32 %s18, %s20
      $region24: #{vgg_conv_forward.2} parent=19 // pred_fallthru
        _
    $region20: #{vgg_conv_forward.2} parent=5 // pred_fallthru
      _
    %p206 = scmp.le.s32.totalorder 1, %s11
    %p207 = scmp.lt.s32.totalorder %s11, 3
    %p208 = pnand %p206, %p207
    %p209 = pneg %p208
    // Predicated region
    $region25: #{vgg_conv_forward.2} parent=5 // pred_check
      _
    $region26: #{vgg_conv_forward.2} parent=5 // pred_check_branch
      %211 = sbr.rel (%p208) target = $region28
    $region27: #{vgg_conv_forward.2} parent=5 // pred_region
      %s212 = ssub.s32 %s11, 1
      %s213 = sadd.s32 %s21, %s23
      %p214 = scmp.lt.s32.totalorder %s213, 1
      %s215 = scalar_select %p214, %s213, 1
      %s216 = smul.addr %s215, 54
      %s217 = smul.addr %s216, 8
      %s218 = scalar_lea.vmem %s0, %s217
      %p219 = pneg %p58
      %p220 = pneg %p55
      %p221 = scmp.lt.s32.totalorder %s22, 0
      %s222 = scalar_select %p221, %s22, 0
      %s223 = smul.addr %s222, 4
      %s224 = scalar_lea.vmem %s1, %s223
      %p225 = pneg %p84
      %p226 = pneg %p81
      %p227 = pneg %p114
      %p228 = pneg %p111
      %s229 = sadd.s32 %s21, %s23
      %s230 = smul.u32 32, %s229
      %p231 = scmp.lt.s32.totalorder %s230, 63
      %s232 = scalar_select %p231, %s230, 63
      %p233 = scmp.lt.s32.totalorder %s22, 0
      %s234 = scalar_select %p233, %s22, 0
      %s235 = sadd.s32 %s234, %s232
      %s236 = smul.addr %s235, 8
      %s237 = scalar_lea.vmem %s2, %s236
      %p238 = pneg %p142
      %p239 = pneg %p139
      %p240 = scmp.lt.s32.totalorder %s21, 1
      %s241 = scalar_select %p240, %s21, 1
      %p242 = scmp.lt.s32.totalorder %s22, 0
      %s243 = scalar_select %p242, %s22, 0
      %s244 = sadd.s32 %s243, %s241
      %s245 = scalar_lea.vmem %s3, %s244
      %p246 = pneg %p170
      %p247 = pneg %p167
      %p248 = scmp.lt.s32.totalorder %s21, 1
      %s249 = scalar_select %p248, %s21, 1
      %p250 = scmp.lt.s32.totalorder %s22, 0
      %s251 = scalar_select %p250, %s22, 0
      %s252 = sadd.s32 %s251, %s249
      %s253 = scalar_lea.vmem %s4, %s252
      %s254 = sadd.s32 %s21, %s23
      %p255 = scmp.lt.s32.totalorder %s254, 1
      %s256 = scalar_select %p255, %s254, 1
      %s257 = smul.addr %s256, 54
      %s258 = smul.addr %s257, 8
      %s259 = scalar_lea.vmem %s0, %s258
      %s260 = sadd.s32 %s21, %s23
      %p261 = scmp.lt.s32.totalorder %s22, 0
      %s262 = scalar_select %p261, %s22, 0
      %s263 = smul.addr %s262, 4
      %s264 = scalar_lea.vmem %s1, %s263
      %s265 = sadd.s32 %s21, %s23
      %s266 = smul.u32 32, %s265
      %p267 = scmp.lt.s32.totalorder %s266, 63
      %s268 = scalar_select %p267, %s266, 63
      %p269 = scmp.lt.s32.totalorder %s22, 0
      %s270 = scalar_select %p269, %s22, 0
      %s271 = sadd.s32 %s270, %s268
      %s272 = smul.addr %s271, 8
      %s273 = scalar_lea.vmem %s2, %s272
      %s274 = sadd.s32 %s21, %s23
      %s275 = smul.u32 32, %s274
      %p276 = scmp.lt.s32.totalorder %s21, 1
      %s277 = scalar_select %p276, %s21, 1
      %p278 = scmp.lt.s32.totalorder %s22, 0
      %s279 = scalar_select %p278, %s22, 0
      %s280 = sadd.s32 %s279, %s277
      %s281 = scalar_lea.vmem %s3, %s280
      %p282 = scmp.lt.s32.totalorder %s21, 1
      %s283 = scalar_select %p282, %s21, 1
      %p284 = scmp.lt.s32.totalorder %s22, 0
      %s285 = scalar_select %p284, %s22, 0
      %s286 = sadd.s32 %s285, %s283
      %s287 = scalar_lea.vmem %s4, %s286
      %v288 = vld [vmem:[%s259] sm:$0xff]
      %v289 = vld [vmem:[%s259 + $0x8] sm:$0xff]
      %v290 = vld [vmem:[%s259 + $0x18] sm:$0xff]
      %v291 = vld [vmem:[%s259 + $0x20] sm:$0xff]
      %v292 = vld [vmem:[%s259 + $0x30] sm:$0xff]
      %v293 = vld [vmem:[%s259 + $0x38] sm:$0xff]
      %v294 = vld [vmem:[%s259 + $0x48] sm:$0xff]
      %v295 = vld [vmem:[%s259 + $0x50] sm:$0xff]
      %v296 = vld [vmem:[%s259 + $0x60] sm:$0xff]
      %v297 = vld [vmem:[%s259 + $0x68] sm:$0xff]
      %v298 = vld [vmem:[%s259 + $0x78] sm:$0xff]
      %v299 = vld [vmem:[%s259 + $0x80] sm:$0xff]
      %v300 = vld [vmem:[%s259 + $0x90] sm:$0xff]
      %v301 = vld [vmem:[%s259 + $0x98] sm:$0xff]
      %v302 = vld [vmem:[%s259 + $0xa8] sm:$0xff]
      %v303 = vld [vmem:[%s259 + $0xb0] sm:$0xff]
      %v304 = vld [vmem:[%s259 + $0xc0] sm:$0xff]
      %v305 = vld [vmem:[%s259 + $0xc8] sm:$0xff]
      %v306 = vld [vmem:[%s259 + $0xd8] sm:$0xff]
      %v307 = vld [vmem:[%s259 + $0xe0] sm:$0xff]
      %v308 = vld [vmem:[%s259 + $0xf0] sm:$0xff]
      %v309 = vld [vmem:[%s259 + $0xf8] sm:$0xff]
      %v310 = vld [vmem:[%s259 + $0x108] sm:$0xff]
      %v311 = vld [vmem:[%s259 + $0x110] sm:$0xff]
      %v312 = vld [vmem:[%s259 + $0x120] sm:$0xff]
      %v313 = vld [vmem:[%s259 + $0x128] sm:$0xff]
      %v314 = vld [vmem:[%s259 + $0x138] sm:$0xff]
      %v315 = vld [vmem:[%s259 + $0x140] sm:$0xff]
      %v316 = vld [vmem:[%s259 + $0x150] sm:$0xff]
      %v317 = vld [vmem:[%s259 + $0x158] sm:$0xff]
      %v318 = vld [vmem:[%s259 + $0x168] sm:$0xff]
      %v319 = vld [vmem:[%s259 + $0x170] sm:$0xff]
      %v320 = vld [vmem:[%s264] sm:$0xf]
      %v321 = vld [vmem:[%s259 + $0x1] sm:$0xff]
      %v322 = vld [vmem:[%s259 + $0x9] sm:$0xff]
      %v323 = vld [vmem:[%s259 + $0x19] sm:$0xff]
      %v324 = vld [vmem:[%s259 + $0x21] sm:$0xff]
      %v325 = vld [vmem:[%s259 + $0x31] sm:$0xff]
      %v326 = vld [vmem:[%s259 + $0x39] sm:$0xff]
      %v327 = vld [vmem:[%s259 + $0x49] sm:$0xff]
      %v328 = vld [vmem:[%s259 + $0x51] sm:$0xff]
      %v329 = vld [vmem:[%s259 + $0x61] sm:$0xff]
      %v330 = vld [vmem:[%s259 + $0x69] sm:$0xff]
      %v331 = vld [vmem:[%s259 + $0x79] sm:$0xff]
      %v332 = vld [vmem:[%s259 + $0x81] sm:$0xff]
      %v333 = vld [vmem:[%s259 + $0x91] sm:$0xff]
      %v334 = vld [vmem:[%s259 + $0x99] sm:$0xff]
      %v335 = vld [vmem:[%s259 + $0xa9] sm:$0xff]
      %v336 = vld [vmem:[%s259 + $0xb1] sm:$0xff]
      %v337 = vld [vmem:[%s259 + $0xc1] sm:$0xff]
      %v338 = vld [vmem:[%s259 + $0xc9] sm:$0xff]
      %v339 = vld [vmem:[%s259 + $0xd9] sm:$0xff]
      %v340 = vld [vmem:[%s259 + $0xe1] sm:$0xff]
      %v341 = vld [vmem:[%s259 + $0xf1] sm:$0xff]
      %v342 = vld [vmem:[%s259 + $0xf9] sm:$0xff]
      %v343 = vld [vmem:[%s259 + $0x109] sm:$0xff]
      %v344 = vld [vmem:[%s259 + $0x111] sm:$0xff]
      %v345 = vld [vmem:[%s259 + $0x121] sm:$0xff]
      %v346 = vld [vmem:[%s259 + $0x129] sm:$0xff]
      %v347 = vld [vmem:[%s259 + $0x139] sm:$0xff]
      %v348 = vld [vmem:[%s259 + $0x141] sm:$0xff]
      %v349 = vld [vmem:[%s259 + $0x151] sm:$0xff]
      %v350 = vld [vmem:[%s259 + $0x159] sm:$0xff]
      %v351 = vld [vmem:[%s259 + $0x169] sm:$0xff]
      %v352 = vld [vmem:[%s259 + $0x171] sm:$0xff]
      %s353 = scalar_lea.vmem %s264, 4
      %v354 = vld [vmem:[%s353] sm:$0xf]
      %vm355 = vcmask 31744
      %v357 = vsel %vm355, %v321, 0
      %v360 = vsel %vm355, %v322, 0
      %v363 = vsel %vm355, %v323, 0
      %v366 = vsel %vm355, %v324, 0
      %v369 = vsel %vm355, %v325, 0
      %v372 = vsel %vm355, %v326, 0
      %v375 = vsel %vm355, %v327, 0
      %v378 = vsel %vm355, %v328, 0
      %v381 = vsel %vm355, %v329, 0
      %v384 = vsel %vm355, %v330, 0
      %v387 = vsel %vm355, %v331, 0
      %v390 = vsel %vm355, %v332, 0
      %v393 = vsel %vm355, %v333, 0
      %v396 = vsel %vm355, %v334, 0
      %v399 = vsel %vm355, %v335, 0
      %v402 = vsel %vm355, %v336, 0
      %v405 = vsel %vm355, %v337, 0
      %v408 = vsel %vm355, %v338, 0
      %v411 = vsel %vm355, %v339, 0
      %v414 = vsel %vm355, %v340, 0
      %v417 = vsel %vm355, %v341, 0
      %v420 = vsel %vm355, %v342, 0
      %v423 = vsel %vm355, %v343, 0
      %v426 = vsel %vm355, %v344, 0
      %v429 = vsel %vm355, %v345, 0
      %v432 = vsel %vm355, %v346, 0
      %v435 = vsel %vm355, %v347, 0
      %v438 = vsel %vm355, %v348, 0
      %v441 = vsel %vm355, %v349, 0
      %v444 = vsel %vm355, %v350, 0
      %v447 = vsel %vm355, %v351, 0
      %v450 = vsel %vm355, %v352, 0
      %vm452 = vcmask 1043456
      %v454 = vsel %vm452, %v354, 0
      %456 = vmatprep.subr.mxu0 0.0
      %457 = vmatpush1.msra.mxu0 %v454
      %458 = vmatprep.subr.mxu0 0.0
      %459 = vmatpush1.msra.mxu0 0.0
      %460 = vmatprep.subr.mxu0 0.0
      %461 = vmatpush1.msra.mxu0 0.0
      %462 = vmatprep.subr.mxu0 0.0
      %463 = vmatpush1.msra.mxu0 0.0
      %464 = vmatprep.subr.mxu0 0.0
      %465 = vmatpush1.msra.mxu0 0.0
      %466 = vmatprep.subr.mxu0 0.0
      %467 = vmatpush1.msra.mxu0 0.0
      %468 = vmatprep.subr.mxu0 0.0
      %469 = vmatpush1.msra.mxu0 0.0
      %470 = vmatprep.subr.mxu0 0.0
      %471 = vmatpush1.msra.mxu0 0.0
      %472 = vmatprep.subr.mxu0 0.0
      %473 = vmatpush1.msra.mxu0 0.0
      %474 = vmatprep.subr.mxu0 0.0
      %475 = vmatpush1.msra.mxu0 0.0
      %476 = vmatprep.subr.mxu0 0.0
      %477 = vmatpush1.msra.mxu0 0.0
      %478 = vmatprep.subr.mxu0 0.0
      %479 = vmatpush1.msra.mxu0 0.0
      %480 = vmatprep.subr.mxu0 0.0
      %481 = vmatpush1.msra.mxu0 0.0
      %482 = vmatprep.subr.mxu0 0.0
      %483 = vmatpush1.msra.mxu0 0.0
      %484 = vmatprep.subr.mxu0 0.0
      %485 = vmatpush1.msra.mxu0 0.0
      %486 = vmatprep.subr.mxu0 0.0
      %487 = vmatpush1.msra.mxu0 0.0
      %488 = vmatprep.subr.mxu0 0.0
      %489 = vmatpush1.msra.mxu0 0.0
      %490 = vmatprep.subr.mxu0 0.0
      %491 = vmatpush1.msra.mxu0 0.0
      %492 = vmatprep.subr.mxu0 0.0
      %493 = vmatpush1.msra.mxu0 0.0
      %494 = vmatprep.subr.mxu0 0.0
      %495 = vmatpush1.msra.mxu0 0.0
      %496 = vmatprep.subr.mxu0 0.0
      %497 = vmatpush1.msra.mxu0 0.0
      %498 = vmatprep.subr.mxu0 0.0
      %499 = vmatpush1.msra.mxu0 0.0
      %500 = vmatprep.subr.mxu0 0.0
      %501 = vmatpush1.msra.mxu0 0.0
      %502 = vmatprep.subr.mxu0 0.0
      %503 = vmatpush1.msra.mxu0 0.0
      %504 = vmatprep.subr.mxu0 0.0
      %505 = vmatpush1.msra.mxu0 0.0
      %506 = vmatprep.subr.mxu0 0.0
      %507 = vmatpush1.msra.mxu0 0.0
      %508 = vmatprep.subr.mxu0 0.0
      %509 = vmatpush1.msra.mxu0 0.0
      %510 = vmatprep.subr.mxu0 0.0
      %511 = vmatpush1.msra.mxu0 0.0
      %512 = vmatprep.subr.mxu0 0.0
      %513 = vmatpush1.msra.mxu0 0.0
      %514 = vmatprep.subr.mxu0 0.0
      %515 = vmatpush1.msra.mxu0 0.0
      %516 = vmatprep.subr.mxu0 0.0
      %517 = vmatpush1.msra.mxu0 0.0
      %518 = vmatprep.subr.mxu0 0.0
      %519 = vmatpush1.msra.mxu0 0.0
      %520 = vmatprep.mubr.f32.mxu0 0.0
      %521 = vmatmul.mubr.f32.gmra.mrb[0].mxu0 %v357
      %v522 = vpop.f32.mrb[0].mxu0
      %v523 = vadd.f32 0.0, %v522
      %v524 = vpop.f32.mrb[0].mxu0
      %525 = vmatprep.mubr.f32.mxu0 0.0
      %526 = vmatmul.mubr.f32.gmra.mrb[0].mxu0 %v360
      %v527 = vpop.f32.mrb[0].mxu0
      %v528 = vadd.f32 0.0, %v527
      %v529 = vpop.f32.mrb[0].mxu0
      %530 = vmatprep.mubr.f32.mxu0 0.0
      %531 = vmatmul.mubr.f32.gmra.mrb[0].mxu0 %v363
      %v532 = vpop.f32.mrb[0].mxu0
      %v533 = vadd.f32 0.0, %v532
      %v534 = vpop.f32.mrb[0].mxu0
      %535 = vmatprep.mubr.f32.mxu0 0.0
      %536 = vmatmul.mubr.f32.gmra.mrb[0].mxu0 %v366
      %v537 = vpop.f32.mrb[0].mxu0
      %v538 = vadd.f32 0.0, %v537
      %v539 = vpop.f32.mrb[0].mxu0
      %540 = vmatprep.mubr.f32.mxu0 0.0
      %541 = vmatmul.mubr.f32.gmra.mrb[0].mxu0 %v369
      %v542 = vpop.f32.mrb[0].mxu0
      %v543 = vadd.f32 0.0, %v542
      %v544 = vpop.f32.mrb[0].mxu0
      %545 = vmatprep.mubr.f32.mxu0 0.0
      %546 = vmatmul.mubr.f32.gmra.mrb[0].mxu0 %v372
      %v547 = vpop.f32.mrb[0].mxu0
      %v548 = vadd.f32 0.0, %v547
      %v549 = vpop.f32.mrb[0].mxu0
      %550 = vmatprep.mubr.f32.mxu0 0.0
      %551 = vmatmul.mubr.f32.gmra.mrb[0].mxu0 %v375
      %v552 = vpop.f32.mrb[0].mxu0
      %v553 = vadd.f32 0.0, %v552
      %v554 = vpop.f32.mrb[0].mxu0
      %555 = vmatprep.mubr.f32.mxu0 0.0
      %556 = vmatmul.mubr.f32.gmra.mrb[0].mxu0 %v378
      %v557 = vpop.f32.mrb[0].mxu0
      %v558 = vadd.f32 0.0, %v557
      %v559 = vpop.f32.mrb[0].mxu0
      %560 = vmatprep.mubr.f32.mxu0 0.0
      %561 = vmatmul.mubr.f32.gmra.mrb[0].mxu0 %v381
      %v562 = vpop.f32.mrb[0].mxu0
      %v563 = vadd.f32 0.0, %v562
      %v564 = vpop.f32.mrb[0].mxu0
      %565 = vmatprep.mubr.f32.mxu0 0.0
      %566 = vmatmul.mubr.f32.gmra.mrb[0].mxu0 %v384
      %v567 = vpop.f32.mrb[0].mxu0
      %v568 = vadd.f32 0.0, %v567
      %v569 = vpop.f32.mrb[0].mxu0
      %570 = vmatprep.mubr.f32.mxu0 0.0
      %571 = vmatmul.mubr.f32.gmra.mrb[0].mxu0 %v387
      %v572 = vpop.f32.mrb[0].mxu0
      %v573 = vadd.f32 0.0, %v572
      %v574 = vpop.f32.mrb[0].mxu0
      %575 = vmatprep.mubr.f32.mxu0 0.0
      %576 = vmatmul.mubr.f32.gmra.mrb[0].mxu0 %v390
      %v577 = vpop.f32.mrb[0].mxu0
      %v578 = vadd.f32 0.0, %v577
      %v579 = vpop.f32.mrb[0].mxu0
      %580 = vmatprep.mubr.f32.mxu0 0.0
      %581 = vmatmul.mubr.f32.gmra.mrb[0].mxu0 %v393
      %v582 = vpop.f32.mrb[0].mxu0
      %v583 = vadd.f32 0.0, %v582
      %v584 = vpop.f32.mrb[0].mxu0
      %585 = vmatprep.mubr.f32.mxu0 0.0
      %586 = vmatmul.mubr.f32.gmra.mrb[0].mxu0 %v396
      %v587 = vpop.f32.mrb[0].mxu0
      %v588 = vadd.f32 0.0, %v587
      %v589 = vpop.f32.mrb[0].mxu0
      %590 = vmatprep.mubr.f32.mxu0 0.0
      %591 = vmatmul.mubr.f32.gmra.mrb[0].mxu0 %v399
      %v592 = vpop.f32.mrb[0].mxu0
      %v593 = vadd.f32 0.0, %v592
      %v594 = vpop.f32.mrb[0].mxu0
      %595 = vmatprep.mubr.f32.mxu0 0.0
      %596 = vmatmul.mubr.f32.gmra.mrb[0].mxu0 %v402
      %v597 = vpop.f32.mrb[0].mxu0
      %v598 = vadd.f32 0.0, %v597
      %v599 = vpop.f32.mrb[0].mxu0
      %600 = vmatprep.mubr.f32.mxu0 0.0
      %601 = vmatmul.mubr.f32.gmra.mrb[0].mxu0 %v405
      %v602 = vpop.f32.mrb[0].mxu0
      %v603 = vadd.f32 0.0, %v602
      %v604 = vpop.f32.mrb[0].mxu0
      %605 = vmatprep.mubr.f32.mxu0 0.0
      %606 = vmatmul.mubr.f32.gmra.mrb[0].mxu0 %v408
      %v607 = vpop.f32.mrb[0].mxu0
      %v608 = vadd.f32 0.0, %v607
      %v609 = vpop.f32.mrb[0].mxu0
      %610 = vmatprep.mubr.f32.mxu0 0.0
      %611 = vmatmul.mubr.f32.gmra.mrb[0].mxu0 %v411
      %v612 = vpop.f32.mrb[0].mxu0
      %v613 = vadd.f32 0.0, %v612
      %v614 = vpop.f32.mrb[0].mxu0
      %615 = vmatprep.mubr.f32.mxu0 0.0
      %616 = vmatmul.mubr.f32.gmra.mrb[0].mxu0 %v414
      %v617 = vpop.f32.mrb[0].mxu0
      %v618 = vadd.f32 0.0, %v617
      %v619 = vpop.f32.mrb[0].mxu0
      %620 = vmatprep.mubr.f32.mxu0 0.0
      %621 = vmatmul.mubr.f32.gmra.mrb[0].mxu0 %v417
      %v622 = vpop.f32.mrb[0].mxu0
      %v623 = vadd.f32 0.0, %v622
      %v624 = vpop.f32.mrb[0].mxu0
      %625 = vmatprep.mubr.f32.mxu0 0.0
      %626 = vmatmul.mubr.f32.gmra.mrb[0].mxu0 %v420
      %v627 = vpop.f32.mrb[0].mxu0
      %v628 = vadd.f32 0.0, %v627
      %v629 = vpop.f32.mrb[0].mxu0
      %630 = vmatprep.mubr.f32.mxu0 0.0
      %631 = vmatmul.mubr.f32.gmra.mrb[0].mxu0 %v423
      %v632 = vpop.f32.mrb[0].mxu0
      %v633 = vadd.f32 0.0, %v632
      %v634 = vpop.f32.mrb[0].mxu0
      %635 = vmatprep.mubr.f32.mxu0 0.0
      %636 = vmatmul.mubr.f32.gmra.mrb[0].mxu0 %v426
      %v637 = vpop.f32.mrb[0].mxu0
      %v638 = vadd.f32 0.0, %v637
      %v639 = vpop.f32.mrb[0].mxu0
      %640 = vmatprep.mubr.f32.mxu0 0.0
      %641 = vmatmul.mubr.f32.gmra.mrb[0].mxu0 %v429
      %v642 = vpop.f32.mrb[0].mxu0
      %v643 = vadd.f32 0.0, %v642
      %v644 = vpop.f32.mrb[0].mxu0
      %645 = vmatprep.mubr.f32.mxu0 0.0
      %646 = vmatmul.mubr.f32.gmra.mrb[0].mxu0 %v432
      %v647 = vpop.f32.mrb[0].mxu0
      %v648 = vadd.f32 0.0, %v647
      %v649 = vpop.f32.mrb[0].mxu0
      %650 = vmatprep.mubr.f32.mxu0 0.0
      %651 = vmatmul.mubr.f32.gmra.mrb[0].mxu0 %v435
      %v652 = vpop.f32.mrb[0].mxu0
      %v653 = vadd.f32 0.0, %v652
      %v654 = vpop.f32.mrb[0].mxu0
      %655 = vmatprep.mubr.f32.mxu0 0.0
      %656 = vmatmul.mubr.f32.gmra.mrb[0].mxu0 %v438
      %v657 = vpop.f32.mrb[0].mxu0
      %v658 = vadd.f32 0.0, %v657
      %v659 = vpop.f32.mrb[0].mxu0
      %660 = vmatprep.mubr.f32.mxu0 0.0
      %661 = vmatmul.mubr.f32.gmra.mrb[0].mxu0 %v441
      %v662 = vpop.f32.mrb[0].mxu0
      %v663 = vadd.f32 0.0, %v662
      %v664 = vpop.f32.mrb[0].mxu0
      %665 = vmatprep.mubr.f32.mxu0 0.0
      %666 = vmatmul.mubr.f32.gmra.mrb[0].mxu0 %v444
      %v667 = vpop.f32.mrb[0].mxu0
      %v668 = vadd.f32 0.0, %v667
      %v669 = vpop.f32.mrb[0].mxu0
      %670 = vmatprep.mubr.f32.mxu0 0.0
      %671 = vmatmul.mubr.f32.gmra.mrb[0].mxu0 %v447
      %v672 = vpop.f32.mrb[0].mxu0
      %v673 = vadd.f32 0.0, %v672
      %v674 = vpop.f32.mrb[0].mxu0
      %675 = vmatprep.mubr.f32.mxu0 0.0
      %676 = vmatmul.mubr.f32.gmra.mrb[0].mxu0 %v450
      %v677 = vpop.f32.mrb[0].mxu0
      %v678 = vadd.f32 0.0, %v677
      %v679 = vpop.f32.mrb[0].mxu0
      %680 = vdwg.mxu0
      %v682 = vsel %vm355, %v288, 0
      %v685 = vsel %vm355, %v289, 0
      %v688 = vsel %vm355, %v290, 0
      %v691 = vsel %vm355, %v291, 0
      %v694 = vsel %vm355, %v292, 0
      %v697 = vsel %vm355, %v293, 0
      %v700 = vsel %vm355, %v294, 0
      %v703 = vsel %vm355, %v295, 0
      %v706 = vsel %vm355, %v296, 0
      %v709 = vsel %vm355, %v297, 0
      %v712 = vsel %vm355, %v298, 0
      %v715 = vsel %vm355, %v299, 0
      %v718 = vsel %vm355, %v300, 0
      %v721 = vsel %vm355, %v301, 0
      %v724 = vsel %vm355, %v302, 0
      %v727 = vsel %vm355, %v303, 0
      %v730 = vsel %vm355, %v304, 0
      %v733 = vsel %vm355, %v305, 0
      %v736 = vsel %vm355, %v306, 0
      %v739 = vsel %vm355, %v307, 0
      %v742 = vsel %vm355, %v308, 0
      %v745 = vsel %vm355, %v309, 0
      %v748 = vsel %vm355, %v310, 0
      %v751 = vsel %vm355, %v311, 0
      %v754 = vsel %vm355, %v312, 0
      %v757 = vsel %vm355, %v313, 0
      %v760 = vsel %vm355, %v314, 0
      %v763 = vsel %vm355, %v315, 0
      %v766 = vsel %vm355, %v316, 0
      %v769 = vsel %vm355, %v317, 0
      %v772 = vsel %vm355, %v318, 0
      %v775 = vsel %vm355, %v319, 0
      %v778 = vsel %vm452, %v320, 0
      %780 = vmatprep.subr.mxu0 0.0
      %781 = vmatpush1.msra.mxu0 %v778
      %782 = vmatprep.subr.mxu0 0.0
      %783 = vmatpush1.msra.mxu0 0.0
      %784 = vmatprep.subr.mxu0 0.0
      %785 = vmatpush1.msra.mxu0 0.0
      %786 = vmatprep.subr.mxu0 0.0
      %787 = vmatpush1.msra.mxu0 0.0
      %788 = vmatprep.subr.mxu0 0.0
      %789 = vmatpush1.msra.mxu0 0.0
      %790 = vmatprep.subr.mxu0 0.0
      %791 = vmatpush1.msra.mxu0 0.0
      %792 = vmatprep.subr.mxu0 0.0
      %793 = vmatpush1.msra.mxu0 0.0
      %794 = vmatprep.subr.mxu0 0.0
      %795 = vmatpush1.msra.mxu0 0.0
      %796 = vmatprep.subr.mxu0 0.0
      %797 = vmatpush1.msra.mxu0 0.0
      %798 = vmatprep.subr.mxu0 0.0
      %799 = vmatpush1.msra.mxu0 0.0
      %800 = vmatprep.subr.mxu0 0.0
      %801 = vmatpush1.msra.mxu0 0.0
      %802 = vmatprep.subr.mxu0 0.0
      %803 = vmatpush1.msra.mxu0 0.0
      %804 = vmatprep.subr.mxu0 0.0
      %805 = vmatpush1.msra.mxu0 0.0
      %806 = vmatprep.subr.mxu0 0.0
      %807 = vmatpush1.msra.mxu0 0.0
      %808 = vmatprep.subr.mxu0 0.0
      %809 = vmatpush1.msra.mxu0 0.0
      %810 = vmatprep.subr.mxu0 0.0
      %811 = vmatpush1.msra.mxu0 0.0
      %812 = vmatprep.subr.mxu0 0.0
      %813 = vmatpush1.msra.mxu0 0.0
      %814 = vmatprep.subr.mxu0 0.0
      %815 = vmatpush1.msra.mxu0 0.0
      %816 = vmatprep.subr.mxu0 0.0
      %817 = vmatpush1.msra.mxu0 0.0
      %818 = vmatprep.subr.mxu0 0.0
      %819 = vmatpush1.msra.mxu0 0.0
      %820 = vmatprep.subr.mxu0 0.0
      %821 = vmatpush1.msra.mxu0 0.0
      %822 = vmatprep.subr.mxu0 0.0
      %823 = vmatpush1.msra.mxu0 0.0
      %824 = vmatprep.subr.mxu0 0.0
      %825 = vmatpush1.msra.mxu0 0.0
      %826 = vmatprep.subr.mxu0 0.0
      %827 = vmatpush1.msra.mxu0 0.0
      %828 = vmatprep.subr.mxu0 0.0
      %829 = vmatpush1.msra.mxu0 0.0
      %830 = vmatprep.subr.mxu0 0.0
      %831 = vmatpush1.msra.mxu0 0.0
      %832 = vmatprep.subr.mxu0 0.0
      %833 = vmatpush1.msra.mxu0 0.0
      %834 = vmatprep.subr.mxu0 0.0
      %835 = vmatpush1.msra.mxu0 0.0
      %836 = vmatprep.subr.mxu0 0.0
      %837 = vmatpush1.msra.mxu0 0.0
      %838 = vmatprep.subr.mxu0 0.0
      %839 = vmatpush1.msra.mxu0 0.0
      %840 = vmatprep.subr.mxu0 0.0
      %841 = vmatpush1.msra.mxu0 0.0
      %842 = vmatprep.subr.mxu0 0.0
      %843 = vmatpush1.msra.mxu0 0.0
      %844 = vmatprep.mubr.f32.mxu0 0.0
      %845 = vmatmul.mubr.f32.gmra.mrb[0].mxu0 %v682
      %v846 = vpop.f32.mrb[0].mxu0
      %v847 = vadd.f32 %v523, %v846
      %v848 = vpop.f32.mrb[0].mxu0
      %849 = vmatprep.mubr.f32.mxu0 0.0
      %850 = vmatmul.mubr.f32.gmra.mrb[0].mxu0 %v685
      %v851 = vpop.f32.mrb[0].mxu0
      %v852 = vadd.f32 %v528, %v851
      %v853 = vpop.f32.mrb[0].mxu0
      %854 = vmatprep.mubr.f32.mxu0 0.0
      %855 = vmatmul.mubr.f32.gmra.mrb[0].mxu0 %v688
      %v856 = vpop.f32.mrb[0].mxu0
      %v857 = vadd.f32 %v533, %v856
      %v858 = vpop.f32.mrb[0].mxu0
      %859 = vmatprep.mubr.f32.mxu0 0.0
      %860 = vmatmul.mubr.f32.gmra.mrb[0].mxu0 %v691
      %v861 = vpop.f32.mrb[0].mxu0
      %v862 = vadd.f32 %v538, %v861
      %v863 = vpop.f32.mrb[0].mxu0
      %864 = vmatprep.mubr.f32.mxu0 0.0
      %865 = vmatmul.mubr.f32.gmra.mrb[0].mxu0 %v694
      %v866 = vpop.f32.mrb[0].mxu0
      %v867 = vadd.f32 %v543, %v866
      %v868 = vpop.f32.mrb[0].mxu0
      %869 = vmatprep.mubr.f32.mxu0 0.0
      %870 = vmatmul.mubr.f32.gmra.mrb[0].mxu0 %v697
      %v871 = vpop.f32.mrb[0].mxu0
      %v872 = vadd.f32 %v548, %v871
      %v873 = vpop.f32.mrb[0].mxu0
      %874 = vmatprep.mubr.f32.mxu0 0.0
      %875 = vmatmul.mubr.f32.gmra.mrb[0].mxu0 %v700
      %v876 = vpop.f32.mrb[0].mxu0
      %v877 = vadd.f32 %v553, %v876
      %v878 = vpop.f32.mrb[0].mxu0
      %879 = vmatprep.mubr.f32.mxu0 0.0
      %880 = vmatmul.mubr.f32.gmra.mrb[0].mxu0 %v703
      %v881 = vpop.f32.mrb[0].mxu0
      %v882 = vadd.f32 %v558, %v881
      %v883 = vpop.f32.mrb[0].mxu0
      %884 = vmatprep.mubr.f32.mxu0 0.0
      %885 = vmatmul.mubr.f32.gmra.mrb[0].mxu0 %v706
      %v886 = vpop.f32.mrb[0].mxu0
      %v887 = vadd.f32 %v563, %v886
      %v888 = vpop.f32.mrb[0].mxu0
      %889 = vmatprep.mubr.f32.mxu0 0.0
      %890 = vmatmul.mubr.f32.gmra.mrb[0].mxu0 %v709
      %v891 = vpop.f32.mrb[0].mxu0
      %v892 = vadd.f32 %v568, %v891
      %v893 = vpop.f32.mrb[0].mxu0
      %894 = vmatprep.mubr.f32.mxu0 0.0
      %895 = vmatmul.mubr.f32.gmra.mrb[0].mxu0 %v712
      %v896 = vpop.f32.mrb[0].mxu0
      %v897 = vadd.f32 %v573, %v896
      %v898 = vpop.f32.mrb[0].mxu0
      %899 = vmatprep.mubr.f32.mxu0 0.0
      %900 = vmatmul.mubr.f32.gmra.mrb[0].mxu0 %v715
      %v901 = vpop.f32.mrb[0].mxu0
      %v902 = vadd.f32 %v578, %v901
      %v903 = vpop.f32.mrb[0].mxu0
      %904 = vmatprep.mubr.f32.mxu0 0.0
      %905 = vmatmul.mubr.f32.gmra.mrb[0].mxu0 %v718
      %v906 = vpop.f32.mrb[0].mxu0
      %v907 = vadd.f32 %v583, %v906
      %v908 = vpop.f32.mrb[0].mxu0
      %909 = vmatprep.mubr.f32.mxu0 0.0
      %910 = vmatmul.mubr.f32.gmra.mrb[0].mxu0 %v721
      %v911 = vpop.f32.mrb[0].mxu0
      %v912 = vadd.f32 %v588, %v911
      %v913 = vpop.f32.mrb[0].mxu0
      %914 = vmatprep.mubr.f32.mxu0 0.0
      %915 = vmatmul.mubr.f32.gmra.mrb[0].mxu0 %v724
      %v916 = vpop.f32.mrb[0].mxu0
      %v917 = vadd.f32 %v593, %v916
      %v918 = vpop.f32.mrb[0].mxu0
      %919 = vmatprep.mubr.f32.mxu0 0.0
      %920 = vmatmul.mubr.f32.gmra.mrb[0].mxu0 %v727
      %v921 = vpop.f32.mrb[0].mxu0
      %v922 = vadd.f32 %v598, %v921
      %v923 = vpop.f32.mrb[0].mxu0
      %924 = vmatprep.mubr.f32.mxu0 0.0
      %925 = vmatmul.mubr.f32.gmra.mrb[0].mxu0 %v730
      %v926 = vpop.f32.mrb[0].mxu0
      %v927 = vadd.f32 %v603, %v926
      %v928 = vpop.f32.mrb[0].mxu0
      %929 = vmatprep.mubr.f32.mxu0 0.0
      %930 = vmatmul.mubr.f32.gmra.mrb[0].mxu0 %v733
      %v931 = vpop.f32.mrb[0].mxu0
      %v932 = vadd.f32 %v608, %v931
      %v933 = vpop.f32.mrb[0].mxu0
      %934 = vmatprep.mubr.f32.mxu0 0.0
      %935 = vmatmul.mubr.f32.gmra.mrb[0].mxu0 %v736
      %v936 = vpop.f32.mrb[0].mxu0
      %v937 = vadd.f32 %v613, %v936
      %v938 = vpop.f32.mrb[0].mxu0
      %939 = vmatprep.mubr.f32.mxu0 0.0
      %940 = vmatmul.mubr.f32.gmra.mrb[0].mxu0 %v739
      %v941 = vpop.f32.mrb[0].mxu0
      %v942 = vadd.f32 %v618, %v941
      %v943 = vpop.f32.mrb[0].mxu0
      %944 = vmatprep.mubr.f32.mxu0 0.0
      %945 = vmatmul.mubr.f32.gmra.mrb[0].mxu0 %v742
      %v946 = vpop.f32.mrb[0].mxu0
      %v947 = vadd.f32 %v623, %v946
      %v948 = vpop.f32.mrb[0].mxu0
      %949 = vmatprep.mubr.f32.mxu0 0.0
      %950 = vmatmul.mubr.f32.gmra.mrb[0].mxu0 %v745
      %v951 = vpop.f32.mrb[0].mxu0
      %v952 = vadd.f32 %v628, %v951
      %v953 = vpop.f32.mrb[0].mxu0
      %954 = vmatprep.mubr.f32.mxu0 0.0
      %955 = vmatmul.mubr.f32.gmra.mrb[0].mxu0 %v748
      %v956 = vpop.f32.mrb[0].mxu0
      %v957 = vadd.f32 %v633, %v956
      %v958 = vpop.f32.mrb[0].mxu0
      %959 = vmatprep.mubr.f32.mxu0 0.0
      %960 = vmatmul.mubr.f32.gmra.mrb[0].mxu0 %v751
      %v961 = vpop.f32.mrb[0].mxu0
      %v962 = vadd.f32 %v638, %v961
      %v963 = vpop.f32.mrb[0].mxu0
      %964 = vmatprep.mubr.f32.mxu0 0.0
      %965 = vmatmul.mubr.f32.gmra.mrb[0].mxu0 %v754
      %v966 = vpop.f32.mrb[0].mxu0
      %v967 = vadd.f32 %v643, %v966
      %v968 = vpop.f32.mrb[0].mxu0
      %969 = vmatprep.mubr.f32.mxu0 0.0
      %970 = vmatmul.mubr.f32.gmra.mrb[0].mxu0 %v757
      %v971 = vpop.f32.mrb[0].mxu0
      %v972 = vadd.f32 %v648, %v971
      %v973 = vpop.f32.mrb[0].mxu0
      %974 = vmatprep.mubr.f32.mxu0 0.0
      %975 = vmatmul.mubr.f32.gmra.mrb[0].mxu0 %v760
      %v976 = vpop.f32.mrb[0].mxu0
      %v977 = vadd.f32 %v653, %v976
      %v978 = vpop.f32.mrb[0].mxu0
      %979 = vmatprep.mubr.f32.mxu0 0.0
      %980 = vmatmul.mubr.f32.gmra.mrb[0].mxu0 %v763
      %v981 = vpop.f32.mrb[0].mxu0
      %v982 = vadd.f32 %v658, %v981
      %v983 = vpop.f32.mrb[0].mxu0
      %984 = vmatprep.mubr.f32.mxu0 0.0
      %985 = vmatmul.mubr.f32.gmra.mrb[0].mxu0 %v766
      %v986 = vpop.f32.mrb[0].mxu0
      %v987 = vadd.f32 %v663, %v986
      %v988 = vpop.f32.mrb[0].mxu0
      %989 = vmatprep.mubr.f32.mxu0 0.0
      %990 = vmatmul.mubr.f32.gmra.mrb[0].mxu0 %v769
      %v991 = vpop.f32.mrb[0].mxu0
      %v992 = vadd.f32 %v668, %v991
      %v993 = vpop.f32.mrb[0].mxu0
      %994 = vmatprep.mubr.f32.mxu0 0.0
      %995 = vmatmul.mubr.f32.gmra.mrb[0].mxu0 %v772
      %v996 = vpop.f32.mrb[0].mxu0
      %v997 = vadd.f32 %v673, %v996
      %v998 = vpop.f32.mrb[0].mxu0
      %999 = vmatprep.mubr.f32.mxu0 0.0
      %1000 = vmatmul.mubr.f32.gmra.mrb[0].mxu0 %v775
      %v1001 = vpop.f32.mrb[0].mxu0
      %v1002 = vadd.f32 %v678, %v1001
      %v1003 = vpop.f32.mrb[0].mxu0
      %1004 = vdwg.mxu0
      %v1005 = vld [vmem:[%s259 + $0x2] sm:$0xff]
      %v1006 = vld [vmem:[%s259 + $0xa] sm:$0xff]
      %v1007 = vld [vmem:[%s259 + $0x1a] sm:$0xff]
      %v1008 = vld [vmem:[%s259 + $0x22] sm:$0xff]
      %v1009 = vld [vmem:[%s259 + $0x32] sm:$0xff]
      %v1010 = vld [vmem:[%s259 + $0x3a] sm:$0xff]
      %v1011 = vld [vmem:[%s259 + $0x4a] sm:$0xff]
      %v1012 = vld [vmem:[%s259 + $0x52] sm:$0xff]
      %v1013 = vld [vmem:[%s259 + $0x62] sm:$0xff]
      %v1014 = vld [vmem:[%s259 + $0x6a] sm:$0xff]
      %v1015 = vld [vmem:[%s259 + $0x7a] sm:$0xff]
      %v1016 = vld [vmem:[%s259 + $0x82] sm:$0xff]
      %v1017 = vld [vmem:[%s259 + $0x92] sm:$0xff]
      %v1018 = vld [vmem:[%s259 + $0x9a] sm:$0xff]
      %v1019 = vld [vmem:[%s259 + $0xaa] sm:$0xff]
      %v1020 = vld [vmem:[%s259 + $0xb2] sm:$0xff]
      %v1021 = vld [vmem:[%s259 + $0xc2] sm:$0xff]
      %v1022 = vld [vmem:[%s259 + $0xca] sm:$0xff]
      %v1023 = vld [vmem:[%s259 + $0xda] sm:$0xff]
      %v1024 = vld [vmem:[%s259 + $0xe2] sm:$0xff]
      %v1025 = vld [vmem:[%s259 + $0xf2] sm:$0xff]
      %v1026 = vld [vmem:[%s259 + $0xfa] sm:$0xff]
      %v1027 = vld [vmem:[%s259 + $0x10a] sm:$0xff]
      %v1028 = vld [vmem:[%s259 + $0x112] sm:$0xff]
      %v1029 = vld [vmem:[%s259 + $0x122] sm:$0xff]
      %v1030 = vld [vmem:[%s259 + $0x12a] sm:$0xff]
      %v1031 = vld [vmem:[%s259 + $0x13a] sm:$0xff]
      %v1032 = vld [vmem:[%s259 + $0x142] sm:$0xff]
      %v1033 = vld [vmem:[%s259 + $0x152] sm:$0xff]
      %v1034 = vld [vmem:[%s259 + $0x15a] sm:$0xff]
      %v1035 = vld [vmem:[%s259 + $0x16a] sm:$0xff]
      %v1036 = vld [vmem:[%s259 + $0x172] sm:$0xff]
      %s1037 = scalar_lea.vmem %s264, 8
      %v1038 = vld [vmem:[%s1037] sm:$0xf]
      %v1040 = vsel %vm355, %v1005, 0
      %v1043 = vsel %vm355, %v1006, 0
      %v1046 = vsel %vm355, %v1007, 0
      %v1049 = vsel %vm355, %v1008, 0
      %v1052 = vsel %vm355, %v1009, 0
      %v1055 = vsel %vm355, %v1010, 0
      %v1058 = vsel %vm355, %v1011, 0
      %v1061 = vsel %vm355, %v1012, 0
      %v1064 = vsel %vm355, %v1013, 0
      %v1067 = vsel %vm355, %v1014, 0
      %v1070 = vsel %vm355, %v1015, 0
      %v1073 = vsel %vm355, %v1016, 0
      %v1076 = vsel %vm355, %v1017, 0
      %v1079 = vsel %vm355, %v1018, 0
      %v1082 = vsel %vm355, %v1019, 0
      %v1085 = vsel %vm355, %v1020, 0
      %v1088 = vsel %vm355, %v1021, 0
      %v1091 = vsel %vm355, %v1022, 0
      %v1094 = vsel %vm355, %v1023, 0
      %v1097 = vsel %vm355, %v1024, 0
      %v1100 = vsel %vm355, %v1025, 0
      %v1103 = vsel %vm355, %v1026, 0
      %v1106 = vsel %vm355, %v1027, 0
      %v1109 = vsel %vm355, %v1028, 0
      %v1112 = vsel %vm355, %v1029, 0
      %v1115 = vsel %vm355, %v1030, 0
      %v1118 = vsel %vm355, %v1031, 0
      %v1121 = vsel %vm355, %v1032, 0
      %v1124 = vsel %vm355, %v1033, 0
      %v1127 = vsel %vm355, %v1034, 0
      %v1130 = vsel %vm355, %v1035, 0
      %v1133 = vsel %vm355, %v1036, 0
      %v1136 = vsel %vm452, %v1038, 0
      %1138 = vmatprep.subr.mxu0 0.0
      %1139 = vmatpush1.msra.mxu0 %v1136
      %1140 = vmatprep.subr.mxu0 0.0
      %1141 = vmatpush1.msra.mxu0 0.0
      %1142 = vmatprep.subr.mxu0 0.0
      %1143 = vmatpush1.msra.mxu0 0.0
      %1144 = vmatprep.subr.mxu0 0.0
      %1145 = vmatpush1.msra.mxu0 0.0
      %1146 = vmatprep.subr.mxu0 0.0
      %1147 = vmatpush1.msra.mxu0 0.0
      %1148 = vmatprep.subr.mxu0 0.0
      %1149 = vmatpush1.msra.mxu0 0.0
      %1150 = vmatprep.subr.mxu0 0.0
      %1151 = vmatpush1.msra.mxu0 0.0
      %1152 = vmatprep.subr.mxu0 0.0
      %1153 = vmatpush1.msra.mxu0 0.0
      %1154 = vmatprep.subr.mxu0 0.0
      %1155 = vmatpush1.msra.mxu0 0.0
      %1156 = vmatprep.subr.mxu0 0.0
      %1157 = vmatpush1.msra.mxu0 0.0
      %1158 = vmatprep.subr.mxu0 0.0
      %1159 = vmatpush1.msra.mxu0 0.0
      %1160 = vmatprep.subr.mxu0 0.0
      %1161 = vmatpush1.msra.mxu0 0.0
      %1162 = vmatprep.subr.mxu0 0.0
      %1163 = vmatpush1.msra.mxu0 0.0
      %1164 = vmatprep.subr.mxu0 0.0
      %1165 = vmatpush1.msra.mxu0 0.0
      %1166 = vmatprep.subr.mxu0 0.0
      %1167 = vmatpush1.msra.mxu0 0.0
      %1168 = vmatprep.subr.mxu0 0.0
      %1169 = vmatpush1.msra.mxu0 0.0
      %1170 = vmatprep.subr.mxu0 0.0
      %1171 = vmatpush1.msra.mxu0 0.0
      %1172 = vmatprep.subr.mxu0 0.0
      %1173 = vmatpush1.msra.mxu0 0.0
      %1174 = vmatprep.subr.mxu0 0.0
      %1175 = vmatpush1.msra.mxu0 0.0
      %1176 = vmatprep.subr.mxu0 0.0
      %1177 = vmatpush1.msra.mxu0 0.0
      %1178 = vmatprep.subr.mxu0 0.0
      %1179 = vmatpush1.msra.mxu0 0.0
      %1180 = vmatprep.subr.mxu0 0.0
      %1181 = vmatpush1.msra.mxu0 0.0
      %1182 = vmatprep.subr.mxu0 0.0
      %1183 = vmatpush1.msra.mxu0 0.0
      %1184 = vmatprep.subr.mxu0 0.0
      %1185 = vmatpush1.msra.mxu0 0.0
      %1186 = vmatprep.subr.mxu0 0.0
      %1187 = vmatpush1.msra.mxu0 0.0
      %1188 = vmatprep.subr.mxu0 0.0
      %1189 = vmatpush1.msra.mxu0 0.0
      %1190 = vmatprep.subr.mxu0 0.0
      %1191 = vmatpush1.msra.mxu0 0.0
      %1192 = vmatprep.subr.mxu0 0.0
      %1193 = vmatpush1.msra.mxu0 0.0
      %1194 = vmatprep.subr.mxu0 0.0
      %1195 = vmatpush1.msra.mxu0 0.0
      %1196 = vmatprep.subr.mxu0 0.0
      %1197 = vmatpush1.msra.mxu0 0.0
      %1198 = vmatprep.subr.mxu0 0.0
      %1199 = vmatpush1.msra.mxu0 0.0
      %1200 = vmatprep.subr.mxu0 0.0
      %1201 = vmatpush1.msra.mxu0 0.0
      %1202 = vmatprep.mubr.f32.mxu0 0.0
      %1203 = vmatmul.mubr.f32.gmra.mrb[0].mxu0 %v1040
      %v1204 = vpop.f32.mrb[0].mxu0
      %v1205 = vadd.f32 0.0, %v1204
      %v1206 = vpop.f32.mrb[0].mxu0
      %1207 = vmatprep.mubr.f32.mxu0 0.0
      %1208 = vmatmul.mubr.f32.gmra.mrb[0].mxu0 %v1043
      %v1209 = vpop.f32.mrb[0].mxu0
      %v1210 = vadd.f32 0.0, %v1209
      %v1211 = vpop.f32.mrb[0].mxu0
      %1212 = vmatprep.mubr.f32.mxu0 0.0
      %1213 = vmatmul.mubr.f32.gmra.mrb[0].mxu0 %v1046
      %v1214 = vpop.f32.mrb[0].mxu0
      %v1215 = vadd.f32 0.0, %v1214
      %v1216 = vpop.f32.mrb[0].mxu0
      %1217 = vmatprep.mubr.f32.mxu0 0.0
      %1218 = vmatmul.mubr.f32.gmra.mrb[0].mxu0 %v1049
      %v1219 = vpop.f32.mrb[0].mxu0
      %v1220 = vadd.f32 0.0, %v1219
      %v1221 = vpop.f32.mrb[0].mxu0
      %1222 = vmatprep.mubr.f32.mxu0 0.0
      %1223 = vmatmul.mubr.f32.gmra.mrb[0].mxu0 %v1052
      %v1224 = vpop.f32.mrb[0].mxu0
      %v1225 = vadd.f32 0.0, %v1224
      %v1226 = vpop.f32.mrb[0].mxu0
      %1227 = vmatprep.mubr.f32.mxu0 0.0
      %1228 = vmatmul.mubr.f32.gmra.mrb[0].mxu0 %v1055
      %v1229 = vpop.f32.mrb[0].mxu0
      %v1230 = vadd.f32 0.0, %v1229
      %v1231 = vpop.f32.mrb[0].mxu0
      %1232 = vmatprep.mubr.f32.mxu0 0.0
      %1233 = vmatmul.mubr.f32.gmra.mrb[0].mxu0 %v1058
      %v1234 = vpop.f32.mrb[0].mxu0
      %v1235 = vadd.f32 0.0, %v1234
      %v1236 = vpop.f32.mrb[0].mxu0
      %1237 = vmatprep.mubr.f32.mxu0 0.0
      %1238 = vmatmul.mubr.f32.gmra.mrb[0].mxu0 %v1061
      %v1239 = vpop.f32.mrb[0].mxu0
      %v1240 = vadd.f32 0.0, %v1239
      %v1241 = vpop.f32.mrb[0].mxu0
      %1242 = vmatprep.mubr.f32.mxu0 0.0
      %1243 = vmatmul.mubr.f32.gmra.mrb[0].mxu0 %v1064
      %v1244 = vpop.f32.mrb[0].mxu0
      %v1245 = vadd.f32 0.0, %v1244
      %v1246 = vpop.f32.mrb[0].mxu0
      %1247 = vmatprep.mubr.f32.mxu0 0.0
      %1248 = vmatmul.mubr.f32.gmra.mrb[0].mxu0 %v1067
      %v1249 = vpop.f32.mrb[0].mxu0
      %v1250 = vadd.f32 0.0, %v1249
      %v1251 = vpop.f32.mrb[0].mxu0
      %1252 = vmatprep.mubr.f32.mxu0 0.0
      %1253 = vmatmul.mubr.f32.gmra.mrb[0].mxu0 %v1070
      %v1254 = vpop.f32.mrb[0].mxu0
      %v1255 = vadd.f32 0.0, %v1254
      %v1256 = vpop.f32.mrb[0].mxu0
      %1257 = vmatprep.mubr.f32.mxu0 0.0
      %1258 = vmatmul.mubr.f32.gmra.mrb[0].mxu0 %v1073
      %v1259 = vpop.f32.mrb[0].mxu0
      %v1260 = vadd.f32 0.0, %v1259
      %v1261 = vpop.f32.mrb[0].mxu0
      %1262 = vmatprep.mubr.f32.mxu0 0.0
      %1263 = vmatmul.mubr.f32.gmra.mrb[0].mxu0 %v1076
      %v1264 = vpop.f32.mrb[0].mxu0
      %v1265 = vadd.f32 0.0, %v1264
      %v1266 = vpop.f32.mrb[0].mxu0
      %1267 = vmatprep.mubr.f32.mxu0 0.0
      %1268 = vmatmul.mubr.f32.gmra.mrb[0].mxu0 %v1079
      %v1269 = vpop.f32.mrb[0].mxu0
      %v1270 = vadd.f32 0.0, %v1269
      %v1271 = vpop.f32.mrb[0].mxu0
      %1272 = vmatprep.mubr.f32.mxu0 0.0
      %1273 = vmatmul.mubr.f32.gmra.mrb[0].mxu0 %v1082
      %v1274 = vpop.f32.mrb[0].mxu0
      %v1275 = vadd.f32 0.0, %v1274
      %v1276 = vpop.f32.mrb[0].mxu0
      %1277 = vmatprep.mubr.f32.mxu0 0.0
      %1278 = vmatmul.mubr.f32.gmra.mrb[0].mxu0 %v1085
      %v1279 = vpop.f32.mrb[0].mxu0
      %v1280 = vadd.f32 0.0, %v1279
      %v1281 = vpop.f32.mrb[0].mxu0
      %1282 = vmatprep.mubr.f32.mxu0 0.0
      %1283 = vmatmul.mubr.f32.gmra.mrb[0].mxu0 %v1088
      %v1284 = vpop.f32.mrb[0].mxu0
      %v1285 = vadd.f32 0.0, %v1284
      %v1286 = vpop.f32.mrb[0].mxu0
      %1287 = vmatprep.mubr.f32.mxu0 0.0
      %1288 = vmatmul.mubr.f32.gmra.mrb[0].mxu0 %v1091
      %v1289 = vpop.f32.mrb[0].mxu0
      %v1290 = vadd.f32 0.0, %v1289
      %v1291 = vpop.f32.mrb[0].mxu0
      %1292 = vmatprep.mubr.f32.mxu0 0.0
      %1293 = vmatmul.mubr.f32.gmra.mrb[0].mxu0 %v1094
      %v1294 = vpop.f32.mrb[0].mxu0
      %v1295 = vadd.f32 0.0, %v1294
      %v1296 = vpop.f32.mrb[0].mxu0
      %1297 = vmatprep.mubr.f32.mxu0 0.0
      %1298 = vmatmul.mubr.f32.gmra.mrb[0].mxu0 %v1097
      %v1299 = vpop.f32.mrb[0].mxu0
      %v1300 = vadd.f32 0.0, %v1299
      %v1301 = vpop.f32.mrb[0].mxu0
      %1302 = vmatprep.mubr.f32.mxu0 0.0
      %1303 = vmatmul.mubr.f32.gmra.mrb[0].mxu0 %v1100
      %v1304 = vpop.f32.mrb[0].mxu0
      %v1305 = vadd.f32 0.0, %v1304
      %v1306 = vpop.f32.mrb[0].mxu0
      %1307 = vmatprep.mubr.f32.mxu0 0.0
      %1308 = vmatmul.mubr.f32.gmra.mrb[0].mxu0 %v1103
      %v1309 = vpop.f32.mrb[0].mxu0
      %v1310 = vadd.f32 0.0, %v1309
      %v1311 = vpop.f32.mrb[0].mxu0
      %1312 = vmatprep.mubr.f32.mxu0 0.0
      %1313 = vmatmul.mubr.f32.gmra.mrb[0].mxu0 %v1106
      %v1314 = vpop.f32.mrb[0].mxu0
      %v1315 = vadd.f32 0.0, %v1314
      %v1316 = vpop.f32.mrb[0].mxu0
      %1317 = vmatprep.mubr.f32.mxu0 0.0
      %1318 = vmatmul.mubr.f32.gmra.mrb[0].mxu0 %v1109
      %v1319 = vpop.f32.mrb[0].mxu0
      %v1320 = vadd.f32 0.0, %v1319
      %v1321 = vpop.f32.mrb[0].mxu0
      %1322 = vmatprep.mubr.f32.mxu0 0.0
      %1323 = vmatmul.mubr.f32.gmra.mrb[0].mxu0 %v1112
      %v1324 = vpop.f32.mrb[0].mxu0
      %v1325 = vadd.f32 0.0, %v1324
      %v1326 = vpop.f32.mrb[0].mxu0
      %1327 = vmatprep.mubr.f32.mxu0 0.0
      %1328 = vmatmul.mubr.f32.gmra.mrb[0].mxu0 %v1115
      %v1329 = vpop.f32.mrb[0].mxu0
      %v1330 = vadd.f32 0.0, %v1329
      %v1331 = vpop.f32.mrb[0].mxu0
      %1332 = vmatprep.mubr.f32.mxu0 0.0
      %1333 = vmatmul.mubr.f32.gmra.mrb[0].mxu0 %v1118
      %v1334 = vpop.f32.mrb[0].mxu0
      %v1335 = vadd.f32 0.0, %v1334
      %v1336 = vpop.f32.mrb[0].mxu0
      %1337 = vmatprep.mubr.f32.mxu0 0.0
      %1338 = vmatmul.mubr.f32.gmra.mrb[0].mxu0 %v1121
      %v1339 = vpop.f32.mrb[0].mxu0
      %v1340 = vadd.f32 0.0, %v1339
      %v1341 = vpop.f32.mrb[0].mxu0
      %1342 = vmatprep.mubr.f32.mxu0 0.0
      %1343 = vmatmul.mubr.f32.gmra.mrb[0].mxu0 %v1124
      %v1344 = vpop.f32.mrb[0].mxu0
      %v1345 = vadd.f32 0.0, %v1344
      %v1346 = vpop.f32.mrb[0].mxu0
      %1347 = vmatprep.mubr.f32.mxu0 0.0
      %1348 = vmatmul.mubr.f32.gmra.mrb[0].mxu0 %v1127
      %v1349 = vpop.f32.mrb[0].mxu0
      %v1350 = vadd.f32 0.0, %v1349
      %v1351 = vpop.f32.mrb[0].mxu0
      %1352 = vmatprep.mubr.f32.mxu0 0.0
      %1353 = vmatmul.mubr.f32.gmra.mrb[0].mxu0 %v1130
      %v1354 = vpop.f32.mrb[0].mxu0
      %v1355 = vadd.f32 0.0, %v1354
      %v1356 = vpop.f32.mrb[0].mxu0
      %1357 = vmatprep.mubr.f32.mxu0 0.0
      %1358 = vmatmul.mubr.f32.gmra.mrb[0].mxu0 %v1133
      %v1359 = vpop.f32.mrb[0].mxu0
      %v1360 = vadd.f32 0.0, %v1359
      %v1361 = vpop.f32.mrb[0].mxu0
      %1362 = vdwg.mxu0
      %v1363 = vadd.f32 %v847, %v1205
      %v1364 = vadd.f32 %v852, %v1210
      %v1365 = vadd.f32 %v857, %v1215
      %v1366 = vadd.f32 %v862, %v1220
      %v1367 = vadd.f32 %v867, %v1225
      %v1368 = vadd.f32 %v872, %v1230
      %v1369 = vadd.f32 %v877, %v1235
      %v1370 = vadd.f32 %v882, %v1240
      %v1371 = vadd.f32 %v887, %v1245
      %v1372 = vadd.f32 %v892, %v1250
      %v1373 = vadd.f32 %v897, %v1255
      %v1374 = vadd.f32 %v902, %v1260
      %v1375 = vadd.f32 %v907, %v1265
      %v1376 = vadd.f32 %v912, %v1270
      %v1377 = vadd.f32 %v917, %v1275
      %v1378 = vadd.f32 %v922, %v1280
      %v1379 = vadd.f32 %v927, %v1285
      %v1380 = vadd.f32 %v932, %v1290
      %v1381 = vadd.f32 %v937, %v1295
      %v1382 = vadd.f32 %v942, %v1300
      %v1383 = vadd.f32 %v947, %v1305
      %v1384 = vadd.f32 %v952, %v1310
      %v1385 = vadd.f32 %v957, %v1315
      %v1386 = vadd.f32 %v962, %v1320
      %v1387 = vadd.f32 %v967, %v1325
      %v1388 = vadd.f32 %v972, %v1330
      %v1389 = vadd.f32 %v977, %v1335
      %v1390 = vadd.f32 %v982, %v1340
      %v1391 = vadd.f32 %v987, %v1345
      %v1392 = vadd.f32 %v992, %v1350
      %v1393 = vadd.f32 %v997, %v1355
      %v1394 = vadd.f32 %v1002, %v1360
      %s1395 = scalar_lea.vmem %s259, 24
      %v1396 = vld [vmem:[%s1395] sm:$0xff]
      %v1397 = vld [vmem:[%s1395 + $0x8] sm:$0xff]
      %v1398 = vld [vmem:[%s1395 + $0x18] sm:$0xff]
      %v1399 = vld [vmem:[%s1395 + $0x20] sm:$0xff]
      %v1400 = vld [vmem:[%s1395 + $0x30] sm:$0xff]
      %v1401 = vld [vmem:[%s1395 + $0x38] sm:$0xff]
      %v1402 = vld [vmem:[%s1395 + $0x48] sm:$0xff]
      %v1403 = vld [vmem:[%s1395 + $0x50] sm:$0xff]
      %v1404 = vld [vmem:[%s1395 + $0x60] sm:$0xff]
      %v1405 = vld [vmem:[%s1395 + $0x68] sm:$0xff]
      %v1406 = vld [vmem:[%s1395 + $0x78] sm:$0xff]
      %v1407 = vld [vmem:[%s1395 + $0x80] sm:$0xff]
      %v1408 = vld [vmem:[%s1395 + $0x90] sm:$0xff]
      %v1409 = vld [vmem:[%s1395 + $0x98] sm:$0xff]
      %v1410 = vld [vmem:[%s1395 + $0xa8] sm:$0xff]
      %v1411 = vld [vmem:[%s1395 + $0xb0] sm:$0xff]
      %v1412 = vld [vmem:[%s1395 + $0xc0] sm:$0xff]
      %v1413 = vld [vmem:[%s1395 + $0xc8] sm:$0xff]
      %v1414 = vld [vmem:[%s1395 + $0xd8] sm:$0xff]
      %v1415 = vld [vmem:[%s1395 + $0xe0] sm:$0xff]
      %v1416 = vld [vmem:[%s1395 + $0xf0] sm:$0xff]
      %v1417 = vld [vmem:[%s1395 + $0xf8] sm:$0xff]
      %v1418 = vld [vmem:[%s1395 + $0x108] sm:$0xff]
      %v1419 = vld [vmem:[%s1395 + $0x110] sm:$0xff]
      %v1420 = vld [vmem:[%s1395 + $0x120] sm:$0xff]
      %v1421 = vld [vmem:[%s1395 + $0x128] sm:$0xff]
      %v1422 = vld [vmem:[%s1395 + $0x138] sm:$0xff]
      %v1423 = vld [vmem:[%s1395 + $0x140] sm:$0xff]
      %v1424 = vld [vmem:[%s1395 + $0x150] sm:$0xff]
      %v1425 = vld [vmem:[%s1395 + $0x158] sm:$0xff]
      %v1426 = vld [vmem:[%s1395 + $0x168] sm:$0xff]
      %v1427 = vld [vmem:[%s1395 + $0x170] sm:$0xff]
      %s1428 = scalar_lea.vmem %s264, 12
      %v1429 = vld [vmem:[%s1428] sm:$0xf]
      %v1431 = vsel %vm355, %v1396, 0
      %v1434 = vsel %vm355, %v1397, 0
      %v1437 = vsel %vm355, %v1398, 0
      %v1440 = vsel %vm355, %v1399, 0
      %v1443 = vsel %vm355, %v1400, 0
      %v1446 = vsel %vm355, %v1401, 0
      %v1449 = vsel %vm355, %v1402, 0
      %v1452 = vsel %vm355, %v1403, 0
      %v1455 = vsel %vm355, %v1404, 0
      %v1458 = vsel %vm355, %v1405, 0
      %v1461 = vsel %vm355, %v1406, 0
      %v1464 = vsel %vm355, %v1407, 0
      %v1467 = vsel %vm355, %v1408, 0
      %v1470 = vsel %vm355, %v1409, 0
      %v1473 = vsel %vm355, %v1410, 0
      %v1476 = vsel %vm355, %v1411, 0
      %v1479 = vsel %vm355, %v1412, 0
      %v1482 = vsel %vm355, %v1413, 0
      %v1485 = vsel %vm355, %v1414, 0
      %v1488 = vsel %vm355, %v1415, 0
      %v1491 = vsel %vm355, %v1416, 0
      %v1494 = vsel %vm355, %v1417, 0
      %v1497 = vsel %vm355, %v1418, 0
      %v1500 = vsel %vm355, %v1419, 0
      %v1503 = vsel %vm355, %v1420, 0
      %v1506 = vsel %vm355, %v1421, 0
      %v1509 = vsel %vm355, %v1422, 0
      %v1512 = vsel %vm355, %v1423, 0
      %v1515 = vsel %vm355, %v1424, 0
      %v1518 = vsel %vm355, %v1425, 0
      %v1521 = vsel %vm355, %v1426, 0
      %v1524 = vsel %vm355, %v1427, 0
      %v1527 = vsel %vm452, %v1429, 0
      %1529 = vmatprep.subr.mxu0 0.0
      %1530 = vmatpush1.msra.mxu0 %v1527
      %1531 = vmatprep.subr.mxu0 0.0
      %1532 = vmatpush1.msra.mxu0 0.0
      %1533 = vmatprep.subr.mxu0 0.0
      %1534 = vmatpush1.msra.mxu0 0.0
      %1535 = vmatprep.subr.mxu0 0.0
      %1536 = vmatpush1.msra.mxu0 0.0
      %1537 = vmatprep.subr.mxu0 0.0
      %1538 = vmatpush1.msra.mxu0 0.0
      %1539 = vmatprep.subr.mxu0 0.0
      %1540 = vmatpush1.msra.mxu0 0.0
      %1541 = vmatprep.subr.mxu0 0.0
      %1542 = vmatpush1.msra.mxu0 0.0
      %1543 = vmatprep.subr.mxu0 0.0
      %1544 = vmatpush1.msra.mxu0 0.0
      %1545 = vmatprep.subr.mxu0 0.0
      %1546 = vmatpush1.msra.mxu0 0.0
      %1547 = vmatprep.subr.mxu0 0.0
      %1548 = vmatpush1.msra.mxu0 0.0
      %1549 = vmatprep.subr.mxu0 0.0
      %1550 = vmatpush1.msra.mxu0 0.0
      %1551 = vmatprep.subr.mxu0 0.0
      %1552 = vmatpush1.msra.mxu0 0.0
      %1553 = vmatprep.subr.mxu0 0.0
      %1554 = vmatpush1.msra.mxu0 0.0
      %1555 = vmatprep.subr.mxu0 0.0
      %1556 = vmatpush1.msra.mxu0 0.0
      %1557 = vmatprep.subr.mxu0 0.0
      %1558 = vmatpush1.msra.mxu0 0.0
      %1559 = vmatprep.subr.mxu0 0.0
      %1560 = vmatpush1.msra.mxu0 0.0
      %1561 = vmatprep.subr.mxu0 0.0
      %1562 = vmatpush1.msra.mxu0 0.0
      %1563 = vmatprep.subr.mxu0 0.0
      %1564 = vmatpush1.msra.mxu0 0.0
      %1565 = vmatprep.subr.mxu0 0.0
      %1566 = vmatpush1.msra.mxu0 0.0
      %1567 = vmatprep.subr.mxu0 0.0
      %1568 = vmatpush1.msra.mxu0 0.0
      %1569 = vmatprep.subr.mxu0 0.0
      %1570 = vmatpush1.msra.mxu0 0.0
      %1571 = vmatprep.subr.mxu0 0.0
      %1572 = vmatpush1.msra.mxu0 0.0
      %1573 = vmatprep.subr.mxu0 0.0
      %1574 = vmatpush1.msra.mxu0 0.0
      %1575 = vmatprep.subr.mxu0 0.0
      %1576 = vmatpush1.msra.mxu0 0.0
      %1577 = vmatprep.subr.mxu0 0.0
      %1578 = vmatpush1.msra.mxu0 0.0
      %1579 = vmatprep.subr.mxu0 0.0
      %1580 = vmatpush1.msra.mxu0 0.0
      %1581 = vmatprep.subr.mxu0 0.0
      %1582 = vmatpush1.msra.mxu0 0.0
      %1583 = vmatprep.subr.mxu0 0.0
      %1584 = vmatpush1.msra.mxu0 0.0
      %1585 = vmatprep.subr.mxu0 0.0
      %1586 = vmatpush1.msra.mxu0 0.0
      %1587 = vmatprep.subr.mxu0 0.0
      %1588 = vmatpush1.msra.mxu0 0.0
      %1589 = vmatprep.subr.mxu0 0.0
      %1590 = vmatpush1.msra.mxu0 0.0
      %1591 = vmatprep.subr.mxu0 0.0
      %1592 = vmatpush1.msra.mxu0 0.0
      %1593 = vmatprep.mubr.f32.mxu0 0.0
      %1594 = vmatmul.mubr.f32.gmra.mrb[0].mxu0 %v1431
      %v1595 = vpop.f32.mrb[0].mxu0
      %v1596 = vadd.f32 0.0, %v1595
      %v1597 = vpop.f32.mrb[0].mxu0
      %1598 = vmatprep.mubr.f32.mxu0 0.0
      %1599 = vmatmul.mubr.f32.gmra.mrb[0].mxu0 %v1434
      %v1600 = vpop.f32.mrb[0].mxu0
      %v1601 = vadd.f32 0.0, %v1600
      %v1602 = vpop.f32.mrb[0].mxu0
      %1603 = vmatprep.mubr.f32.mxu0 0.0
      %1604 = vmatmul.mubr.f32.gmra.mrb[0].mxu0 %v1437
      %v1605 = vpop.f32.mrb[0].mxu0
      %v1606 = vadd.f32 0.0, %v1605
      %v1607 = vpop.f32.mrb[0].mxu0
      %1608 = vmatprep.mubr.f32.mxu0 0.0
      %1609 = vmatmul.mubr.f32.gmra.mrb[0].mxu0 %v1440
      %v1610 = vpop.f32.mrb[0].mxu0
      %v1611 = vadd.f32 0.0, %v1610
      %v1612 = vpop.f32.mrb[0].mxu0
      %1613 = vmatprep.mubr.f32.mxu0 0.0
      %1614 = vmatmul.mubr.f32.gmra.mrb[0].mxu0 %v1443
      %v1615 = vpop.f32.mrb[0].mxu0
      %v1616 = vadd.f32 0.0, %v1615
      %v1617 = vpop.f32.mrb[0].mxu0
      %1618 = vmatprep.mubr.f32.mxu0 0.0
      %1619 = vmatmul.mubr.f32.gmra.mrb[0].mxu0 %v1446
      %v1620 = vpop.f32.mrb[0].mxu0
      %v1621 = vadd.f32 0.0, %v1620
      %v1622 = vpop.f32.mrb[0].mxu0
      %1623 = vmatprep.mubr.f32.mxu0 0.0
      %1624 = vmatmul.mubr.f32.gmra.mrb[0].mxu0 %v1449
      %v1625 = vpop.f32.mrb[0].mxu0
      %v1626 = vadd.f32 0.0, %v1625
      %v1627 = vpop.f32.mrb[0].mxu0
      %1628 = vmatprep.mubr.f32.mxu0 0.0
      %1629 = vmatmul.mubr.f32.gmra.mrb[0].mxu0 %v1452
      %v1630 = vpop.f32.mrb[0].mxu0
      %v1631 = vadd.f32 0.0, %v1630
      %v1632 = vpop.f32.mrb[0].mxu0
      %1633 = vmatprep.mubr.f32.mxu0 0.0
      %1634 = vmatmul.mubr.f32.gmra.mrb[0].mxu0 %v1455
      %v1635 = vpop.f32.mrb[0].mxu0
      %v1636 = vadd.f32 0.0, %v1635
      %v1637 = vpop.f32.mrb[0].mxu0
      %1638 = vmatprep.mubr.f32.mxu0 0.0
      %1639 = vmatmul.mubr.f32.gmra.mrb[0].mxu0 %v1458
      %v1640 = vpop.f32.mrb[0].mxu0
      %v1641 = vadd.f32 0.0, %v1640
      %v1642 = vpop.f32.mrb[0].mxu0
      %1643 = vmatprep.mubr.f32.mxu0 0.0
      %1644 = vmatmul.mubr.f32.gmra.mrb[0].mxu0 %v1461
      %v1645 = vpop.f32.mrb[0].mxu0
      %v1646 = vadd.f32 0.0, %v1645
      %v1647 = vpop.f32.mrb[0].mxu0
      %1648 = vmatprep.mubr.f32.mxu0 0.0
      %1649 = vmatmul.mubr.f32.gmra.mrb[0].mxu0 %v1464
      %v1650 = vpop.f32.mrb[0].mxu0
      %v1651 = vadd.f32 0.0, %v1650
      %v1652 = vpop.f32.mrb[0].mxu0
      %1653 = vmatprep.mubr.f32.mxu0 0.0
      %1654 = vmatmul.mubr.f32.gmra.mrb[0].mxu0 %v1467
      %v1655 = vpop.f32.mrb[0].mxu0
      %v1656 = vadd.f32 0.0, %v1655
      %v1657 = vpop.f32.mrb[0].mxu0
      %1658 = vmatprep.mubr.f32.mxu0 0.0
      %1659 = vmatmul.mubr.f32.gmra.mrb[0].mxu0 %v1470
      %v1660 = vpop.f32.mrb[0].mxu0
      %v1661 = vadd.f32 0.0, %v1660
      %v1662 = vpop.f32.mrb[0].mxu0
      %1663 = vmatprep.mubr.f32.mxu0 0.0
      %1664 = vmatmul.mubr.f32.gmra.mrb[0].mxu0 %v1473
      %v1665 = vpop.f32.mrb[0].mxu0
      %v1666 = vadd.f32 0.0, %v1665
      %v1667 = vpop.f32.mrb[0].mxu0
      %1668 = vmatprep.mubr.f32.mxu0 0.0
      %1669 = vmatmul.mubr.f32.gmra.mrb[0].mxu0 %v1476
      %v1670 = vpop.f32.mrb[0].mxu0
      %v1671 = vadd.f32 0.0, %v1670
      %v1672 = vpop.f32.mrb[0].mxu0
      %1673 = vmatprep.mubr.f32.mxu0 0.0
      %1674 = vmatmul.mubr.f32.gmra.mrb[0].mxu0 %v1479
      %v1675 = vpop.f32.mrb[0].mxu0
      %v1676 = vadd.f32 0.0, %v1675
      %v1677 = vpop.f32.mrb[0].mxu0
      %1678 = vmatprep.mubr.f32.mxu0 0.0
      %1679 = vmatmul.mubr.f32.gmra.mrb[0].mxu0 %v1482
      %v1680 = vpop.f32.mrb[0].mxu0
      %v1681 = vadd.f32 0.0, %v1680
      %v1682 = vpop.f32.mrb[0].mxu0
      %1683 = vmatprep.mubr.f32.mxu0 0.0
      %1684 = vmatmul.mubr.f32.gmra.mrb[0].mxu0 %v1485
      %v1685 = vpop.f32.mrb[0].mxu0
      %v1686 = vadd.f32 0.0, %v1685
      %v1687 = vpop.f32.mrb[0].mxu0
      %1688 = vmatprep.mubr.f32.mxu0 0.0
      %1689 = vmatmul.mubr.f32.gmra.mrb[0].mxu0 %v1488
      %v1690 = vpop.f32.mrb[0].mxu0
      %v1691 = vadd.f32 0.0, %v1690
      %v1692 = vpop.f32.mrb[0].mxu0
      %1693 = vmatprep.mubr.f32.mxu0 0.0
      %1694 = vmatmul.mubr.f32.gmra.mrb[0].mxu0 %v1491
      %v1695 = vpop.f32.mrb[0].mxu0
      %v1696 = vadd.f32 0.0, %v1695
      %v1697 = vpop.f32.mrb[0].mxu0
      %1698 = vmatprep.mubr.f32.mxu0 0.0
      %1699 = vmatmul.mubr.f32.gmra.mrb[0].mxu0 %v1494
      %v1700 = vpop.f32.mrb[0].mxu0
      %v1701 = vadd.f32 0.0, %v1700
      %v1702 = vpop.f32.mrb[0].mxu0
      %1703 = vmatprep.mubr.f32.mxu0 0.0
      %1704 = vmatmul.mubr.f32.gmra.mrb[0].mxu0 %v1497
      %v1705 = vpop.f32.mrb[0].mxu0
      %v1706 = vadd.f32 0.0, %v1705
      %v1707 = vpop.f32.mrb[0].mxu0
      %1708 = vmatprep.mubr.f32.mxu0 0.0
      %1709 = vmatmul.mubr.f32.gmra.mrb[0].mxu0 %v1500
      %v1710 = vpop.f32.mrb[0].mxu0
      %v1711 = vadd.f32 0.0, %v1710
      %v1712 = vpop.f32.mrb[0].mxu0
      %1713 = vmatprep.mubr.f32.mxu0 0.0
      %1714 = vmatmul.mubr.f32.gmra.mrb[0].mxu0 %v1503
      %v1715 = vpop.f32.mrb[0].mxu0
      %v1716 = vadd.f32 0.0, %v1715
      %v1717 = vpop.f32.mrb[0].mxu0
      %1718 = vmatprep.mubr.f32.mxu0 0.0
      %1719 = vmatmul.mubr.f32.gmra.mrb[0].mxu0 %v1506
      %v1720 = vpop.f32.mrb[0].mxu0
      %v1721 = vadd.f32 0.0, %v1720
      %v1722 = vpop.f32.mrb[0].mxu0
      %1723 = vmatprep.mubr.f32.mxu0 0.0
      %1724 = vmatmul.mubr.f32.gmra.mrb[0].mxu0 %v1509
      %v1725 = vpop.f32.mrb[0].mxu0
      %v1726 = vadd.f32 0.0, %v1725
      %v1727 = vpop.f32.mrb[0].mxu0
      %1728 = vmatprep.mubr.f32.mxu0 0.0
      %1729 = vmatmul.mubr.f32.gmra.mrb[0].mxu0 %v1512
      %v1730 = vpop.f32.mrb[0].mxu0
      %v1731 = vadd.f32 0.0, %v1730
      %v1732 = vpop.f32.mrb[0].mxu0
      %1733 = vmatprep.mubr.f32.mxu0 0.0
      %1734 = vmatmul.mubr.f32.gmra.mrb[0].mxu0 %v1515
      %v1735 = vpop.f32.mrb[0].mxu0
      %v1736 = vadd.f32 0.0, %v1735
      %v1737 = vpop.f32.mrb[0].mxu0
      %1738 = vmatprep.mubr.f32.mxu0 0.0
      %1739 = vmatmul.mubr.f32.gmra.mrb[0].mxu0 %v1518
      %v1740 = vpop.f32.mrb[0].mxu0
      %v1741 = vadd.f32 0.0, %v1740
      %v1742 = vpop.f32.mrb[0].mxu0
      %1743 = vmatprep.mubr.f32.mxu0 0.0
      %1744 = vmatmul.mubr.f32.gmra.mrb[0].mxu0 %v1521
      %v1745 = vpop.f32.mrb[0].mxu0
      %v1746 = vadd.f32 0.0, %v1745
      %v1747 = vpop.f32.mrb[0].mxu0
      %1748 = vmatprep.mubr.f32.mxu0 0.0
      %1749 = vmatmul.mubr.f32.gmra.mrb[0].mxu0 %v1524
      %v1750 = vpop.f32.mrb[0].mxu0
      %v1751 = vadd.f32 0.0, %v1750
      %v1752 = vpop.f32.mrb[0].mxu0
      %1753 = vdwg.mxu0
      %v1754 = vadd.f32 %v1363, %v1596
      %v1755 = vadd.f32 %v1364, %v1601
      %v1756 = vadd.f32 %v1365, %v1606
      %v1757 = vadd.f32 %v1366, %v1611
      %v1758 = vadd.f32 %v1367, %v1616
      %v1759 = vadd.f32 %v1368, %v1621
      %v1760 = vadd.f32 %v1369, %v1626
      %v1761 = vadd.f32 %v1370, %v1631
      %v1762 = vadd.f32 %v1371, %v1636
      %v1763 = vadd.f32 %v1372, %v1641
      %v1764 = vadd.f32 %v1373, %v1646
      %v1765 = vadd.f32 %v1374, %v1651
      %v1766 = vadd.f32 %v1375, %v1656
      %v1767 = vadd.f32 %v1376, %v1661
      %v1768 = vadd.f32 %v1377, %v1666
      %v1769 = vadd.f32 %v1378, %v1671
      %v1770 = vadd.f32 %v1379, %v1676
      %v1771 = vadd.f32 %v1380, %v1681
      %v1772 = vadd.f32 %v1381, %v1686
      %v1773 = vadd.f32 %v1382, %v1691
      %v1774 = vadd.f32 %v1383, %v1696
      %v1775 = vadd.f32 %v1384, %v1701
      %v1776 = vadd.f32 %v1385, %v1706
      %v1777 = vadd.f32 %v1386, %v1711
      %v1778 = vadd.f32 %v1387, %v1716
      %v1779 = vadd.f32 %v1388, %v1721
      %v1780 = vadd.f32 %v1389, %v1726
      %v1781 = vadd.f32 %v1390, %v1731
      %v1782 = vadd.f32 %v1391, %v1736
      %v1783 = vadd.f32 %v1392, %v1741
      %v1784 = vadd.f32 %v1393, %v1746
      %v1785 = vadd.f32 %v1394, %v1751
      %v1786 = vld [vmem:[%s1395 + $0x1] sm:$0xff]
      %v1787 = vld [vmem:[%s1395 + $0x9] sm:$0xff]
      %v1788 = vld [vmem:[%s1395 + $0x19] sm:$0xff]
      %v1789 = vld [vmem:[%s1395 + $0x21] sm:$0xff]
      %v1790 = vld [vmem:[%s1395 + $0x31] sm:$0xff]
      %v1791 = vld [vmem:[%s1395 + $0x39] sm:$0xff]
      %v1792 = vld [vmem:[%s1395 + $0x49] sm:$0xff]
      %v1793 = vld [vmem:[%s1395 + $0x51] sm:$0xff]
      %v1794 = vld [vmem:[%s1395 + $0x61] sm:$0xff]
      %v1795 = vld [vmem:[%s1395 + $0x69] sm:$0xff]
      %v1796 = vld [vmem:[%s1395 + $0x79] sm:$0xff]
      %v1797 = vld [vmem:[%s1395 + $0x81] sm:$0xff]
      %v1798 = vld [vmem:[%s1395 + $0x91] sm:$0xff]
      %v1799 = vld [vmem:[%s1395 + $0x99] sm:$0xff]
      %v1800 = vld [vmem:[%s1395 + $0xa9] sm:$0xff]
      %v1801 = vld [vmem:[%s1395 + $0xb1] sm:$0xff]
      %v1802 = vld [vmem:[%s1395 + $0xc1] sm:$0xff]
      %v1803 = vld [vmem:[%s1395 + $0xc9] sm:$0xff]
      %v1804 = vld [vmem:[%s1395 + $0xd9] sm:$0xff]
      %v1805 = vld [vmem:[%s1395 + $0xe1] sm:$0xff]
      %v1806 = vld [vmem:[%s1395 + $0xf1] sm:$0xff]
      %v1807 = vld [vmem:[%s1395 + $0xf9] sm:$0xff]
      %v1808 = vld [vmem:[%s1395 + $0x109] sm:$0xff]
      %v1809 = vld [vmem:[%s1395 + $0x111] sm:$0xff]
      %v1810 = vld [vmem:[%s1395 + $0x121] sm:$0xff]
      %v1811 = vld [vmem:[%s1395 + $0x129] sm:$0xff]
      %v1812 = vld [vmem:[%s1395 + $0x139] sm:$0xff]
      %v1813 = vld [vmem:[%s1395 + $0x141] sm:$0xff]
      %v1814 = vld [vmem:[%s1395 + $0x151] sm:$0xff]
      %v1815 = vld [vmem:[%s1395 + $0x159] sm:$0xff]
      %v1816 = vld [vmem:[%s1395 + $0x169] sm:$0xff]
      %v1817 = vld [vmem:[%s1395 + $0x171] sm:$0xff]
      %s1818 = scalar_lea.vmem %s264, 16
      %v1819 = vld [vmem:[%s1818] sm:$0xf]
      %v1821 = vsel %vm355, %v1786, 0
      %v1824 = vsel %vm355, %v1787, 0
      %v1827 = vsel %vm355, %v1788, 0
      %v1830 = vsel %vm355, %v1789, 0
      %v1833 = vsel %vm355, %v1790, 0
      %v1836 = vsel %vm355, %v1791, 0
      %v1839 = vsel %vm355, %v1792, 0
      %v1842 = vsel %vm355, %v1793, 0
      %v1845 = vsel %vm355, %v1794, 0
      %v1848 = vsel %vm355, %v1795, 0
      %v1851 = vsel %vm355, %v1796, 0
      %v1854 = vsel %vm355, %v1797, 0
      %v1857 = vsel %vm355, %v1798, 0
      %v1860 = vsel %vm355, %v1799, 0
      %v1863 = vsel %vm355, %v1800, 0
      %v1866 = vsel %vm355, %v1801, 0
      %v1869 = vsel %vm355, %v1802, 0
      %v1872 = vsel %vm355, %v1803, 0
      %v1875 = vsel %vm355, %v1804, 0
      %v1878 = vsel %vm355, %v1805, 0
      %v1881 = vsel %vm355, %v1806, 0
      %v1884 = vsel %vm355, %v1807, 0
      %v1887 = vsel %vm355, %v1808, 0
      %v1890 = vsel %vm355, %v1809, 0
      %v1893 = vsel %vm355, %v1810, 0
      %v1896 = vsel %vm355, %v1811, 0
      %v1899 = vsel %vm355, %v1812, 0
      %v1902 = vsel %vm355, %v1813, 0
      %v1905 = vsel %vm355, %v1814, 0
      %v1908 = vsel %vm355, %v1815, 0
      %v1911 = vsel %vm355, %v1816, 0
      %v1914 = vsel %vm355, %v1817, 0
      %v1917 = vsel %vm452, %v1819, 0
      %1919 = vmatprep.subr.mxu0 0.0
      %1920 = vmatpush1.msra.mxu0 %v1917
      %1921 = vmatprep.subr.mxu0 0.0
      %1922 = vmatpush1.msra.mxu0 0.0
      %1923 = vmatprep.subr.mxu0 0.0
      %1924 = vmatpush1.msra.mxu0 0.0
      %1925 = vmatprep.subr.mxu0 0.0
      %1926 = vmatpush1.msra.mxu0 0.0
      %1927 = vmatprep.subr.mxu0 0.0
      %1928 = vmatpush1.msra.mxu0 0.0
      %1929 = vmatprep.subr.mxu0 0.0
      %1930 = vmatpush1.msra.mxu0 0.0
      %1931 = vmatprep.subr.mxu0 0.0
      %1932 = vmatpush1.msra.mxu0 0.0
      %1933 = vmatprep.subr.mxu0 0.0
      %1934 = vmatpush1.msra.mxu0 0.0
      %1935 = vmatprep.subr.mxu0 0.0
      %1936 = vmatpush1.msra.mxu0 0.0
      %1937 = vmatprep.subr.mxu0 0.0
      %1938 = vmatpush1.msra.mxu0 0.0
      %1939 = vmatprep.subr.mxu0 0.0
      %1940 = vmatpush1.msra.mxu0 0.0
      %1941 = vmatprep.subr.mxu0 0.0
      %1942 = vmatpush1.msra.mxu0 0.0
      %1943 = vmatprep.subr.mxu0 0.0
      %1944 = vmatpush1.msra.mxu0 0.0
      %1945 = vmatprep.subr.mxu0 0.0
      %1946 = vmatpush1.msra.mxu0 0.0
      %1947 = vmatprep.subr.mxu0 0.0
      %1948 = vmatpush1.msra.mxu0 0.0
      %1949 = vmatprep.subr.mxu0 0.0
      %1950 = vmatpush1.msra.mxu0 0.0
      %1951 = vmatprep.subr.mxu0 0.0
      %1952 = vmatpush1.msra.mxu0 0.0
      %1953 = vmatprep.subr.mxu0 0.0
      %1954 = vmatpush1.msra.mxu0 0.0
      %1955 = vmatprep.subr.mxu0 0.0
      %1956 = vmatpush1.msra.mxu0 0.0
      %1957 = vmatprep.subr.mxu0 0.0
      %1958 = vmatpush1.msra.mxu0 0.0
      %1959 = vmatprep.subr.mxu0 0.0
      %1960 = vmatpush1.msra.mxu0 0.0
      %1961 = vmatprep.subr.mxu0 0.0
      %1962 = vmatpush1.msra.mxu0 0.0
      %1963 = vmatprep.subr.mxu0 0.0
      %1964 = vmatpush1.msra.mxu0 0.0
      %1965 = vmatprep.subr.mxu0 0.0
      %1966 = vmatpush1.msra.mxu0 0.0
      %1967 = vmatprep.subr.mxu0 0.0
      %1968 = vmatpush1.msra.mxu0 0.0
      %1969 = vmatprep.subr.mxu0 0.0
      %1970 = vmatpush1.msra.mxu0 0.0
      %1971 = vmatprep.subr.mxu0 0.0
      %1972 = vmatpush1.msra.mxu0 0.0
      %1973 = vmatprep.subr.mxu0 0.0
      %1974 = vmatpush1.msra.mxu0 0.0
      %1975 = vmatprep.subr.mxu0 0.0
      %1976 = vmatpush1.msra.mxu0 0.0
      %1977 = vmatprep.subr.mxu0 0.0
      %1978 = vmatpush1.msra.mxu0 0.0
      %1979 = vmatprep.subr.mxu0 0.0
      %1980 = vmatpush1.msra.mxu0 0.0
      %1981 = vmatprep.subr.mxu0 0.0
      %1982 = vmatpush1.msra.mxu0 0.0
      %1983 = vmatprep.mubr.f32.mxu0 0.0
      %1984 = vmatmul.mubr.f32.gmra.mrb[0].mxu0 %v1821
      %v1985 = vpop.f32.mrb[0].mxu0
      %v1986 = vadd.f32 0.0, %v1985
      %v1987 = vpop.f32.mrb[0].mxu0
      %1988 = vmatprep.mubr.f32.mxu0 0.0
      %1989 = vmatmul.mubr.f32.gmra.mrb[0].mxu0 %v1824
      %v1990 = vpop.f32.mrb[0].mxu0
      %v1991 = vadd.f32 0.0, %v1990
      %v1992 = vpop.f32.mrb[0].mxu0
      %1993 = vmatprep.mubr.f32.mxu0 0.0
      %1994 = vmatmul.mubr.f32.gmra.mrb[0].mxu0 %v1827
      %v1995 = vpop.f32.mrb[0].mxu0
      %v1996 = vadd.f32 0.0, %v1995
      %v1997 = vpop.f32.mrb[0].mxu0
      %1998 = vmatprep.mubr.f32.mxu0 0.0
      %1999 = vmatmul.mubr.f32.gmra.mrb[0].mxu0 %v1830
      %v2000 = vpop.f32.mrb[0].mxu0
      %v2001 = vadd.f32 0.0, %v2000
      %v2002 = vpop.f32.mrb[0].mxu0
      %2003 = vmatprep.mubr.f32.mxu0 0.0
      %2004 = vmatmul.mubr.f32.gmra.mrb[0].mxu0 %v1833
      %v2005 = vpop.f32.mrb[0].mxu0
      %v2006 = vadd.f32 0.0, %v2005
      %v2007 = vpop.f32.mrb[0].mxu0
      %2008 = vmatprep.mubr.f32.mxu0 0.0
      %2009 = vmatmul.mubr.f32.gmra.mrb[0].mxu0 %v1836
      %v2010 = vpop.f32.mrb[0].mxu0
      %v2011 = vadd.f32 0.0, %v2010
      %v2012 = vpop.f32.mrb[0].mxu0
      %2013 = vmatprep.mubr.f32.mxu0 0.0
      %2014 = vmatmul.mubr.f32.gmra.mrb[0].mxu0 %v1839
      %v2015 = vpop.f32.mrb[0].mxu0
      %v2016 = vadd.f32 0.0, %v2015
      %v2017 = vpop.f32.mrb[0].mxu0
      %2018 = vmatprep.mubr.f32.mxu0 0.0
      %2019 = vmatmul.mubr.f32.gmra.mrb[0].mxu0 %v1842
      %v2020 = vpop.f32.mrb[0].mxu0
      %v2021 = vadd.f32 0.0, %v2020
      %v2022 = vpop.f32.mrb[0].mxu0
      %2023 = vmatprep.mubr.f32.mxu0 0.0
      %2024 = vmatmul.mubr.f32.gmra.mrb[0].mxu0 %v1845
      %v2025 = vpop.f32.mrb[0].mxu0
      %v2026 = vadd.f32 0.0, %v2025
      %v2027 = vpop.f32.mrb[0].mxu0
      %2028 = vmatprep.mubr.f32.mxu0 0.0
      %2029 = vmatmul.mubr.f32.gmra.mrb[0].mxu0 %v1848
      %v2030 = vpop.f32.mrb[0].mxu0
      %v2031 = vadd.f32 0.0, %v2030
      %v2032 = vpop.f32.mrb[0].mxu0
      %2033 = vmatprep.mubr.f32.mxu0 0.0
      %2034 = vmatmul.mubr.f32.gmra.mrb[0].mxu0 %v1851
      %v2035 = vpop.f32.mrb[0].mxu0
      %v2036 = vadd.f32 0.0, %v2035
      %v2037 = vpop.f32.mrb[0].mxu0
      %2038 = vmatprep.mubr.f32.mxu0 0.0
      %2039 = vmatmul.mubr.f32.gmra.mrb[0].mxu0 %v1854
      %v2040 = vpop.f32.mrb[0].mxu0
      %v2041 = vadd.f32 0.0, %v2040
      %v2042 = vpop.f32.mrb[0].mxu0
      %2043 = vmatprep.mubr.f32.mxu0 0.0
      %2044 = vmatmul.mubr.f32.gmra.mrb[0].mxu0 %v1857
      %v2045 = vpop.f32.mrb[0].mxu0
      %v2046 = vadd.f32 0.0, %v2045
      %v2047 = vpop.f32.mrb[0].mxu0
      %2048 = vmatprep.mubr.f32.mxu0 0.0
      %2049 = vmatmul.mubr.f32.gmra.mrb[0].mxu0 %v1860
      %v2050 = vpop.f32.mrb[0].mxu0
      %v2051 = vadd.f32 0.0, %v2050
      %v2052 = vpop.f32.mrb[0].mxu0
      %2053 = vmatprep.mubr.f32.mxu0 0.0
      %2054 = vmatmul.mubr.f32.gmra.mrb[0].mxu0 %v1863
      %v2055 = vpop.f32.mrb[0].mxu0
      %v2056 = vadd.f32 0.0, %v2055
      %v2057 = vpop.f32.mrb[0].mxu0
      %2058 = vmatprep.mubr.f32.mxu0 0.0
      %2059 = vmatmul.mubr.f32.gmra.mrb[0].mxu0 %v1866
      %v2060 = vpop.f32.mrb[0].mxu0
      %v2061 = vadd.f32 0.0, %v2060
      %v2062 = vpop.f32.mrb[0].mxu0
      %2063 = vmatprep.mubr.f32.mxu0 0.0
      %2064 = vmatmul.mubr.f32.gmra.mrb[0].mxu0 %v1869
      %v2065 = vpop.f32.mrb[0].mxu0
      %v2066 = vadd.f32 0.0, %v2065
      %v2067 = vpop.f32.mrb[0].mxu0
      %2068 = vmatprep.mubr.f32.mxu0 0.0
      %2069 = vmatmul.mubr.f32.gmra.mrb[0].mxu0 %v1872
      %v2070 = vpop.f32.mrb[0].mxu0
      %v2071 = vadd.f32 0.0, %v2070
      %v2072 = vpop.f32.mrb[0].mxu0
      %2073 = vmatprep.mubr.f32.mxu0 0.0
      %2074 = vmatmul.mubr.f32.gmra.mrb[0].mxu0 %v1875
      %v2075 = vpop.f32.mrb[0].mxu0
      %v2076 = vadd.f32 0.0, %v2075
      %v2077 = vpop.f32.mrb[0].mxu0
      %2078 = vmatprep.mubr.f32.mxu0 0.0
      %2079 = vmatmul.mubr.f32.gmra.mrb[0].mxu0 %v1878
      %v2080 = vpop.f32.mrb[0].mxu0
      %v2081 = vadd.f32 0.0, %v2080
      %v2082 = vpop.f32.mrb[0].mxu0
      %2083 = vmatprep.mubr.f32.mxu0 0.0
      %2084 = vmatmul.mubr.f32.gmra.mrb[0].mxu0 %v1881
      %v2085 = vpop.f32.mrb[0].mxu0
      %v2086 = vadd.f32 0.0, %v2085
      %v2087 = vpop.f32.mrb[0].mxu0
      %2088 = vmatprep.mubr.f32.mxu0 0.0
      %2089 = vmatmul.mubr.f32.gmra.mrb[0].mxu0 %v1884
      %v2090 = vpop.f32.mrb[0].mxu0
      %v2091 = vadd.f32 0.0, %v2090
      %v2092 = vpop.f32.mrb[0].mxu0
      %2093 = vmatprep.mubr.f32.mxu0 0.0
      %2094 = vmatmul.mubr.f32.gmra.mrb[0].mxu0 %v1887
      %v2095 = vpop.f32.mrb[0].mxu0
      %v2096 = vadd.f32 0.0, %v2095
      %v2097 = vpop.f32.mrb[0].mxu0
      %2098 = vmatprep.mubr.f32.mxu0 0.0
      %2099 = vmatmul.mubr.f32.gmra.mrb[0].mxu0 %v1890
      %v2100 = vpop.f32.mrb[0].mxu0
      %v2101 = vadd.f32 0.0, %v2100
      %v2102 = vpop.f32.mrb[0].mxu0
      %2103 = vmatprep.mubr.f32.mxu0 0.0
      %2104 = vmatmul.mubr.f32.gmra.mrb[0].mxu0 %v1893
      %v2105 = vpop.f32.mrb[0].mxu0
      %v2106 = vadd.f32 0.0, %v2105
      %v2107 = vpop.f32.mrb[0].mxu0
      %2108 = vmatprep.mubr.f32.mxu0 0.0
      %2109 = vmatmul.mubr.f32.gmra.mrb[0].mxu0 %v1896
      %v2110 = vpop.f32.mrb[0].mxu0
      %v2111 = vadd.f32 0.0, %v2110
      %v2112 = vpop.f32.mrb[0].mxu0
      %2113 = vmatprep.mubr.f32.mxu0 0.0
      %2114 = vmatmul.mubr.f32.gmra.mrb[0].mxu0 %v1899
      %v2115 = vpop.f32.mrb[0].mxu0
      %v2116 = vadd.f32 0.0, %v2115
      %v2117 = vpop.f32.mrb[0].mxu0
      %2118 = vmatprep.mubr.f32.mxu0 0.0
      %2119 = vmatmul.mubr.f32.gmra.mrb[0].mxu0 %v1902
      %v2120 = vpop.f32.mrb[0].mxu0
      %v2121 = vadd.f32 0.0, %v2120
      %v2122 = vpop.f32.mrb[0].mxu0
      %2123 = vmatprep.mubr.f32.mxu0 0.0
      %2124 = vmatmul.mubr.f32.gmra.mrb[0].mxu0 %v1905
      %v2125 = vpop.f32.mrb[0].mxu0
      %v2126 = vadd.f32 0.0, %v2125
      %v2127 = vpop.f32.mrb[0].mxu0
      %2128 = vmatprep.mubr.f32.mxu0 0.0
      %2129 = vmatmul.mubr.f32.gmra.mrb[0].mxu0 %v1908
      %v2130 = vpop.f32.mrb[0].mxu0
      %v2131 = vadd.f32 0.0, %v2130
      %v2132 = vpop.f32.mrb[0].mxu0
      %2133 = vmatprep.mubr.f32.mxu0 0.0
      %2134 = vmatmul.mubr.f32.gmra.mrb[0].mxu0 %v1911
      %v2135 = vpop.f32.mrb[0].mxu0
      %v2136 = vadd.f32 0.0, %v2135
      %v2137 = vpop.f32.mrb[0].mxu0
      %2138 = vmatprep.mubr.f32.mxu0 0.0
      %2139 = vmatmul.mubr.f32.gmra.mrb[0].mxu0 %v1914
      %v2140 = vpop.f32.mrb[0].mxu0
      %v2141 = vadd.f32 0.0, %v2140
      %v2142 = vpop.f32.mrb[0].mxu0
      %2143 = vdwg.mxu0
      %v2144 = vadd.f32 %v1754, %v1986
      %v2145 = vadd.f32 %v1755, %v1991
      %v2146 = vadd.f32 %v1756, %v1996
      %v2147 = vadd.f32 %v1757, %v2001
      %v2148 = vadd.f32 %v1758, %v2006
      %v2149 = vadd.f32 %v1759, %v2011
      %v2150 = vadd.f32 %v1760, %v2016
      %v2151 = vadd.f32 %v1761, %v2021
      %v2152 = vadd.f32 %v1762, %v2026
      %v2153 = vadd.f32 %v1763, %v2031
      %v2154 = vadd.f32 %v1764, %v2036
      %v2155 = vadd.f32 %v1765, %v2041
      %v2156 = vadd.f32 %v1766, %v2046
      %v2157 = vadd.f32 %v1767, %v2051
      %v2158 = vadd.f32 %v1768, %v2056
      %v2159 = vadd.f32 %v1769, %v2061
      %v2160 = vadd.f32 %v1770, %v2066
      %v2161 = vadd.f32 %v1771, %v2071
      %v2162 = vadd.f32 %v1772, %v2076
      %v2163 = vadd.f32 %v1773, %v2081
      %v2164 = vadd.f32 %v1774, %v2086
      %v2165 = vadd.f32 %v1775, %v2091
      %v2166 = vadd.f32 %v1776, %v2096
      %v2167 = vadd.f32 %v1777, %v2101
      %v2168 = vadd.f32 %v1778, %v2106
      %v2169 = vadd.f32 %v1779, %v2111
      %v2170 = vadd.f32 %v1780, %v2116
      %v2171 = vadd.f32 %v1781, %v2121
      %v2172 = vadd.f32 %v1782, %v2126
      %v2173 = vadd.f32 %v1783, %v2131
      %v2174 = vadd.f32 %v1784, %v2136
      %v2175 = vadd.f32 %v1785, %v2141
      %v2176 = vld [vmem:[%s1395 + $0x2] sm:$0xff]
      %v2177 = vld [vmem:[%s1395 + $0xa] sm:$0xff]
      %v2178 = vld [vmem:[%s1395 + $0x1a] sm:$0xff]
      %v2179 = vld [vmem:[%s1395 + $0x22] sm:$0xff]
      %v2180 = vld [vmem:[%s1395 + $0x32] sm:$0xff]
      %v2181 = vld [vmem:[%s1395 + $0x3a] sm:$0xff]
      %v2182 = vld [vmem:[%s1395 + $0x4a] sm:$0xff]
      %v2183 = vld [vmem:[%s1395 + $0x52] sm:$0xff]
      %v2184 = vld [vmem:[%s1395 + $0x62] sm:$0xff]
      %v2185 = vld [vmem:[%s1395 + $0x6a] sm:$0xff]
      %v2186 = vld [vmem:[%s1395 + $0x7a] sm:$0xff]
      %v2187 = vld [vmem:[%s1395 + $0x82] sm:$0xff]
      %v2188 = vld [vmem:[%s1395 + $0x92] sm:$0xff]
      %v2189 = vld [vmem:[%s1395 + $0x9a] sm:$0xff]
      %v2190 = vld [vmem:[%s1395 + $0xaa] sm:$0xff]
      %v2191 = vld [vmem:[%s1395 + $0xb2] sm:$0xff]
      %v2192 = vld [vmem:[%s1395 + $0xc2] sm:$0xff]
      %v2193 = vld [vmem:[%s1395 + $0xca] sm:$0xff]
      %v2194 = vld [vmem:[%s1395 + $0xda] sm:$0xff]
      %v2195 = vld [vmem:[%s1395 + $0xe2] sm:$0xff]
      %v2196 = vld [vmem:[%s1395 + $0xf2] sm:$0xff]
      %v2197 = vld [vmem:[%s1395 + $0xfa] sm:$0xff]
      %v2198 = vld [vmem:[%s1395 + $0x10a] sm:$0xff]
      %v2199 = vld [vmem:[%s1395 + $0x112] sm:$0xff]
      %v2200 = vld [vmem:[%s1395 + $0x122] sm:$0xff]
      %v2201 = vld [vmem:[%s1395 + $0x12a] sm:$0xff]
      %v2202 = vld [vmem:[%s1395 + $0x13a] sm:$0xff]
      %v2203 = vld [vmem:[%s1395 + $0x142] sm:$0xff]
      %v2204 = vld [vmem:[%s1395 + $0x152] sm:$0xff]
      %v2205 = vld [vmem:[%s1395 + $0x15a] sm:$0xff]
      %v2206 = vld [vmem:[%s1395 + $0x16a] sm:$0xff]
      %v2207 = vld [vmem:[%s1395 + $0x172] sm:$0xff]
      %s2208 = scalar_lea.vmem %s264, 20
      %v2209 = vld [vmem:[%s2208] sm:$0xf]
      %v2211 = vsel %vm355, %v2176, 0
      %v2214 = vsel %vm355, %v2177, 0
      %v2217 = vsel %vm355, %v2178, 0
      %v2220 = vsel %vm355, %v2179, 0
      %v2223 = vsel %vm355, %v2180, 0
      %v2226 = vsel %vm355, %v2181, 0
      %v2229 = vsel %vm355, %v2182, 0
      %v2232 = vsel %vm355, %v2183, 0
      %v2235 = vsel %vm355, %v2184, 0
      %v2238 = vsel %vm355, %v2185, 0
      %v2241 = vsel %vm355, %v2186, 0
      %v2244 = vsel %vm355, %v2187, 0
      %v2247 = vsel %vm355, %v2188, 0
      %v2250 = vsel %vm355, %v2189, 0
      %v2253 = vsel %vm355, %v2190, 0
      %v2256 = vsel %vm355, %v2191, 0
      %v2259 = vsel %vm355, %v2192, 0
      %v2262 = vsel %vm355, %v2193, 0
      %v2265 = vsel %vm355, %v2194, 0
      %v2268 = vsel %vm355, %v2195, 0
      %v2271 = vsel %vm355, %v2196, 0
      %v2274 = vsel %vm355, %v2197, 0
      %v2277 = vsel %vm355, %v2198, 0
      %v2280 = vsel %vm355, %v2199, 0
      %v2283 = vsel %vm355, %v2200, 0
      %v2286 = vsel %vm355, %v2201, 0
      %v2289 = vsel %vm355, %v2202, 0
      %v2292 = vsel %vm355, %v2203, 0
      %v2295 = vsel %vm355, %v2204, 0
      %v2298 = vsel %vm355, %v2205, 0
      %v2301 = vsel %vm355, %v2206, 0
      %v2304 = vsel %vm355, %v2207, 0
      %v2307 = vsel %vm452, %v2209, 0
      %2309 = vmatprep.subr.mxu0 0.0
      %2310 = vmatpush1.msra.mxu0 %v2307
      %2311 = vmatprep.subr.mxu0 0.0
      %2312 = vmatpush1.msra.mxu0 0.0
      %2313 = vmatprep.subr.mxu0 0.0
      %2314 = vmatpush1.msra.mxu0 0.0
      %2315 = vmatprep.subr.mxu0 0.0
      %2316 = vmatpush1.msra.mxu0 0.0
      %2317 = vmatprep.subr.mxu0 0.0
      %2318 = vmatpush1.msra.mxu0 0.0
      %2319 = vmatprep.subr.mxu0 0.0
      %2320 = vmatpush1.msra.mxu0 0.0
      %2321 = vmatprep.subr.mxu0 0.0
      %2322 = vmatpush1.msra.mxu0 0.0
      %2323 = vmatprep.subr.mxu0 0.0
      %2324 = vmatpush1.msra.mxu0 0.0
      %2325 = vmatprep.subr.mxu0 0.0
      %2326 = vmatpush1.msra.mxu0 0.0
      %2327 = vmatprep.subr.mxu0 0.0
      %2328 = vmatpush1.msra.mxu0 0.0
      %2329 = vmatprep.subr.mxu0 0.0
      %2330 = vmatpush1.msra.mxu0 0.0
      %2331 = vmatprep.subr.mxu0 0.0
      %2332 = vmatpush1.msra.mxu0 0.0
      %2333 = vmatprep.subr.mxu0 0.0
      %2334 = vmatpush1.msra.mxu0 0.0
      %2335 = vmatprep.subr.mxu0 0.0
      %2336 = vmatpush1.msra.mxu0 0.0
      %2337 = vmatprep.subr.mxu0 0.0
      %2338 = vmatpush1.msra.mxu0 0.0
      %2339 = vmatprep.subr.mxu0 0.0
      %2340 = vmatpush1.msra.mxu0 0.0
      %2341 = vmatprep.subr.mxu0 0.0
      %2342 = vmatpush1.msra.mxu0 0.0
      %2343 = vmatprep.subr.mxu0 0.0
      %2344 = vmatpush1.msra.mxu0 0.0
      %2345 = vmatprep.subr.mxu0 0.0
      %2346 = vmatpush1.msra.mxu0 0.0
      %2347 = vmatprep.subr.mxu0 0.0
      %2348 = vmatpush1.msra.mxu0 0.0
      %2349 = vmatprep.subr.mxu0 0.0
      %2350 = vmatpush1.msra.mxu0 0.0
      %2351 = vmatprep.subr.mxu0 0.0
      %2352 = vmatpush1.msra.mxu0 0.0
      %2353 = vmatprep.subr.mxu0 0.0
      %2354 = vmatpush1.msra.mxu0 0.0
      %2355 = vmatprep.subr.mxu0 0.0
      %2356 = vmatpush1.msra.mxu0 0.0
      %2357 = vmatprep.subr.mxu0 0.0
      %2358 = vmatpush1.msra.mxu0 0.0
      %2359 = vmatprep.subr.mxu0 0.0
      %2360 = vmatpush1.msra.mxu0 0.0
      %2361 = vmatprep.subr.mxu0 0.0
      %2362 = vmatpush1.msra.mxu0 0.0
      %2363 = vmatprep.subr.mxu0 0.0
      %2364 = vmatpush1.msra.mxu0 0.0
      %2365 = vmatprep.subr.mxu0 0.0
      %2366 = vmatpush1.msra.mxu0 0.0
      %2367 = vmatprep.subr.mxu0 0.0
      %2368 = vmatpush1.msra.mxu0 0.0
      %2369 = vmatprep.subr.mxu0 0.0
      %2370 = vmatpush1.msra.mxu0 0.0
      %2371 = vmatprep.subr.mxu0 0.0
      %2372 = vmatpush1.msra.mxu0 0.0
      %2373 = vmatprep.mubr.f32.mxu0 0.0
      %2374 = vmatmul.mubr.f32.gmra.mrb[0].mxu0 %v2211
      %v2375 = vpop.f32.mrb[0].mxu0
      %v2376 = vadd.f32 0.0, %v2375
      %v2377 = vpop.f32.mrb[0].mxu0
      %2378 = vmatprep.mubr.f32.mxu0 0.0
      %2379 = vmatmul.mubr.f32.gmra.mrb[0].mxu0 %v2214
      %v2380 = vpop.f32.mrb[0].mxu0
      %v2381 = vadd.f32 0.0, %v2380
      %v2382 = vpop.f32.mrb[0].mxu0
      %2383 = vmatprep.mubr.f32.mxu0 0.0
      %2384 = vmatmul.mubr.f32.gmra.mrb[0].mxu0 %v2217
      %v2385 = vpop.f32.mrb[0].mxu0
      %v2386 = vadd.f32 0.0, %v2385
      %v2387 = vpop.f32.mrb[0].mxu0
      %2388 = vmatprep.mubr.f32.mxu0 0.0
      %2389 = vmatmul.mubr.f32.gmra.mrb[0].mxu0 %v2220
      %v2390 = vpop.f32.mrb[0].mxu0
      %v2391 = vadd.f32 0.0, %v2390
      %v2392 = vpop.f32.mrb[0].mxu0
      %2393 = vmatprep.mubr.f32.mxu0 0.0
      %2394 = vmatmul.mubr.f32.gmra.mrb[0].mxu0 %v2223
      %v2395 = vpop.f32.mrb[0].mxu0
      %v2396 = vadd.f32 0.0, %v2395
      %v2397 = vpop.f32.mrb[0].mxu0
      %2398 = vmatprep.mubr.f32.mxu0 0.0
      %2399 = vmatmul.mubr.f32.gmra.mrb[0].mxu0 %v2226
      %v2400 = vpop.f32.mrb[0].mxu0
      %v2401 = vadd.f32 0.0, %v2400
      %v2402 = vpop.f32.mrb[0].mxu0
      %2403 = vmatprep.mubr.f32.mxu0 0.0
      %2404 = vmatmul.mubr.f32.gmra.mrb[0].mxu0 %v2229
      %v2405 = vpop.f32.mrb[0].mxu0
      %v2406 = vadd.f32 0.0, %v2405
      %v2407 = vpop.f32.mrb[0].mxu0
      %2408 = vmatprep.mubr.f32.mxu0 0.0
      %2409 = vmatmul.mubr.f32.gmra.mrb[0].mxu0 %v2232
      %v2410 = vpop.f32.mrb[0].mxu0
      %v2411 = vadd.f32 0.0, %v2410
      %v2412 = vpop.f32.mrb[0].mxu0
      %2413 = vmatprep.mubr.f32.mxu0 0.0
      %2414 = vmatmul.mubr.f32.gmra.mrb[0].mxu0 %v2235
      %v2415 = vpop.f32.mrb[0].mxu0
      %v2416 = vadd.f32 0.0, %v2415
      %v2417 = vpop.f32.mrb[0].mxu0
      %2418 = vmatprep.mubr.f32.mxu0 0.0
      %2419 = vmatmul.mubr.f32.gmra.mrb[0].mxu0 %v2238
      %v2420 = vpop.f32.mrb[0].mxu0
      %v2421 = vadd.f32 0.0, %v2420
      %v2422 = vpop.f32.mrb[0].mxu0
      %2423 = vmatprep.mubr.f32.mxu0 0.0
      %2424 = vmatmul.mubr.f32.gmra.mrb[0].mxu0 %v2241
      %v2425 = vpop.f32.mrb[0].mxu0
      %v2426 = vadd.f32 0.0, %v2425
      %v2427 = vpop.f32.mrb[0].mxu0
      %2428 = vmatprep.mubr.f32.mxu0 0.0
      %2429 = vmatmul.mubr.f32.gmra.mrb[0].mxu0 %v2244
      %v2430 = vpop.f32.mrb[0].mxu0
      %v2431 = vadd.f32 0.0, %v2430
      %v2432 = vpop.f32.mrb[0].mxu0
      %2433 = vmatprep.mubr.f32.mxu0 0.0
      %2434 = vmatmul.mubr.f32.gmra.mrb[0].mxu0 %v2247
      %v2435 = vpop.f32.mrb[0].mxu0
      %v2436 = vadd.f32 0.0, %v2435
      %v2437 = vpop.f32.mrb[0].mxu0
      %2438 = vmatprep.mubr.f32.mxu0 0.0
      %2439 = vmatmul.mubr.f32.gmra.mrb[0].mxu0 %v2250
      %v2440 = vpop.f32.mrb[0].mxu0
      %v2441 = vadd.f32 0.0, %v2440
      %v2442 = vpop.f32.mrb[0].mxu0
      %2443 = vmatprep.mubr.f32.mxu0 0.0
      %2444 = vmatmul.mubr.f32.gmra.mrb[0].mxu0 %v2253
      %v2445 = vpop.f32.mrb[0].mxu0
      %v2446 = vadd.f32 0.0, %v2445
      %v2447 = vpop.f32.mrb[0].mxu0
      %2448 = vmatprep.mubr.f32.mxu0 0.0
      %2449 = vmatmul.mubr.f32.gmra.mrb[0].mxu0 %v2256
      %v2450 = vpop.f32.mrb[0].mxu0
      %v2451 = vadd.f32 0.0, %v2450
      %v2452 = vpop.f32.mrb[0].mxu0
      %2453 = vmatprep.mubr.f32.mxu0 0.0
      %2454 = vmatmul.mubr.f32.gmra.mrb[0].mxu0 %v2259
      %v2455 = vpop.f32.mrb[0].mxu0
      %v2456 = vadd.f32 0.0, %v2455
      %v2457 = vpop.f32.mrb[0].mxu0
      %2458 = vmatprep.mubr.f32.mxu0 0.0
      %2459 = vmatmul.mubr.f32.gmra.mrb[0].mxu0 %v2262
      %v2460 = vpop.f32.mrb[0].mxu0
      %v2461 = vadd.f32 0.0, %v2460
      %v2462 = vpop.f32.mrb[0].mxu0
      %2463 = vmatprep.mubr.f32.mxu0 0.0
      %2464 = vmatmul.mubr.f32.gmra.mrb[0].mxu0 %v2265
      %v2465 = vpop.f32.mrb[0].mxu0
      %v2466 = vadd.f32 0.0, %v2465
      %v2467 = vpop.f32.mrb[0].mxu0
      %2468 = vmatprep.mubr.f32.mxu0 0.0
      %2469 = vmatmul.mubr.f32.gmra.mrb[0].mxu0 %v2268
      %v2470 = vpop.f32.mrb[0].mxu0
      %v2471 = vadd.f32 0.0, %v2470
      %v2472 = vpop.f32.mrb[0].mxu0
      %2473 = vmatprep.mubr.f32.mxu0 0.0
      %2474 = vmatmul.mubr.f32.gmra.mrb[0].mxu0 %v2271
      %v2475 = vpop.f32.mrb[0].mxu0
      %v2476 = vadd.f32 0.0, %v2475
      %v2477 = vpop.f32.mrb[0].mxu0
      %2478 = vmatprep.mubr.f32.mxu0 0.0
      %2479 = vmatmul.mubr.f32.gmra.mrb[0].mxu0 %v2274
      %v2480 = vpop.f32.mrb[0].mxu0
      %v2481 = vadd.f32 0.0, %v2480
      %v2482 = vpop.f32.mrb[0].mxu0
      %2483 = vmatprep.mubr.f32.mxu0 0.0
      %2484 = vmatmul.mubr.f32.gmra.mrb[0].mxu0 %v2277
      %v2485 = vpop.f32.mrb[0].mxu0
      %v2486 = vadd.f32 0.0, %v2485
      %v2487 = vpop.f32.mrb[0].mxu0
      %2488 = vmatprep.mubr.f32.mxu0 0.0
      %2489 = vmatmul.mubr.f32.gmra.mrb[0].mxu0 %v2280
      %v2490 = vpop.f32.mrb[0].mxu0
      %v2491 = vadd.f32 0.0, %v2490
      %v2492 = vpop.f32.mrb[0].mxu0
      %2493 = vmatprep.mubr.f32.mxu0 0.0
      %2494 = vmatmul.mubr.f32.gmra.mrb[0].mxu0 %v2283
      %v2495 = vpop.f32.mrb[0].mxu0
      %v2496 = vadd.f32 0.0, %v2495
      %v2497 = vpop.f32.mrb[0].mxu0
      %2498 = vmatprep.mubr.f32.mxu0 0.0
      %2499 = vmatmul.mubr.f32.gmra.mrb[0].mxu0 %v2286
      %v2500 = vpop.f32.mrb[0].mxu0
      %v2501 = vadd.f32 0.0, %v2500
      %v2502 = vpop.f32.mrb[0].mxu0
      %2503 = vmatprep.mubr.f32.mxu0 0.0
      %2504 = vmatmul.mubr.f32.gmra.mrb[0].mxu0 %v2289
      %v2505 = vpop.f32.mrb[0].mxu0
      %v2506 = vadd.f32 0.0, %v2505
      %v2507 = vpop.f32.mrb[0].mxu0
      %2508 = vmatprep.mubr.f32.mxu0 0.0
      %2509 = vmatmul.mubr.f32.gmra.mrb[0].mxu0 %v2292
      %v2510 = vpop.f32.mrb[0].mxu0
      %v2511 = vadd.f32 0.0, %v2510
      %v2512 = vpop.f32.mrb[0].mxu0
      %2513 = vmatprep.mubr.f32.mxu0 0.0
      %2514 = vmatmul.mubr.f32.gmra.mrb[0].mxu0 %v2295
      %v2515 = vpop.f32.mrb[0].mxu0
      %v2516 = vadd.f32 0.0, %v2515
      %v2517 = vpop.f32.mrb[0].mxu0
      %2518 = vmatprep.mubr.f32.mxu0 0.0
      %2519 = vmatmul.mubr.f32.gmra.mrb[0].mxu0 %v2298
      %v2520 = vpop.f32.mrb[0].mxu0
      %v2521 = vadd.f32 0.0, %v2520
      %v2522 = vpop.f32.mrb[0].mxu0
      %2523 = vmatprep.mubr.f32.mxu0 0.0
      %2524 = vmatmul.mubr.f32.gmra.mrb[0].mxu0 %v2301
      %v2525 = vpop.f32.mrb[0].mxu0
      %v2526 = vadd.f32 0.0, %v2525
      %v2527 = vpop.f32.mrb[0].mxu0
      %2528 = vmatprep.mubr.f32.mxu0 0.0
      %2529 = vmatmul.mubr.f32.gmra.mrb[0].mxu0 %v2304
      %v2530 = vpop.f32.mrb[0].mxu0
      %v2531 = vadd.f32 0.0, %v2530
      %v2532 = vpop.f32.mrb[0].mxu0
      %2533 = vdwg.mxu0
      %v2534 = vadd.f32 %v2144, %v2376
      %v2535 = vadd.f32 %v2145, %v2381
      %v2536 = vadd.f32 %v2146, %v2386
      %v2537 = vadd.f32 %v2147, %v2391
      %v2538 = vadd.f32 %v2148, %v2396
      %v2539 = vadd.f32 %v2149, %v2401
      %v2540 = vadd.f32 %v2150, %v2406
      %v2541 = vadd.f32 %v2151, %v2411
      %v2542 = vadd.f32 %v2152, %v2416
      %v2543 = vadd.f32 %v2153, %v2421
      %v2544 = vadd.f32 %v2154, %v2426
      %v2545 = vadd.f32 %v2155, %v2431
      %v2546 = vadd.f32 %v2156, %v2436
      %v2547 = vadd.f32 %v2157, %v2441
      %v2548 = vadd.f32 %v2158, %v2446
      %v2549 = vadd.f32 %v2159, %v2451
      %v2550 = vadd.f32 %v2160, %v2456
      %v2551 = vadd.f32 %v2161, %v2461
      %v2552 = vadd.f32 %v2162, %v2466
      %v2553 = vadd.f32 %v2163, %v2471
      %v2554 = vadd.f32 %v2164, %v2476
      %v2555 = vadd.f32 %v2165, %v2481
      %v2556 = vadd.f32 %v2166, %v2486
      %v2557 = vadd.f32 %v2167, %v2491
      %v2558 = vadd.f32 %v2168, %v2496
      %v2559 = vadd.f32 %v2169, %v2501
      %v2560 = vadd.f32 %v2170, %v2506
      %v2561 = vadd.f32 %v2171, %v2511
      %v2562 = vadd.f32 %v2172, %v2516
      %v2563 = vadd.f32 %v2173, %v2521
      %v2564 = vadd.f32 %v2174, %v2526
      %v2565 = vadd.f32 %v2175, %v2531
      %s2566 = scalar_lea.vmem %s259, 48
      %v2567 = vld [vmem:[%s2566] sm:$0xff]
      %v2568 = vld [vmem:[%s2566 + $0x8] sm:$0xff]
      %v2569 = vld [vmem:[%s2566 + $0x18] sm:$0xff]
      %v2570 = vld [vmem:[%s2566 + $0x20] sm:$0xff]
      %v2571 = vld [vmem:[%s2566 + $0x30] sm:$0xff]
      %v2572 = vld [vmem:[%s2566 + $0x38] sm:$0xff]
      %v2573 = vld [vmem:[%s2566 + $0x48] sm:$0xff]
      %v2574 = vld [vmem:[%s2566 + $0x50] sm:$0xff]
      %v2575 = vld [vmem:[%s2566 + $0x60] sm:$0xff]
      %v2576 = vld [vmem:[%s2566 + $0x68] sm:$0xff]
      %v2577 = vld [vmem:[%s2566 + $0x78] sm:$0xff]
      %v2578 = vld [vmem:[%s2566 + $0x80] sm:$0xff]
      %v2579 = vld [vmem:[%s2566 + $0x90] sm:$0xff]
      %v2580 = vld [vmem:[%s2566 + $0x98] sm:$0xff]
      %v2581 = vld [vmem:[%s2566 + $0xa8] sm:$0xff]
      %v2582 = vld [vmem:[%s2566 + $0xb0] sm:$0xff]
      %v2583 = vld [vmem:[%s2566 + $0xc0] sm:$0xff]
      %v2584 = vld [vmem:[%s2566 + $0xc8] sm:$0xff]
      %v2585 = vld [vmem:[%s2566 + $0xd8] sm:$0xff]
      %v2586 = vld [vmem:[%s2566 + $0xe0] sm:$0xff]
      %v2587 = vld [vmem:[%s2566 + $0xf0] sm:$0xff]
      %v2588 = vld [vmem:[%s2566 + $0xf8] sm:$0xff]
      %v2589 = vld [vmem:[%s2566 + $0x108] sm:$0xff]
      %v2590 = vld [vmem:[%s2566 + $0x110] sm:$0xff]
      %v2591 = vld [vmem:[%s2566 + $0x120] sm:$0xff]
      %v2592 = vld [vmem:[%s2566 + $0x128] sm:$0xff]
      %v2593 = vld [vmem:[%s2566 + $0x138] sm:$0xff]
      %v2594 = vld [vmem:[%s2566 + $0x140] sm:$0xff]
      %v2595 = vld [vmem:[%s2566 + $0x150] sm:$0xff]
      %v2596 = vld [vmem:[%s2566 + $0x158] sm:$0xff]
      %v2597 = vld [vmem:[%s2566 + $0x168] sm:$0xff]
      %v2598 = vld [vmem:[%s2566 + $0x170] sm:$0xff]
      %s2599 = scalar_lea.vmem %s264, 24
      %v2600 = vld [vmem:[%s2599] sm:$0xf]
      %v2602 = vsel %vm355, %v2567, 0
      %v2605 = vsel %vm355, %v2568, 0
      %v2608 = vsel %vm355, %v2569, 0
      %v2611 = vsel %vm355, %v2570, 0
      %v2614 = vsel %vm355, %v2571, 0
      %v2617 = vsel %vm355, %v2572, 0
      %v2620 = vsel %vm355, %v2573, 0
      %v2623 = vsel %vm355, %v2574, 0
      %v2626 = vsel %vm355, %v2575, 0
      %v2629 = vsel %vm355, %v2576, 0
      %v2632 = vsel %vm355, %v2577, 0
      %v2635 = vsel %vm355, %v2578, 0
      %v2638 = vsel %vm355, %v2579, 0
      %v2641 = vsel %vm355, %v2580, 0
      %v2644 = vsel %vm355, %v2581, 0
      %v2647 = vsel %vm355, %v2582, 0
      %v2650 = vsel %vm355, %v2583, 0
      %v2653 = vsel %vm355, %v2584, 0
      %v2656 = vsel %vm355, %v2585, 0
      %v2659 = vsel %vm355, %v2586, 0
      %v2662 = vsel %vm355, %v2587, 0
      %v2665 = vsel %vm355, %v2588, 0
      %v2668 = vsel %vm355, %v2589, 0
      %v2671 = vsel %vm355, %v2590, 0
      %v2674 = vsel %vm355, %v2591, 0
      %v2677 = vsel %vm355, %v2592, 0
      %v2680 = vsel %vm355, %v2593, 0
      %v2683 = vsel %vm355, %v2594, 0
      %v2686 = vsel %vm355, %v2595, 0
      %v2689 = vsel %vm355, %v2596, 0
      %v2692 = vsel %vm355, %v2597, 0
      %v2695 = vsel %vm355, %v2598, 0
      %v2698 = vsel %vm452, %v2600, 0
      %2700 = vmatprep.subr.mxu0 0.0
      %2701 = vmatpush1.msra.mxu0 %v2698
      %2702 = vmatprep.subr.mxu0 0.0
      %2703 = vmatpush1.msra.mxu0 0.0
      %2704 = vmatprep.subr.mxu0 0.0
      %2705 = vmatpush1.msra.mxu0 0.0
      %2706 = vmatprep.subr.mxu0 0.0
      %2707 = vmatpush1.msra.mxu0 0.0
      %2708 = vmatprep.subr.mxu0 0.0
      %2709 = vmatpush1.msra.mxu0 0.0
      %2710 = vmatprep.subr.mxu0 0.0
      %2711 = vmatpush1.msra.mxu0 0.0
      %2712 = vmatprep.subr.mxu0 0.0
      %2713 = vmatpush1.msra.mxu0 0.0
      %2714 = vmatprep.subr.mxu0 0.0
      %2715 = vmatpush1.msra.mxu0 0.0
      %2716 = vmatprep.subr.mxu0 0.0
      %2717 = vmatpush1.msra.mxu0 0.0
      %2718 = vmatprep.subr.mxu0 0.0
      %2719 = vmatpush1.msra.mxu0 0.0
      %2720 = vmatprep.subr.mxu0 0.0
      %2721 = vmatpush1.msra.mxu0 0.0
      %2722 = vmatprep.subr.mxu0 0.0
      %2723 = vmatpush1.msra.mxu0 0.0
      %2724 = vmatprep.subr.mxu0 0.0
      %2725 = vmatpush1.msra.mxu0 0.0
      %2726 = vmatprep.subr.mxu0 0.0
      %2727 = vmatpush1.msra.mxu0 0.0
      %2728 = vmatprep.subr.mxu0 0.0
      %2729 = vmatpush1.msra.mxu0 0.0
      %2730 = vmatprep.subr.mxu0 0.0
      %2731 = vmatpush1.msra.mxu0 0.0
      %2732 = vmatprep.subr.mxu0 0.0
      %2733 = vmatpush1.msra.mxu0 0.0
      %2734 = vmatprep.subr.mxu0 0.0
      %2735 = vmatpush1.msra.mxu0 0.0
      %2736 = vmatprep.subr.mxu0 0.0
      %2737 = vmatpush1.msra.mxu0 0.0
      %2738 = vmatprep.subr.mxu0 0.0
      %2739 = vmatpush1.msra.mxu0 0.0
      %2740 = vmatprep.subr.mxu0 0.0
      %2741 = vmatpush1.msra.mxu0 0.0
      %2742 = vmatprep.subr.mxu0 0.0
      %2743 = vmatpush1.msra.mxu0 0.0
      %2744 = vmatprep.subr.mxu0 0.0
      %2745 = vmatpush1.msra.mxu0 0.0
      %2746 = vmatprep.subr.mxu0 0.0
      %2747 = vmatpush1.msra.mxu0 0.0
      %2748 = vmatprep.subr.mxu0 0.0
      %2749 = vmatpush1.msra.mxu0 0.0
      %2750 = vmatprep.subr.mxu0 0.0
      %2751 = vmatpush1.msra.mxu0 0.0
      %2752 = vmatprep.subr.mxu0 0.0
      %2753 = vmatpush1.msra.mxu0 0.0
      %2754 = vmatprep.subr.mxu0 0.0
      %2755 = vmatpush1.msra.mxu0 0.0
      %2756 = vmatprep.subr.mxu0 0.0
      %2757 = vmatpush1.msra.mxu0 0.0
      %2758 = vmatprep.subr.mxu0 0.0
      %2759 = vmatpush1.msra.mxu0 0.0
      %2760 = vmatprep.subr.mxu0 0.0
      %2761 = vmatpush1.msra.mxu0 0.0
      %2762 = vmatprep.subr.mxu0 0.0
      %2763 = vmatpush1.msra.mxu0 0.0
      %2764 = vmatprep.mubr.f32.mxu0 0.0
      %2765 = vmatmul.mubr.f32.gmra.mrb[0].mxu0 %v2602
      %v2766 = vpop.f32.mrb[0].mxu0
      %v2767 = vadd.f32 0.0, %v2766
      %v2768 = vpop.f32.mrb[0].mxu0
      %2769 = vmatprep.mubr.f32.mxu0 0.0
      %2770 = vmatmul.mubr.f32.gmra.mrb[0].mxu0 %v2605
      %v2771 = vpop.f32.mrb[0].mxu0
      %v2772 = vadd.f32 0.0, %v2771
      %v2773 = vpop.f32.mrb[0].mxu0
      %2774 = vmatprep.mubr.f32.mxu0 0.0
      %2775 = vmatmul.mubr.f32.gmra.mrb[0].mxu0 %v2608
      %v2776 = vpop.f32.mrb[0].mxu0
      %v2777 = vadd.f32 0.0, %v2776
      %v2778 = vpop.f32.mrb[0].mxu0
      %2779 = vmatprep.mubr.f32.mxu0 0.0
      %2780 = vmatmul.mubr.f32.gmra.mrb[0].mxu0 %v2611
      %v2781 = vpop.f32.mrb[0].mxu0
      %v2782 = vadd.f32 0.0, %v2781
      %v2783 = vpop.f32.mrb[0].mxu0
      %2784 = vmatprep.mubr.f32.mxu0 0.0
      %2785 = vmatmul.mubr.f32.gmra.mrb[0].mxu0 %v2614
      %v2786 = vpop.f32.mrb[0].mxu0
      %v2787 = vadd.f32 0.0, %v2786
      %v2788 = vpop.f32.mrb[0].mxu0
      %2789 = vmatprep.mubr.f32.mxu0 0.0
      %2790 = vmatmul.mubr.f32.gmra.mrb[0].mxu0 %v2617
      %v2791 = vpop.f32.mrb[0].mxu0
      %v2792 = vadd.f32 0.0, %v2791
      %v2793 = vpop.f32.mrb[0].mxu0
      %2794 = vmatprep.mubr.f32.mxu0 0.0
      %2795 = vmatmul.mubr.f32.gmra.mrb[0].mxu0 %v2620
      %v2796 = vpop.f32.mrb[0].mxu0
      %v2797 = vadd.f32 0.0, %v2796
      %v2798 = vpop.f32.mrb[0].mxu0
      %2799 = vmatprep.mubr.f32.mxu0 0.0
      %2800 = vmatmul.mubr.f32.gmra.mrb[0].mxu0 %v2623
      %v2801 = vpop.f32.mrb[0].mxu0
      %v2802 = vadd.f32 0.0, %v2801
      %v2803 = vpop.f32.mrb[0].mxu0
      %2804 = vmatprep.mubr.f32.mxu0 0.0
      %2805 = vmatmul.mubr.f32.gmra.mrb[0].mxu0 %v2626
      %v2806 = vpop.f32.mrb[0].mxu0
      %v2807 = vadd.f32 0.0, %v2806
      %v2808 = vpop.f32.mrb[0].mxu0
      %2809 = vmatprep.mubr.f32.mxu0 0.0
      %2810 = vmatmul.mubr.f32.gmra.mrb[0].mxu0 %v2629
      %v2811 = vpop.f32.mrb[0].mxu0
      %v2812 = vadd.f32 0.0, %v2811
      %v2813 = vpop.f32.mrb[0].mxu0
      %2814 = vmatprep.mubr.f32.mxu0 0.0
      %2815 = vmatmul.mubr.f32.gmra.mrb[0].mxu0 %v2632
      %v2816 = vpop.f32.mrb[0].mxu0
      %v2817 = vadd.f32 0.0, %v2816
      %v2818 = vpop.f32.mrb[0].mxu0
      %2819 = vmatprep.mubr.f32.mxu0 0.0
      %2820 = vmatmul.mubr.f32.gmra.mrb[0].mxu0 %v2635
      %v2821 = vpop.f32.mrb[0].mxu0
      %v2822 = vadd.f32 0.0, %v2821
      %v2823 = vpop.f32.mrb[0].mxu0
      %2824 = vmatprep.mubr.f32.mxu0 0.0
      %2825 = vmatmul.mubr.f32.gmra.mrb[0].mxu0 %v2638
      %v2826 = vpop.f32.mrb[0].mxu0
      %v2827 = vadd.f32 0.0, %v2826
      %v2828 = vpop.f32.mrb[0].mxu0
      %2829 = vmatprep.mubr.f32.mxu0 0.0
      %2830 = vmatmul.mubr.f32.gmra.mrb[0].mxu0 %v2641
      %v2831 = vpop.f32.mrb[0].mxu0
      %v2832 = vadd.f32 0.0, %v2831
      %v2833 = vpop.f32.mrb[0].mxu0
      %2834 = vmatprep.mubr.f32.mxu0 0.0
      %2835 = vmatmul.mubr.f32.gmra.mrb[0].mxu0 %v2644
      %v2836 = vpop.f32.mrb[0].mxu0
      %v2837 = vadd.f32 0.0, %v2836
      %v2838 = vpop.f32.mrb[0].mxu0
      %2839 = vmatprep.mubr.f32.mxu0 0.0
      %2840 = vmatmul.mubr.f32.gmra.mrb[0].mxu0 %v2647
      %v2841 = vpop.f32.mrb[0].mxu0
      %v2842 = vadd.f32 0.0, %v2841
      %v2843 = vpop.f32.mrb[0].mxu0
      %2844 = vmatprep.mubr.f32.mxu0 0.0
      %2845 = vmatmul.mubr.f32.gmra.mrb[0].mxu0 %v2650
      %v2846 = vpop.f32.mrb[0].mxu0
      %v2847 = vadd.f32 0.0, %v2846
      %v2848 = vpop.f32.mrb[0].mxu0
      %2849 = vmatprep.mubr.f32.mxu0 0.0
      %2850 = vmatmul.mubr.f32.gmra.mrb[0].mxu0 %v2653
      %v2851 = vpop.f32.mrb[0].mxu0
      %v2852 = vadd.f32 0.0, %v2851
      %v2853 = vpop.f32.mrb[0].mxu0
      %2854 = vmatprep.mubr.f32.mxu0 0.0
      %2855 = vmatmul.mubr.f32.gmra.mrb[0].mxu0 %v2656
      %v2856 = vpop.f32.mrb[0].mxu0
      %v2857 = vadd.f32 0.0, %v2856
      %v2858 = vpop.f32.mrb[0].mxu0
      %2859 = vmatprep.mubr.f32.mxu0 0.0
      %2860 = vmatmul.mubr.f32.gmra.mrb[0].mxu0 %v2659
      %v2861 = vpop.f32.mrb[0].mxu0
      %v2862 = vadd.f32 0.0, %v2861
      %v2863 = vpop.f32.mrb[0].mxu0
      %2864 = vmatprep.mubr.f32.mxu0 0.0
      %2865 = vmatmul.mubr.f32.gmra.mrb[0].mxu0 %v2662
      %v2866 = vpop.f32.mrb[0].mxu0
      %v2867 = vadd.f32 0.0, %v2866
      %v2868 = vpop.f32.mrb[0].mxu0
      %2869 = vmatprep.mubr.f32.mxu0 0.0
      %2870 = vmatmul.mubr.f32.gmra.mrb[0].mxu0 %v2665
      %v2871 = vpop.f32.mrb[0].mxu0
      %v2872 = vadd.f32 0.0, %v2871
      %v2873 = vpop.f32.mrb[0].mxu0
      %2874 = vmatprep.mubr.f32.mxu0 0.0
      %2875 = vmatmul.mubr.f32.gmra.mrb[0].mxu0 %v2668
      %v2876 = vpop.f32.mrb[0].mxu0
      %v2877 = vadd.f32 0.0, %v2876
      %v2878 = vpop.f32.mrb[0].mxu0
      %2879 = vmatprep.mubr.f32.mxu0 0.0
      %2880 = vmatmul.mubr.f32.gmra.mrb[0].mxu0 %v2671
      %v2881 = vpop.f32.mrb[0].mxu0
      %v2882 = vadd.f32 0.0, %v2881
      %v2883 = vpop.f32.mrb[0].mxu0
      %2884 = vmatprep.mubr.f32.mxu0 0.0
      %2885 = vmatmul.mubr.f32.gmra.mrb[0].mxu0 %v2674
      %v2886 = vpop.f32.mrb[0].mxu0
      %v2887 = vadd.f32 0.0, %v2886
      %v2888 = vpop.f32.mrb[0].mxu0
      %2889 = vmatprep.mubr.f32.mxu0 0.0
      %2890 = vmatmul.mubr.f32.gmra.mrb[0].mxu0 %v2677
      %v2891 = vpop.f32.mrb[0].mxu0
      %v2892 = vadd.f32 0.0, %v2891
      %v2893 = vpop.f32.mrb[0].mxu0
      %2894 = vmatprep.mubr.f32.mxu0 0.0
      %2895 = vmatmul.mubr.f32.gmra.mrb[0].mxu0 %v2680
      %v2896 = vpop.f32.mrb[0].mxu0
      %v2897 = vadd.f32 0.0, %v2896
      %v2898 = vpop.f32.mrb[0].mxu0
      %2899 = vmatprep.mubr.f32.mxu0 0.0
      %2900 = vmatmul.mubr.f32.gmra.mrb[0].mxu0 %v2683
      %v2901 = vpop.f32.mrb[0].mxu0
      %v2902 = vadd.f32 0.0, %v2901
      %v2903 = vpop.f32.mrb[0].mxu0
      %2904 = vmatprep.mubr.f32.mxu0 0.0
      %2905 = vmatmul.mubr.f32.gmra.mrb[0].mxu0 %v2686
      %v2906 = vpop.f32.mrb[0].mxu0
      %v2907 = vadd.f32 0.0, %v2906
      %v2908 = vpop.f32.mrb[0].mxu0
      %2909 = vmatprep.mubr.f32.mxu0 0.0
      %2910 = vmatmul.mubr.f32.gmra.mrb[0].mxu0 %v2689
      %v2911 = vpop.f32.mrb[0].mxu0
      %v2912 = vadd.f32 0.0, %v2911
      %v2913 = vpop.f32.mrb[0].mxu0
      %2914 = vmatprep.mubr.f32.mxu0 0.0
      %2915 = vmatmul.mubr.f32.gmra.mrb[0].mxu0 %v2692
      %v2916 = vpop.f32.mrb[0].mxu0
      %v2917 = vadd.f32 0.0, %v2916
      %v2918 = vpop.f32.mrb[0].mxu0
      %2919 = vmatprep.mubr.f32.mxu0 0.0
      %2920 = vmatmul.mubr.f32.gmra.mrb[0].mxu0 %v2695
      %v2921 = vpop.f32.mrb[0].mxu0
      %v2922 = vadd.f32 0.0, %v2921
      %v2923 = vpop.f32.mrb[0].mxu0
      %2924 = vdwg.mxu0
      %v2925 = vadd.f32 %v2534, %v2767
      %v2926 = vadd.f32 %v2535, %v2772
      %v2927 = vadd.f32 %v2536, %v2777
      %v2928 = vadd.f32 %v2537, %v2782
      %v2929 = vadd.f32 %v2538, %v2787
      %v2930 = vadd.f32 %v2539, %v2792
      %v2931 = vadd.f32 %v2540, %v2797
      %v2932 = vadd.f32 %v2541, %v2802
      %v2933 = vadd.f32 %v2542, %v2807
      %v2934 = vadd.f32 %v2543, %v2812
      %v2935 = vadd.f32 %v2544, %v2817
      %v2936 = vadd.f32 %v2545, %v2822
      %v2937 = vadd.f32 %v2546, %v2827
      %v2938 = vadd.f32 %v2547, %v2832
      %v2939 = vadd.f32 %v2548, %v2837
      %v2940 = vadd.f32 %v2549, %v2842
      %v2941 = vadd.f32 %v2550, %v2847
      %v2942 = vadd.f32 %v2551, %v2852
      %v2943 = vadd.f32 %v2552, %v2857
      %v2944 = vadd.f32 %v2553, %v2862
      %v2945 = vadd.f32 %v2554, %v2867
      %v2946 = vadd.f32 %v2555, %v2872
      %v2947 = vadd.f32 %v2556, %v2877
      %v2948 = vadd.f32 %v2557, %v2882
      %v2949 = vadd.f32 %v2558, %v2887
      %v2950 = vadd.f32 %v2559, %v2892
      %v2951 = vadd.f32 %v2560, %v2897
      %v2952 = vadd.f32 %v2561, %v2902
      %v2953 = vadd.f32 %v2562, %v2907
      %v2954 = vadd.f32 %v2563, %v2912
      %v2955 = vadd.f32 %v2564, %v2917
      %v2956 = vadd.f32 %v2565, %v2922
      %v2957 = vld [vmem:[%s2566 + $0x1] sm:$0xff]
      %v2958 = vld [vmem:[%s2566 + $0x9] sm:$0xff]
      %v2959 = vld [vmem:[%s2566 + $0x19] sm:$0xff]
      %v2960 = vld [vmem:[%s2566 + $0x21] sm:$0xff]
      %v2961 = vld [vmem:[%s2566 + $0x31] sm:$0xff]
      %v2962 = vld [vmem:[%s2566 + $0x39] sm:$0xff]
      %v2963 = vld [vmem:[%s2566 + $0x49] sm:$0xff]
      %v2964 = vld [vmem:[%s2566 + $0x51] sm:$0xff]
      %v2965 = vld [vmem:[%s2566 + $0x61] sm:$0xff]
      %v2966 = vld [vmem:[%s2566 + $0x69] sm:$0xff]
      %v2967 = vld [vmem:[%s2566 + $0x79] sm:$0xff]
      %v2968 = vld [vmem:[%s2566 + $0x81] sm:$0xff]
      %v2969 = vld [vmem:[%s2566 + $0x91] sm:$0xff]
      %v2970 = vld [vmem:[%s2566 + $0x99] sm:$0xff]
      %v2971 = vld [vmem:[%s2566 + $0xa9] sm:$0xff]
      %v2972 = vld [vmem:[%s2566 + $0xb1] sm:$0xff]
      %v2973 = vld [vmem:[%s2566 + $0xc1] sm:$0xff]
      %v2974 = vld [vmem:[%s2566 + $0xc9] sm:$0xff]
      %v2975 = vld [vmem:[%s2566 + $0xd9] sm:$0xff]
      %v2976 = vld [vmem:[%s2566 + $0xe1] sm:$0xff]
      %v2977 = vld [vmem:[%s2566 + $0xf1] sm:$0xff]
      %v2978 = vld [vmem:[%s2566 + $0xf9] sm:$0xff]
      %v2979 = vld [vmem:[%s2566 + $0x109] sm:$0xff]
      %v2980 = vld [vmem:[%s2566 + $0x111] sm:$0xff]
      %v2981 = vld [vmem:[%s2566 + $0x121] sm:$0xff]
      %v2982 = vld [vmem:[%s2566 + $0x129] sm:$0xff]
      %v2983 = vld [vmem:[%s2566 + $0x139] sm:$0xff]
      %v2984 = vld [vmem:[%s2566 + $0x141] sm:$0xff]
      %v2985 = vld [vmem:[%s2566 + $0x151] sm:$0xff]
      %v2986 = vld [vmem:[%s2566 + $0x159] sm:$0xff]
      %v2987 = vld [vmem:[%s2566 + $0x169] sm:$0xff]
      %v2988 = vld [vmem:[%s2566 + $0x171] sm:$0xff]
      %s2989 = scalar_lea.vmem %s264, 28
      %v2990 = vld [vmem:[%s2989] sm:$0xf]
      %v2992 = vsel %vm355, %v2957, 0
      %v2995 = vsel %vm355, %v2958, 0
      %v2998 = vsel %vm355, %v2959, 0
      %v3001 = vsel %vm355, %v2960, 0
      %v3004 = vsel %vm355, %v2961, 0
      %v3007 = vsel %vm355, %v2962, 0
      %v3010 = vsel %vm355, %v2963, 0
      %v3013 = vsel %vm355, %v2964, 0
      %v3016 = vsel %vm355, %v2965, 0
      %v3019 = vsel %vm355, %v2966, 0
      %v3022 = vsel %vm355, %v2967, 0
      %v3025 = vsel %vm355, %v2968, 0
      %v3028 = vsel %vm355, %v2969, 0
      %v3031 = vsel %vm355, %v2970, 0
      %v3034 = vsel %vm355, %v2971, 0
      %v3037 = vsel %vm355, %v2972, 0
      %v3040 = vsel %vm355, %v2973, 0
      %v3043 = vsel %vm355, %v2974, 0
      %v3046 = vsel %vm355, %v2975, 0
      %v3049 = vsel %vm355, %v2976, 0
      %v3052 = vsel %vm355, %v2977, 0
      %v3055 = vsel %vm355, %v2978, 0
      %v3058 = vsel %vm355, %v2979, 0
      %v3061 = vsel %vm355, %v2980, 0
      %v3064 = vsel %vm355, %v2981, 0
      %v3067 = vsel %vm355, %v2982, 0
      %v3070 = vsel %vm355, %v2983, 0
      %v3073 = vsel %vm355, %v2984, 0
      %v3076 = vsel %vm355, %v2985, 0
      %v3079 = vsel %vm355, %v2986, 0
      %v3082 = vsel %vm355, %v2987, 0
      %v3085 = vsel %vm355, %v2988, 0
      %v3088 = vsel %vm452, %v2990, 0
      %3090 = vmatprep.subr.mxu0 0.0
      %3091 = vmatpush1.msra.mxu0 %v3088
      %3092 = vmatprep.subr.mxu0 0.0
      %3093 = vmatpush1.msra.mxu0 0.0
      %3094 = vmatprep.subr.mxu0 0.0
      %3095 = vmatpush1.msra.mxu0 0.0
      %3096 = vmatprep.subr.mxu0 0.0
      %3097 = vmatpush1.msra.mxu0 0.0
      %3098 = vmatprep.subr.mxu0 0.0
      %3099 = vmatpush1.msra.mxu0 0.0
      %3100 = vmatprep.subr.mxu0 0.0
      %3101 = vmatpush1.msra.mxu0 0.0
      %3102 = vmatprep.subr.mxu0 0.0
      %3103 = vmatpush1.msra.mxu0 0.0
      %3104 = vmatprep.subr.mxu0 0.0
      %3105 = vmatpush1.msra.mxu0 0.0
      %3106 = vmatprep.subr.mxu0 0.0
      %3107 = vmatpush1.msra.mxu0 0.0
      %3108 = vmatprep.subr.mxu0 0.0
      %3109 = vmatpush1.msra.mxu0 0.0
      %3110 = vmatprep.subr.mxu0 0.0
      %3111 = vmatpush1.msra.mxu0 0.0
      %3112 = vmatprep.subr.mxu0 0.0
      %3113 = vmatpush1.msra.mxu0 0.0
      %3114 = vmatprep.subr.mxu0 0.0
      %3115 = vmatpush1.msra.mxu0 0.0
      %3116 = vmatprep.subr.mxu0 0.0
      %3117 = vmatpush1.msra.mxu0 0.0
      %3118 = vmatprep.subr.mxu0 0.0
      %3119 = vmatpush1.msra.mxu0 0.0
      %3120 = vmatprep.subr.mxu0 0.0
      %3121 = vmatpush1.msra.mxu0 0.0
      %3122 = vmatprep.subr.mxu0 0.0
      %3123 = vmatpush1.msra.mxu0 0.0
      %3124 = vmatprep.subr.mxu0 0.0
      %3125 = vmatpush1.msra.mxu0 0.0
      %3126 = vmatprep.subr.mxu0 0.0
      %3127 = vmatpush1.msra.mxu0 0.0
      %3128 = vmatprep.subr.mxu0 0.0
      %3129 = vmatpush1.msra.mxu0 0.0
      %3130 = vmatprep.subr.mxu0 0.0
      %3131 = vmatpush1.msra.mxu0 0.0
      %3132 = vmatprep.subr.mxu0 0.0
      %3133 = vmatpush1.msra.mxu0 0.0
      %3134 = vmatprep.subr.mxu0 0.0
      %3135 = vmatpush1.msra.mxu0 0.0
      %3136 = vmatprep.subr.mxu0 0.0
      %3137 = vmatpush1.msra.mxu0 0.0
      %3138 = vmatprep.subr.mxu0 0.0
      %3139 = vmatpush1.msra.mxu0 0.0
      %3140 = vmatprep.subr.mxu0 0.0
      %3141 = vmatpush1.msra.mxu0 0.0
      %3142 = vmatprep.subr.mxu0 0.0
      %3143 = vmatpush1.msra.mxu0 0.0
      %3144 = vmatprep.subr.mxu0 0.0
      %3145 = vmatpush1.msra.mxu0 0.0
      %3146 = vmatprep.subr.mxu0 0.0
      %3147 = vmatpush1.msra.mxu0 0.0
      %3148 = vmatprep.subr.mxu0 0.0
      %3149 = vmatpush1.msra.mxu0 0.0
      %3150 = vmatprep.subr.mxu0 0.0
      %3151 = vmatpush1.msra.mxu0 0.0
      %3152 = vmatprep.subr.mxu0 0.0
      %3153 = vmatpush1.msra.mxu0 0.0
      %3154 = vmatprep.mubr.f32.mxu0 0.0
      %3155 = vmatmul.mubr.f32.gmra.mrb[0].mxu0 %v2992
      %v3156 = vpop.f32.mrb[0].mxu0
      %v3157 = vadd.f32 0.0, %v3156
      %v3158 = vpop.f32.mrb[0].mxu0
      %3159 = vmatprep.mubr.f32.mxu0 0.0
      %3160 = vmatmul.mubr.f32.gmra.mrb[0].mxu0 %v2995
      %v3161 = vpop.f32.mrb[0].mxu0
      %v3162 = vadd.f32 0.0, %v3161
      %v3163 = vpop.f32.mrb[0].mxu0
      %3164 = vmatprep.mubr.f32.mxu0 0.0
      %3165 = vmatmul.mubr.f32.gmra.mrb[0].mxu0 %v2998
      %v3166 = vpop.f32.mrb[0].mxu0
      %v3167 = vadd.f32 0.0, %v3166
      %v3168 = vpop.f32.mrb[0].mxu0
      %3169 = vmatprep.mubr.f32.mxu0 0.0
      %3170 = vmatmul.mubr.f32.gmra.mrb[0].mxu0 %v3001
      %v3171 = vpop.f32.mrb[0].mxu0
      %v3172 = vadd.f32 0.0, %v3171
      %v3173 = vpop.f32.mrb[0].mxu0
      %3174 = vmatprep.mubr.f32.mxu0 0.0
      %3175 = vmatmul.mubr.f32.gmra.mrb[0].mxu0 %v3004
      %v3176 = vpop.f32.mrb[0].mxu0
      %v3177 = vadd.f32 0.0, %v3176
      %v3178 = vpop.f32.mrb[0].mxu0
      %3179 = vmatprep.mubr.f32.mxu0 0.0
      %3180 = vmatmul.mubr.f32.gmra.mrb[0].mxu0 %v3007
      %v3181 = vpop.f32.mrb[0].mxu0
      %v3182 = vadd.f32 0.0, %v3181
      %v3183 = vpop.f32.mrb[0].mxu0
      %3184 = vmatprep.mubr.f32.mxu0 0.0
      %3185 = vmatmul.mubr.f32.gmra.mrb[0].mxu0 %v3010
      %v3186 = vpop.f32.mrb[0].mxu0
      %v3187 = vadd.f32 0.0, %v3186
      %v3188 = vpop.f32.mrb[0].mxu0
      %3189 = vmatprep.mubr.f32.mxu0 0.0
      %3190 = vmatmul.mubr.f32.gmra.mrb[0].mxu0 %v3013
      %v3191 = vpop.f32.mrb[0].mxu0
      %v3192 = vadd.f32 0.0, %v3191
      %v3193 = vpop.f32.mrb[0].mxu0
      %3194 = vmatprep.mubr.f32.mxu0 0.0
      %3195 = vmatmul.mubr.f32.gmra.mrb[0].mxu0 %v3016
      %v3196 = vpop.f32.mrb[0].mxu0
      %v3197 = vadd.f32 0.0, %v3196
      %v3198 = vpop.f32.mrb[0].mxu0
      %3199 = vmatprep.mubr.f32.mxu0 0.0
      %3200 = vmatmul.mubr.f32.gmra.mrb[0].mxu0 %v3019
      %v3201 = vpop.f32.mrb[0].mxu0
      %v3202 = vadd.f32 0.0, %v3201
      %v3203 = vpop.f32.mrb[0].mxu0
      %3204 = vmatprep.mubr.f32.mxu0 0.0
      %3205 = vmatmul.mubr.f32.gmra.mrb[0].mxu0 %v3022
      %v3206 = vpop.f32.mrb[0].mxu0
      %v3207 = vadd.f32 0.0, %v3206
      %v3208 = vpop.f32.mrb[0].mxu0
      %3209 = vmatprep.mubr.f32.mxu0 0.0
      %3210 = vmatmul.mubr.f32.gmra.mrb[0].mxu0 %v3025
      %v3211 = vpop.f32.mrb[0].mxu0
      %v3212 = vadd.f32 0.0, %v3211
      %v3213 = vpop.f32.mrb[0].mxu0
      %3214 = vmatprep.mubr.f32.mxu0 0.0
      %3215 = vmatmul.mubr.f32.gmra.mrb[0].mxu0 %v3028
      %v3216 = vpop.f32.mrb[0].mxu0
      %v3217 = vadd.f32 0.0, %v3216
      %v3218 = vpop.f32.mrb[0].mxu0
      %3219 = vmatprep.mubr.f32.mxu0 0.0
      %3220 = vmatmul.mubr.f32.gmra.mrb[0].mxu0 %v3031
      %v3221 = vpop.f32.mrb[0].mxu0
      %v3222 = vadd.f32 0.0, %v3221
      %v3223 = vpop.f32.mrb[0].mxu0
      %3224 = vmatprep.mubr.f32.mxu0 0.0
      %3225 = vmatmul.mubr.f32.gmra.mrb[0].mxu0 %v3034
      %v3226 = vpop.f32.mrb[0].mxu0
      %v3227 = vadd.f32 0.0, %v3226
      %v3228 = vpop.f32.mrb[0].mxu0
      %3229 = vmatprep.mubr.f32.mxu0 0.0
      %3230 = vmatmul.mubr.f32.gmra.mrb[0].mxu0 %v3037
      %v3231 = vpop.f32.mrb[0].mxu0
      %v3232 = vadd.f32 0.0, %v3231
      %v3233 = vpop.f32.mrb[0].mxu0
      %3234 = vmatprep.mubr.f32.mxu0 0.0
      %3235 = vmatmul.mubr.f32.gmra.mrb[0].mxu0 %v3040
      %v3236 = vpop.f32.mrb[0].mxu0
      %v3237 = vadd.f32 0.0, %v3236
      %v3238 = vpop.f32.mrb[0].mxu0
      %3239 = vmatprep.mubr.f32.mxu0 0.0
      %3240 = vmatmul.mubr.f32.gmra.mrb[0].mxu0 %v3043
      %v3241 = vpop.f32.mrb[0].mxu0
      %v3242 = vadd.f32 0.0, %v3241
      %v3243 = vpop.f32.mrb[0].mxu0
      %3244 = vmatprep.mubr.f32.mxu0 0.0
      %3245 = vmatmul.mubr.f32.gmra.mrb[0].mxu0 %v3046
      %v3246 = vpop.f32.mrb[0].mxu0
      %v3247 = vadd.f32 0.0, %v3246
      %v3248 = vpop.f32.mrb[0].mxu0
      %3249 = vmatprep.mubr.f32.mxu0 0.0
      %3250 = vmatmul.mubr.f32.gmra.mrb[0].mxu0 %v3049
      %v3251 = vpop.f32.mrb[0].mxu0
      %v3252 = vadd.f32 0.0, %v3251
      %v3253 = vpop.f32.mrb[0].mxu0
      %3254 = vmatprep.mubr.f32.mxu0 0.0
      %3255 = vmatmul.mubr.f32.gmra.mrb[0].mxu0 %v3052
      %v3256 = vpop.f32.mrb[0].mxu0
      %v3257 = vadd.f32 0.0, %v3256
      %v3258 = vpop.f32.mrb[0].mxu0
      %3259 = vmatprep.mubr.f32.mxu0 0.0
      %3260 = vmatmul.mubr.f32.gmra.mrb[0].mxu0 %v3055
      %v3261 = vpop.f32.mrb[0].mxu0
      %v3262 = vadd.f32 0.0, %v3261
      %v3263 = vpop.f32.mrb[0].mxu0
      %3264 = vmatprep.mubr.f32.mxu0 0.0
      %3265 = vmatmul.mubr.f32.gmra.mrb[0].mxu0 %v3058
      %v3266 = vpop.f32.mrb[0].mxu0
      %v3267 = vadd.f32 0.0, %v3266
      %v3268 = vpop.f32.mrb[0].mxu0
      %3269 = vmatprep.mubr.f32.mxu0 0.0
      %3270 = vmatmul.mubr.f32.gmra.mrb[0].mxu0 %v3061
      %v3271 = vpop.f32.mrb[0].mxu0
      %v3272 = vadd.f32 0.0, %v3271
      %v3273 = vpop.f32.mrb[0].mxu0
      %3274 = vmatprep.mubr.f32.mxu0 0.0
      %3275 = vmatmul.mubr.f32.gmra.mrb[0].mxu0 %v3064
      %v3276 = vpop.f32.mrb[0].mxu0
      %v3277 = vadd.f32 0.0, %v3276
      %v3278 = vpop.f32.mrb[0].mxu0
      %3279 = vmatprep.mubr.f32.mxu0 0.0
      %3280 = vmatmul.mubr.f32.gmra.mrb[0].mxu0 %v3067
      %v3281 = vpop.f32.mrb[0].mxu0
      %v3282 = vadd.f32 0.0, %v3281
      %v3283 = vpop.f32.mrb[0].mxu0
      %3284 = vmatprep.mubr.f32.mxu0 0.0
      %3285 = vmatmul.mubr.f32.gmra.mrb[0].mxu0 %v3070
      %v3286 = vpop.f32.mrb[0].mxu0
      %v3287 = vadd.f32 0.0, %v3286
      %v3288 = vpop.f32.mrb[0].mxu0
      %3289 = vmatprep.mubr.f32.mxu0 0.0
      %3290 = vmatmul.mubr.f32.gmra.mrb[0].mxu0 %v3073
      %v3291 = vpop.f32.mrb[0].mxu0
      %v3292 = vadd.f32 0.0, %v3291
      %v3293 = vpop.f32.mrb[0].mxu0
      %3294 = vmatprep.mubr.f32.mxu0 0.0
      %3295 = vmatmul.mubr.f32.gmra.mrb[0].mxu0 %v3076
      %v3296 = vpop.f32.mrb[0].mxu0
      %v3297 = vadd.f32 0.0, %v3296
      %v3298 = vpop.f32.mrb[0].mxu0
      %3299 = vmatprep.mubr.f32.mxu0 0.0
      %3300 = vmatmul.mubr.f32.gmra.mrb[0].mxu0 %v3079
      %v3301 = vpop.f32.mrb[0].mxu0
      %v3302 = vadd.f32 0.0, %v3301
      %v3303 = vpop.f32.mrb[0].mxu0
      %3304 = vmatprep.mubr.f32.mxu0 0.0
      %3305 = vmatmul.mubr.f32.gmra.mrb[0].mxu0 %v3082
      %v3306 = vpop.f32.mrb[0].mxu0
      %v3307 = vadd.f32 0.0, %v3306
      %v3308 = vpop.f32.mrb[0].mxu0
      %3309 = vmatprep.mubr.f32.mxu0 0.0
      %3310 = vmatmul.mubr.f32.gmra.mrb[0].mxu0 %v3085
      %v3311 = vpop.f32.mrb[0].mxu0
      %v3312 = vadd.f32 0.0, %v3311
      %v3313 = vpop.f32.mrb[0].mxu0
      %3314 = vdwg.mxu0
      %v3315 = vadd.f32 %v2925, %v3157
      %v3316 = vadd.f32 %v2926, %v3162
      %v3317 = vadd.f32 %v2927, %v3167
      %v3318 = vadd.f32 %v2928, %v3172
      %v3319 = vadd.f32 %v2929, %v3177
      %v3320 = vadd.f32 %v2930, %v3182
      %v3321 = vadd.f32 %v2931, %v3187
      %v3322 = vadd.f32 %v2932, %v3192
      %v3323 = vadd.f32 %v2933, %v3197
      %v3324 = vadd.f32 %v2934, %v3202
      %v3325 = vadd.f32 %v2935, %v3207
      %v3326 = vadd.f32 %v2936, %v3212
      %v3327 = vadd.f32 %v2937, %v3217
      %v3328 = vadd.f32 %v2938, %v3222
      %v3329 = vadd.f32 %v2939, %v3227
      %v3330 = vadd.f32 %v2940, %v3232
      %v3331 = vadd.f32 %v2941, %v3237
      %v3332 = vadd.f32 %v2942, %v3242
      %v3333 = vadd.f32 %v2943, %v3247
      %v3334 = vadd.f32 %v2944, %v3252
      %v3335 = vadd.f32 %v2945, %v3257
      %v3336 = vadd.f32 %v2946, %v3262
      %v3337 = vadd.f32 %v2947, %v3267
      %v3338 = vadd.f32 %v2948, %v3272
      %v3339 = vadd.f32 %v2949, %v3277
      %v3340 = vadd.f32 %v2950, %v3282
      %v3341 = vadd.f32 %v2951, %v3287
      %v3342 = vadd.f32 %v2952, %v3292
      %v3343 = vadd.f32 %v2953, %v3297
      %v3344 = vadd.f32 %v2954, %v3302
      %v3345 = vadd.f32 %v2955, %v3307
      %v3346 = vadd.f32 %v2956, %v3312
      %v3347 = vld [vmem:[%s2566 + $0x2] sm:$0xff]
      %v3348 = vld [vmem:[%s2566 + $0xa] sm:$0xff]
      %v3349 = vld [vmem:[%s2566 + $0x1a] sm:$0xff]
      %v3350 = vld [vmem:[%s2566 + $0x22] sm:$0xff]
      %v3351 = vld [vmem:[%s2566 + $0x32] sm:$0xff]
      %v3352 = vld [vmem:[%s2566 + $0x3a] sm:$0xff]
      %v3353 = vld [vmem:[%s2566 + $0x4a] sm:$0xff]
      %v3354 = vld [vmem:[%s2566 + $0x52] sm:$0xff]
      %v3355 = vld [vmem:[%s2566 + $0x62] sm:$0xff]
      %v3356 = vld [vmem:[%s2566 + $0x6a] sm:$0xff]
      %v3357 = vld [vmem:[%s2566 + $0x7a] sm:$0xff]
      %v3358 = vld [vmem:[%s2566 + $0x82] sm:$0xff]
      %v3359 = vld [vmem:[%s2566 + $0x92] sm:$0xff]
      %v3360 = vld [vmem:[%s2566 + $0x9a] sm:$0xff]
      %v3361 = vld [vmem:[%s2566 + $0xaa] sm:$0xff]
      %v3362 = vld [vmem:[%s2566 + $0xb2] sm:$0xff]
      %v3363 = vld [vmem:[%s2566 + $0xc2] sm:$0xff]
      %v3364 = vld [vmem:[%s2566 + $0xca] sm:$0xff]
      %v3365 = vld [vmem:[%s2566 + $0xda] sm:$0xff]
      %v3366 = vld [vmem:[%s2566 + $0xe2] sm:$0xff]
      %v3367 = vld [vmem:[%s2566 + $0xf2] sm:$0xff]
      %v3368 = vld [vmem:[%s2566 + $0xfa] sm:$0xff]
      %v3369 = vld [vmem:[%s2566 + $0x10a] sm:$0xff]
      %v3370 = vld [vmem:[%s2566 + $0x112] sm:$0xff]
      %v3371 = vld [vmem:[%s2566 + $0x122] sm:$0xff]
      %v3372 = vld [vmem:[%s2566 + $0x12a] sm:$0xff]
      %v3373 = vld [vmem:[%s2566 + $0x13a] sm:$0xff]
      %v3374 = vld [vmem:[%s2566 + $0x142] sm:$0xff]
      %v3375 = vld [vmem:[%s2566 + $0x152] sm:$0xff]
      %v3376 = vld [vmem:[%s2566 + $0x15a] sm:$0xff]
      %v3377 = vld [vmem:[%s2566 + $0x16a] sm:$0xff]
      %v3378 = vld [vmem:[%s2566 + $0x172] sm:$0xff]
      %s3379 = scalar_lea.vmem %s264, 32
      %v3380 = vld [vmem:[%s3379] sm:$0xf]
      %v3382 = vsel %vm355, %v3347, 0
      %v3385 = vsel %vm355, %v3348, 0
      %v3388 = vsel %vm355, %v3349, 0
      %v3391 = vsel %vm355, %v3350, 0
      %v3394 = vsel %vm355, %v3351, 0
      %v3397 = vsel %vm355, %v3352, 0
      %v3400 = vsel %vm355, %v3353, 0
      %v3403 = vsel %vm355, %v3354, 0
      %v3406 = vsel %vm355, %v3355, 0
      %v3409 = vsel %vm355, %v3356, 0
      %v3412 = vsel %vm355, %v3357, 0
      %v3415 = vsel %vm355, %v3358, 0
      %v3418 = vsel %vm355, %v3359, 0
      %v3421 = vsel %vm355, %v3360, 0
      %v3424 = vsel %vm355, %v3361, 0
      %v3427 = vsel %vm355, %v3362, 0
      %v3430 = vsel %vm355, %v3363, 0
      %v3433 = vsel %vm355, %v3364, 0
      %v3436 = vsel %vm355, %v3365, 0
      %v3439 = vsel %vm355, %v3366, 0
      %v3442 = vsel %vm355, %v3367, 0
      %v3445 = vsel %vm355, %v3368, 0
      %v3448 = vsel %vm355, %v3369, 0
      %v3451 = vsel %vm355, %v3370, 0
      %v3454 = vsel %vm355, %v3371, 0
      %v3457 = vsel %vm355, %v3372, 0
      %v3460 = vsel %vm355, %v3373, 0
      %v3463 = vsel %vm355, %v3374, 0
      %v3466 = vsel %vm355, %v3375, 0
      %v3469 = vsel %vm355, %v3376, 0
      %v3472 = vsel %vm355, %v3377, 0
      %v3475 = vsel %vm355, %v3378, 0
      %v3478 = vsel %vm452, %v3380, 0
      %3480 = vmatprep.subr.mxu0 0.0
      %3481 = vmatpush1.msra.mxu0 %v3478
      %3482 = vmatprep.subr.mxu0 0.0
      %3483 = vmatpush1.msra.mxu0 0.0
      %3484 = vmatprep.subr.mxu0 0.0
      %3485 = vmatpush1.msra.mxu0 0.0
      %3486 = vmatprep.subr.mxu0 0.0
      %3487 = vmatpush1.msra.mxu0 0.0
      %3488 = vmatprep.subr.mxu0 0.0
      %3489 = vmatpush1.msra.mxu0 0.0
      %3490 = vmatprep.subr.mxu0 0.0
      %3491 = vmatpush1.msra.mxu0 0.0
      %3492 = vmatprep.subr.mxu0 0.0
      %3493 = vmatpush1.msra.mxu0 0.0
      %3494 = vmatprep.subr.mxu0 0.0
      %3495 = vmatpush1.msra.mxu0 0.0
      %3496 = vmatprep.subr.mxu0 0.0
      %3497 = vmatpush1.msra.mxu0 0.0
      %3498 = vmatprep.subr.mxu0 0.0
      %3499 = vmatpush1.msra.mxu0 0.0
      %3500 = vmatprep.subr.mxu0 0.0
      %3501 = vmatpush1.msra.mxu0 0.0
      %3502 = vmatprep.subr.mxu0 0.0
      %3503 = vmatpush1.msra.mxu0 0.0
      %3504 = vmatprep.subr.mxu0 0.0
      %3505 = vmatpush1.msra.mxu0 0.0
      %3506 = vmatprep.subr.mxu0 0.0
      %3507 = vmatpush1.msra.mxu0 0.0
      %3508 = vmatprep.subr.mxu0 0.0
      %3509 = vmatpush1.msra.mxu0 0.0
      %3510 = vmatprep.subr.mxu0 0.0
      %3511 = vmatpush1.msra.mxu0 0.0
      %3512 = vmatprep.subr.mxu0 0.0
      %3513 = vmatpush1.msra.mxu0 0.0
      %3514 = vmatprep.subr.mxu0 0.0
      %3515 = vmatpush1.msra.mxu0 0.0
      %3516 = vmatprep.subr.mxu0 0.0
      %3517 = vmatpush1.msra.mxu0 0.0
      %3518 = vmatprep.subr.mxu0 0.0
      %3519 = vmatpush1.msra.mxu0 0.0
      %3520 = vmatprep.subr.mxu0 0.0
      %3521 = vmatpush1.msra.mxu0 0.0
      %3522 = vmatprep.subr.mxu0 0.0
      %3523 = vmatpush1.msra.mxu0 0.0
      %3524 = vmatprep.subr.mxu0 0.0
      %3525 = vmatpush1.msra.mxu0 0.0
      %3526 = vmatprep.subr.mxu0 0.0
      %3527 = vmatpush1.msra.mxu0 0.0
      %3528 = vmatprep.subr.mxu0 0.0
      %3529 = vmatpush1.msra.mxu0 0.0
      %3530 = vmatprep.subr.mxu0 0.0
      %3531 = vmatpush1.msra.mxu0 0.0
      %3532 = vmatprep.subr.mxu0 0.0
      %3533 = vmatpush1.msra.mxu0 0.0
      %3534 = vmatprep.subr.mxu0 0.0
      %3535 = vmatpush1.msra.mxu0 0.0
      %3536 = vmatprep.subr.mxu0 0.0
      %3537 = vmatpush1.msra.mxu0 0.0
      %3538 = vmatprep.subr.mxu0 0.0
      %3539 = vmatpush1.msra.mxu0 0.0
      %3540 = vmatprep.subr.mxu0 0.0
      %3541 = vmatpush1.msra.mxu0 0.0
      %3542 = vmatprep.subr.mxu0 0.0
      %3543 = vmatpush1.msra.mxu0 0.0
      %3544 = vmatprep.mubr.f32.mxu0 0.0
      %3545 = vmatmul.mubr.f32.gmra.mrb[0].mxu0 %v3382
      %v3546 = vpop.f32.mrb[0].mxu0
      %v3547 = vadd.f32 0.0, %v3546
      %v3548 = vpop.f32.mrb[0].mxu0
      %3549 = vmatprep.mubr.f32.mxu0 0.0
      %3550 = vmatmul.mubr.f32.gmra.mrb[0].mxu0 %v3385
      %v3551 = vpop.f32.mrb[0].mxu0
      %v3552 = vadd.f32 0.0, %v3551
      %v3553 = vpop.f32.mrb[0].mxu0
      %3554 = vmatprep.mubr.f32.mxu0 0.0
      %3555 = vmatmul.mubr.f32.gmra.mrb[0].mxu0 %v3388
      %v3556 = vpop.f32.mrb[0].mxu0
      %v3557 = vadd.f32 0.0, %v3556
      %v3558 = vpop.f32.mrb[0].mxu0
      %3559 = vmatprep.mubr.f32.mxu0 0.0
      %3560 = vmatmul.mubr.f32.gmra.mrb[0].mxu0 %v3391
      %v3561 = vpop.f32.mrb[0].mxu0
      %v3562 = vadd.f32 0.0, %v3561
      %v3563 = vpop.f32.mrb[0].mxu0
      %3564 = vmatprep.mubr.f32.mxu0 0.0
      %3565 = vmatmul.mubr.f32.gmra.mrb[0].mxu0 %v3394
      %v3566 = vpop.f32.mrb[0].mxu0
      %v3567 = vadd.f32 0.0, %v3566
      %v3568 = vpop.f32.mrb[0].mxu0
      %3569 = vmatprep.mubr.f32.mxu0 0.0
      %3570 = vmatmul.mubr.f32.gmra.mrb[0].mxu0 %v3397
      %v3571 = vpop.f32.mrb[0].mxu0
      %v3572 = vadd.f32 0.0, %v3571
      %v3573 = vpop.f32.mrb[0].mxu0
      %3574 = vmatprep.mubr.f32.mxu0 0.0
      %3575 = vmatmul.mubr.f32.gmra.mrb[0].mxu0 %v3400
      %v3576 = vpop.f32.mrb[0].mxu0
      %v3577 = vadd.f32 0.0, %v3576
      %v3578 = vpop.f32.mrb[0].mxu0
      %3579 = vmatprep.mubr.f32.mxu0 0.0
      %3580 = vmatmul.mubr.f32.gmra.mrb[0].mxu0 %v3403
      %v3581 = vpop.f32.mrb[0].mxu0
      %v3582 = vadd.f32 0.0, %v3581
      %v3583 = vpop.f32.mrb[0].mxu0
      %3584 = vmatprep.mubr.f32.mxu0 0.0
      %3585 = vmatmul.mubr.f32.gmra.mrb[0].mxu0 %v3406
      %v3586 = vpop.f32.mrb[0].mxu0
      %v3587 = vadd.f32 0.0, %v3586
      %v3588 = vpop.f32.mrb[0].mxu0
      %3589 = vmatprep.mubr.f32.mxu0 0.0
      %3590 = vmatmul.mubr.f32.gmra.mrb[0].mxu0 %v3409
      %v3591 = vpop.f32.mrb[0].mxu0
      %v3592 = vadd.f32 0.0, %v3591
      %v3593 = vpop.f32.mrb[0].mxu0
      %3594 = vmatprep.mubr.f32.mxu0 0.0
      %3595 = vmatmul.mubr.f32.gmra.mrb[0].mxu0 %v3412
      %v3596 = vpop.f32.mrb[0].mxu0
      %v3597 = vadd.f32 0.0, %v3596
      %v3598 = vpop.f32.mrb[0].mxu0
      %3599 = vmatprep.mubr.f32.mxu0 0.0
      %3600 = vmatmul.mubr.f32.gmra.mrb[0].mxu0 %v3415
      %v3601 = vpop.f32.mrb[0].mxu0
      %v3602 = vadd.f32 0.0, %v3601
      %v3603 = vpop.f32.mrb[0].mxu0
      %3604 = vmatprep.mubr.f32.mxu0 0.0
      %3605 = vmatmul.mubr.f32.gmra.mrb[0].mxu0 %v3418
      %v3606 = vpop.f32.mrb[0].mxu0
      %v3607 = vadd.f32 0.0, %v3606
      %v3608 = vpop.f32.mrb[0].mxu0
      %3609 = vmatprep.mubr.f32.mxu0 0.0
      %3610 = vmatmul.mubr.f32.gmra.mrb[0].mxu0 %v3421
      %v3611 = vpop.f32.mrb[0].mxu0
      %v3612 = vadd.f32 0.0, %v3611
      %v3613 = vpop.f32.mrb[0].mxu0
      %3614 = vmatprep.mubr.f32.mxu0 0.0
      %3615 = vmatmul.mubr.f32.gmra.mrb[0].mxu0 %v3424
      %v3616 = vpop.f32.mrb[0].mxu0
      %v3617 = vadd.f32 0.0, %v3616
      %v3618 = vpop.f32.mrb[0].mxu0
      %3619 = vmatprep.mubr.f32.mxu0 0.0
      %3620 = vmatmul.mubr.f32.gmra.mrb[0].mxu0 %v3427
      %v3621 = vpop.f32.mrb[0].mxu0
      %v3622 = vadd.f32 0.0, %v3621
      %v3623 = vpop.f32.mrb[0].mxu0
      %3624 = vmatprep.mubr.f32.mxu0 0.0
      %3625 = vmatmul.mubr.f32.gmra.mrb[0].mxu0 %v3430
      %v3626 = vpop.f32.mrb[0].mxu0
      %v3627 = vadd.f32 0.0, %v3626
      %v3628 = vpop.f32.mrb[0].mxu0
      %3629 = vmatprep.mubr.f32.mxu0 0.0
      %3630 = vmatmul.mubr.f32.gmra.mrb[0].mxu0 %v3433
      %v3631 = vpop.f32.mrb[0].mxu0
      %v3632 = vadd.f32 0.0, %v3631
      %v3633 = vpop.f32.mrb[0].mxu0
      %3634 = vmatprep.mubr.f32.mxu0 0.0
      %3635 = vmatmul.mubr.f32.gmra.mrb[0].mxu0 %v3436
      %v3636 = vpop.f32.mrb[0].mxu0
      %v3637 = vadd.f32 0.0, %v3636
      %v3638 = vpop.f32.mrb[0].mxu0
      %3639 = vmatprep.mubr.f32.mxu0 0.0
      %3640 = vmatmul.mubr.f32.gmra.mrb[0].mxu0 %v3439
      %v3641 = vpop.f32.mrb[0].mxu0
      %v3642 = vadd.f32 0.0, %v3641
      %v3643 = vpop.f32.mrb[0].mxu0
      %3644 = vmatprep.mubr.f32.mxu0 0.0
      %3645 = vmatmul.mubr.f32.gmra.mrb[0].mxu0 %v3442
      %v3646 = vpop.f32.mrb[0].mxu0
      %v3647 = vadd.f32 0.0, %v3646
      %v3648 = vpop.f32.mrb[0].mxu0
      %3649 = vmatprep.mubr.f32.mxu0 0.0
      %3650 = vmatmul.mubr.f32.gmra.mrb[0].mxu0 %v3445
      %v3651 = vpop.f32.mrb[0].mxu0
      %v3652 = vadd.f32 0.0, %v3651
      %v3653 = vpop.f32.mrb[0].mxu0
      %3654 = vmatprep.mubr.f32.mxu0 0.0
      %3655 = vmatmul.mubr.f32.gmra.mrb[0].mxu0 %v3448
      %v3656 = vpop.f32.mrb[0].mxu0
      %v3657 = vadd.f32 0.0, %v3656
      %v3658 = vpop.f32.mrb[0].mxu0
      %3659 = vmatprep.mubr.f32.mxu0 0.0
      %3660 = vmatmul.mubr.f32.gmra.mrb[0].mxu0 %v3451
      %v3661 = vpop.f32.mrb[0].mxu0
      %v3662 = vadd.f32 0.0, %v3661
      %v3663 = vpop.f32.mrb[0].mxu0
      %3664 = vmatprep.mubr.f32.mxu0 0.0
      %3665 = vmatmul.mubr.f32.gmra.mrb[0].mxu0 %v3454
      %v3666 = vpop.f32.mrb[0].mxu0
      %v3667 = vadd.f32 0.0, %v3666
      %v3668 = vpop.f32.mrb[0].mxu0
      %3669 = vmatprep.mubr.f32.mxu0 0.0
      %3670 = vmatmul.mubr.f32.gmra.mrb[0].mxu0 %v3457
      %v3671 = vpop.f32.mrb[0].mxu0
      %v3672 = vadd.f32 0.0, %v3671
      %v3673 = vpop.f32.mrb[0].mxu0
      %3674 = vmatprep.mubr.f32.mxu0 0.0
      %3675 = vmatmul.mubr.f32.gmra.mrb[0].mxu0 %v3460
      %v3676 = vpop.f32.mrb[0].mxu0
      %v3677 = vadd.f32 0.0, %v3676
      %v3678 = vpop.f32.mrb[0].mxu0
      %3679 = vmatprep.mubr.f32.mxu0 0.0
      %3680 = vmatmul.mubr.f32.gmra.mrb[0].mxu0 %v3463
      %v3681 = vpop.f32.mrb[0].mxu0
      %v3682 = vadd.f32 0.0, %v3681
      %v3683 = vpop.f32.mrb[0].mxu0
      %3684 = vmatprep.mubr.f32.mxu0 0.0
      %3685 = vmatmul.mubr.f32.gmra.mrb[0].mxu0 %v3466
      %v3686 = vpop.f32.mrb[0].mxu0
      %v3687 = vadd.f32 0.0, %v3686
      %v3688 = vpop.f32.mrb[0].mxu0
      %3689 = vmatprep.mubr.f32.mxu0 0.0
      %3690 = vmatmul.mubr.f32.gmra.mrb[0].mxu0 %v3469
      %v3691 = vpop.f32.mrb[0].mxu0
      %v3692 = vadd.f32 0.0, %v3691
      %v3693 = vpop.f32.mrb[0].mxu0
      %3694 = vmatprep.mubr.f32.mxu0 0.0
      %3695 = vmatmul.mubr.f32.gmra.mrb[0].mxu0 %v3472
      %v3696 = vpop.f32.mrb[0].mxu0
      %v3697 = vadd.f32 0.0, %v3696
      %v3698 = vpop.f32.mrb[0].mxu0
      %3699 = vmatprep.mubr.f32.mxu0 0.0
      %3700 = vmatmul.mubr.f32.gmra.mrb[0].mxu0 %v3475
      %v3701 = vpop.f32.mrb[0].mxu0
      %v3702 = vadd.f32 0.0, %v3701
      %v3703 = vpop.f32.mrb[0].mxu0
      %3704 = vdwg.mxu0
      %v3705 = vadd.f32 %v3315, %v3547
      %v3706 = vadd.f32 %v3316, %v3552
      %v3707 = vadd.f32 %v3317, %v3557
      %v3708 = vadd.f32 %v3318, %v3562
      %v3709 = vadd.f32 %v3319, %v3567
      %v3710 = vadd.f32 %v3320, %v3572
      %v3711 = vadd.f32 %v3321, %v3577
      %v3712 = vadd.f32 %v3322, %v3582
      %v3713 = vadd.f32 %v3323, %v3587
      %v3714 = vadd.f32 %v3324, %v3592
      %v3715 = vadd.f32 %v3325, %v3597
      %v3716 = vadd.f32 %v3326, %v3602
      %v3717 = vadd.f32 %v3327, %v3607
      %v3718 = vadd.f32 %v3328, %v3612
      %v3719 = vadd.f32 %v3329, %v3617
      %v3720 = vadd.f32 %v3330, %v3622
      %v3721 = vadd.f32 %v3331, %v3627
      %v3722 = vadd.f32 %v3332, %v3632
      %v3723 = vadd.f32 %v3333, %v3637
      %v3724 = vadd.f32 %v3334, %v3642
      %v3725 = vadd.f32 %v3335, %v3647
      %v3726 = vadd.f32 %v3336, %v3652
      %v3727 = vadd.f32 %v3337, %v3657
      %v3728 = vadd.f32 %v3338, %v3662
      %v3729 = vadd.f32 %v3339, %v3667
      %v3730 = vadd.f32 %v3340, %v3672
      %v3731 = vadd.f32 %v3341, %v3677
      %v3732 = vadd.f32 %v3342, %v3682
      %v3733 = vadd.f32 %v3343, %v3687
      %v3734 = vadd.f32 %v3344, %v3692
      %v3735 = vadd.f32 %v3345, %v3697
      %v3736 = vadd.f32 %v3346, %v3702
      %3737 = vst [vmem:[%s273] sm:$0xff] %v3705
      %3738 = vst [vmem:[%s273 + $0x8] sm:$0xff] %v3706
      %3739 = vst [vmem:[%s273 + $0x10] sm:$0xff] %v3707
      %3740 = vst [vmem:[%s273 + $0x18] sm:$0xff] %v3708
      %3741 = vst [vmem:[%s273 + $0x20] sm:$0xff] %v3709
      %3742 = vst [vmem:[%s273 + $0x28] sm:$0xff] %v3710
      %3743 = vst [vmem:[%s273 + $0x30] sm:$0xff] %v3711
      %3744 = vst [vmem:[%s273 + $0x38] sm:$0xff] %v3712
      %3745 = vst [vmem:[%s273 + $0x40] sm:$0xff] %v3713
      %3746 = vst [vmem:[%s273 + $0x48] sm:$0xff] %v3714
      %3747 = vst [vmem:[%s273 + $0x50] sm:$0xff] %v3715
      %3748 = vst [vmem:[%s273 + $0x58] sm:$0xff] %v3716
      %3749 = vst [vmem:[%s273 + $0x60] sm:$0xff] %v3717
      %3750 = vst [vmem:[%s273 + $0x68] sm:$0xff] %v3718
      %3751 = vst [vmem:[%s273 + $0x70] sm:$0xff] %v3719
      %3752 = vst [vmem:[%s273 + $0x78] sm:$0xff] %v3720
      %3753 = vst [vmem:[%s273 + $0x80] sm:$0xff] %v3721
      %3754 = vst [vmem:[%s273 + $0x88] sm:$0xff] %v3722
      %3755 = vst [vmem:[%s273 + $0x90] sm:$0xff] %v3723
      %3756 = vst [vmem:[%s273 + $0x98] sm:$0xff] %v3724
      %3757 = vst [vmem:[%s273 + $0xa0] sm:$0xff] %v3725
      %3758 = vst [vmem:[%s273 + $0xa8] sm:$0xff] %v3726
      %3759 = vst [vmem:[%s273 + $0xb0] sm:$0xff] %v3727
      %3760 = vst [vmem:[%s273 + $0xb8] sm:$0xff] %v3728
      %3761 = vst [vmem:[%s273 + $0xc0] sm:$0xff] %v3729
      %3762 = vst [vmem:[%s273 + $0xc8] sm:$0xff] %v3730
      %3763 = vst [vmem:[%s273 + $0xd0] sm:$0xff] %v3731
      %3764 = vst [vmem:[%s273 + $0xd8] sm:$0xff] %v3732
      %3765 = vst [vmem:[%s273 + $0xe0] sm:$0xff] %v3733
      %3766 = vst [vmem:[%s273 + $0xe8] sm:$0xff] %v3734
      %3767 = vst [vmem:[%s273 + $0xf0] sm:$0xff] %v3735
      %3768 = vst [vmem:[%s273 + $0xf8] sm:$0xff] %v3736
      %p3769 = scmp.eq.s32.totalorder %s23, 0
      // Predicated region
      $region29: #{vgg_conv_forward.2} parent=27 // pred_check
        %p3770 = pneg %p3769
      $region30: #{vgg_conv_forward.2} parent=27 // pred_check_branch
        %3772 = sbr.rel (%p3770) target = $region32
      $region31: #{vgg_conv_forward.2} parent=27 // pred_region
        %3773 = vst [vmem:[%s281] sm:$0x1] 0.0
        %3774 = vst [vmem:[%s287] sm:$0x1] 0.0
      $region32: #{vgg_conv_forward.2} parent=27 // pred_fallthru
        _
      %v3775 = vld [vmem:[%s281] sm:$0x1]
      %v3776 = vadd.f32 %v3705, %v3706
      %v3777 = vadd.f32 %v3776, %v3707
      %v3778 = vadd.f32 %v3777, %v3708
      %v3779 = vadd.f32 %v3778, %v3709
      %v3780 = vadd.f32 %v3779, %v3710
      %v3781 = vadd.f32 %v3780, %v3711
      %v3782 = vadd.f32 %v3781, %v3712
      %v3783 = vadd.f32 %v3782, %v3713
      %v3784 = vadd.f32 %v3783, %v3714
      %v3785 = vadd.f32 %v3784, %v3715
      %v3786 = vadd.f32 %v3785, %v3716
      %v3787 = vadd.f32 %v3786, %v3717
      %v3788 = vadd.f32 %v3787, %v3718
      %v3789 = vadd.f32 %v3788, %v3719
      %v3790 = vadd.f32 %v3789, %v3720
      %v3791 = vadd.f32 %v3790, %v3721
      %v3792 = vadd.f32 %v3791, %v3722
      %v3793 = vadd.f32 %v3792, %v3723
      %v3794 = vadd.f32 %v3793, %v3724
      %v3795 = vadd.f32 %v3794, %v3725
      %v3796 = vadd.f32 %v3795, %v3726
      %v3797 = vadd.f32 %v3796, %v3727
      %v3798 = vadd.f32 %v3797, %v3728
      %v3799 = vadd.f32 %v3798, %v3729
      %v3800 = vadd.f32 %v3799, %v3730
      %v3801 = vadd.f32 %v3800, %v3731
      %v3802 = vadd.f32 %v3801, %v3732
      %v3803 = vadd.f32 %v3802, %v3733
      %v3804 = vadd.f32 %v3803, %v3734
      %v3805 = vadd.f32 %v3804, %v3735
      %v3806 = vadd.f32 %v3805, %v3736
      %v3807 = vrot.slane %v3806, 4
      %v3808 = vadd.f32 %v3806, %v3807
      %v3809 = vrot.slane %v3808, 2
      %v3810 = vadd.f32 %v3808, %v3809
      %v3811 = vrot.slane %v3810, 1
      %v3812 = vadd.f32 %v3810, %v3811
      %v3813 = vadd.f32 %v3775, %v3812
      %3814 = vst [vmem:[%s281] sm:$0x1] %v3813
      %v3815 = vld [vmem:[%s287] sm:$0x1]
      %v3816 = vmul.f32 %v3705, %v3705
      %v3817 = vmul.f32 %v3706, %v3706
      %v3818 = vmul.f32 %v3707, %v3707
      %v3819 = vmul.f32 %v3708, %v3708
      %v3820 = vmul.f32 %v3709, %v3709
      %v3821 = vmul.f32 %v3710, %v3710
      %v3822 = vmul.f32 %v3711, %v3711
      %v3823 = vmul.f32 %v3712, %v3712
      %v3824 = vmul.f32 %v3713, %v3713
      %v3825 = vmul.f32 %v3714, %v3714
      %v3826 = vmul.f32 %v3715, %v3715
      %v3827 = vmul.f32 %v3716, %v3716
      %v3828 = vmul.f32 %v3717, %v3717
      %v3829 = vmul.f32 %v3718, %v3718
      %v3830 = vmul.f32 %v3719, %v3719
      %v3831 = vmul.f32 %v3720, %v3720
      %v3832 = vmul.f32 %v3721, %v3721
      %v3833 = vmul.f32 %v3722, %v3722
      %v3834 = vmul.f32 %v3723, %v3723
      %v3835 = vmul.f32 %v3724, %v3724
      %v3836 = vmul.f32 %v3725, %v3725
      %v3837 = vmul.f32 %v3726, %v3726
      %v3838 = vmul.f32 %v3727, %v3727
      %v3839 = vmul.f32 %v3728, %v3728
      %v3840 = vmul.f32 %v3729, %v3729
      %v3841 = vmul.f32 %v3730, %v3730
      %v3842 = vmul.f32 %v3731, %v3731
      %v3843 = vmul.f32 %v3732, %v3732
      %v3844 = vmul.f32 %v3733, %v3733
      %v3845 = vmul.f32 %v3734, %v3734
      %v3846 = vmul.f32 %v3735, %v3735
      %v3847 = vmul.f32 %v3736, %v3736
      %v3848 = vadd.f32 %v3816, %v3817
      %v3849 = vadd.f32 %v3848, %v3818
      %v3850 = vadd.f32 %v3849, %v3819
      %v3851 = vadd.f32 %v3850, %v3820
      %v3852 = vadd.f32 %v3851, %v3821
      %v3853 = vadd.f32 %v3852, %v3822
      %v3854 = vadd.f32 %v3853, %v3823
      %v3855 = vadd.f32 %v3854, %v3824
      %v3856 = vadd.f32 %v3855, %v3825
      %v3857 = vadd.f32 %v3856, %v3826
      %v3858 = vadd.f32 %v3857, %v3827
      %v3859 = vadd.f32 %v3858, %v3828
      %v3860 = vadd.f32 %v3859, %v3829
      %v3861 = vadd.f32 %v3860, %v3830
      %v3862 = vadd.f32 %v3861, %v3831
      %v3863 = vadd.f32 %v3862, %v3832
      %v3864 = vadd.f32 %v3863, %v3833
      %v3865 = vadd.f32 %v3864, %v3834
      %v3866 = vadd.f32 %v3865, %v3835
      %v3867 = vadd.f32 %v3866, %v3836
      %v3868 = vadd.f32 %v3867, %v3837
      %v3869 = vadd.f32 %v3868, %v3838
      %v3870 = vadd.f32 %v3869, %v3839
      %v3871 = vadd.f32 %v3870, %v3840
      %v3872 = vadd.f32 %v3871, %v3841
      %v3873 = vadd.f32 %v3872, %v3842
      %v3874 = vadd.f32 %v3873, %v3843
      %v3875 = vadd.f32 %v3874, %v3844
      %v3876 = vadd.f32 %v3875, %v3845
      %v3877 = vadd.f32 %v3876, %v3846
      %v3878 = vadd.f32 %v3877, %v3847
      %v3879 = vrot.slane %v3878, 4
      %v3880 = vadd.f32 %v3878, %v3879
      %v3881 = vrot.slane %v3880, 2
      %v3882 = vadd.f32 %v3880, %v3881
      %v3883 = vrot.slane %v3882, 1
      %v3884 = vadd.f32 %v3882, %v3883
      %v3885 = vadd.f32 %v3815, %v3884
      %3886 = vst [vmem:[%s287] sm:$0x1] %v3885
      %s3887 = sadd.s32 %s21, %s23
      %s3888 = smul.u32 32, %s3887
      %p3889 = scmp.lt.s32.totalorder %s3888, 63
      %s3890 = scalar_select %p3889, %s3888, 63
      %p3891 = scmp.lt.s32.totalorder %s22, 0
      %s3892 = scalar_select %p3891, %s22, 0
      %s3893 = sadd.s32 %s3892, %s3890
      %s3894 = smul.addr %s3893, 8
      %s3895 = scalar_lea.vmem %s2, %s3894
      %p3896 = scmp.lt.s32.totalorder %s21, 1
      %s3897 = scalar_select %p3896, %s21, 1
      %p3898 = scmp.lt.s32.totalorder %s22, 0
      %s3899 = scalar_select %p3898, %s22, 0
      %s3900 = sadd.s32 %s3899, %s3897
      %s3901 = scalar_lea.vmem %s3, %s3900
      %p3902 = scmp.lt.s32.totalorder %s21, 1
      %s3903 = scalar_select %p3902, %s21, 1
      %p3904 = scmp.lt.s32.totalorder %s22, 0
      %s3905 = scalar_select %p3904, %s22, 0
      %s3906 = sadd.s32 %s3905, %s3903
      %s3907 = scalar_lea.vmem %s4, %s3906
      // Predicated region
      $region33: #{vgg_conv_forward.2} parent=27 // pred_check
        %p3908 = pneg %p111
      $region34: #{vgg_conv_forward.2} parent=27 // pred_check_branch
        %3910 = sbr.rel (%p3908) target = $region36
      $region35: #{vgg_conv_forward.2} parent=27 // pred_region
        %s3911 = sadd.s32 %s21, %s23
        %s3912 = smul.u32 32, %s3911
      $region36: #{vgg_conv_forward.2} parent=27 // pred_fallthru
        _
      // Predicated region
      $region37: #{vgg_conv_forward.2} parent=27 // pred_check
        %p3913 = pneg %p139
      $region38: #{vgg_conv_forward.2} parent=27 // pred_check_branch
        %3915 = sbr.rel (%p3913) target = $region40
      $region39: #{vgg_conv_forward.2} parent=27 // pred_region
        _
      $region40: #{vgg_conv_forward.2} parent=27 // pred_fallthru
        _
      // Predicated region
      $region41: #{vgg_conv_forward.2} parent=27 // pred_check
        %p3916 = pneg %p167
      $region42: #{vgg_conv_forward.2} parent=27 // pred_check_branch
        %3918 = sbr.rel (%p3916) target = $region44
      $region43: #{vgg_conv_forward.2} parent=27 // pred_region
        _
      $region44: #{vgg_conv_forward.2} parent=27 // pred_fallthru
        _
    $region28: #{vgg_conv_forward.2} parent=5 // pred_fallthru
      _
    %p3919 = scmp.le.s32.totalorder 2, %s11
    // Predicated region
    $region45: #{vgg_conv_forward.2} parent=5 // pred_check
      %p3920 = pneg %p3919
    $region46: #{vgg_conv_forward.2} parent=5 // pred_check_branch
      %3922 = sbr.rel (%p3920) target = $region48
    $region47: #{vgg_conv_forward.2} parent=5 // pred_region
      %s3923 = ssub.s32 %s11, 2
      // Predicated region
      $region49: #{vgg_conv_forward.2} parent=47 // pred_check
        %p3924 = pneg %p117
      $region50: #{vgg_conv_forward.2} parent=47 // pred_check_branch
        %3926 = sbr.rel (%p3924) target = $region52
      $region51: #{vgg_conv_forward.2} parent=47 // pred_region
        %s3927 = sadd.s32 %s24, %s26
        %s3928 = smul.u32 32, %s3927
        %p3929 = scmp.lt.s32.totalorder %s3928, 63
        %s3930 = scalar_select %p3929, %s3928, 63
        %p3931 = scmp.lt.s32.totalorder %s25, 0
        %s3932 = scalar_select %p3931, %s25, 0
        %s3933 = sadd.s32 %s3932, %s3930
        %s3934 = smul.addr %s3933, 8
        %s3935 = scalar_lea.vmem %s2, %s3934
      $region52: #{vgg_conv_forward.2} parent=47 // pred_fallthru
        _
      // Predicated region
      $region53: #{vgg_conv_forward.2} parent=47 // pred_check
        %p3936 = pneg %p145
      $region54: #{vgg_conv_forward.2} parent=47 // pred_check_branch
        %3938 = sbr.rel (%p3936) target = $region56
      $region55: #{vgg_conv_forward.2} parent=47 // pred_region
        %p3939 = scmp.lt.s32.totalorder %s24, 1
        %s3940 = scalar_select %p3939, %s24, 1
        %p3941 = scmp.lt.s32.totalorder %s25, 0
        %s3942 = scalar_select %p3941, %s25, 0
        %s3943 = sadd.s32 %s3942, %s3940
        %s3944 = scalar_lea.vmem %s3, %s3943
      $region56: #{vgg_conv_forward.2} parent=47 // pred_fallthru
        _
      // Predicated region
      $region57: #{vgg_conv_forward.2} parent=47 // pred_check
        %p3945 = pneg %p173
      $region58: #{vgg_conv_forward.2} parent=47 // pred_check_branch
        %3947 = sbr.rel (%p3945) target = $region60
      $region59: #{vgg_conv_forward.2} parent=47 // pred_region
        %p3948 = scmp.lt.s32.totalorder %s24, 1
        %s3949 = scalar_select %p3948, %s24, 1
        %p3950 = scmp.lt.s32.totalorder %s25, 0
        %s3951 = scalar_select %p3950, %s25, 0
        %s3952 = sadd.s32 %s3951, %s3949
        %s3953 = scalar_lea.vmem %s4, %s3952
      $region60: #{vgg_conv_forward.2} parent=47 // pred_fallthru
        _
    $region48: #{vgg_conv_forward.2} parent=5 // pred_fallthru
      _
  $region6: #{vgg_conv_forward.2} parent=0 // loop_footer
    %s15 = sadd.s32 1, %s11
  $region7: #{vgg_conv_forward.2} parent=0 // loop_footer_branch
    %10 = sbr.rel target = $region3
  $region8: #{vgg_conv_forward.2} parent=0 // loop_exit
    _

</llo_original>
